<compile_context>
chip_gen: v5e
topology: v5e:2x2
jax: 0.10.0
libtpu: 0.0.40
codegen_flags: <defaults>
</compile_context>

<pallas_src>
import jax
import jax.numpy as jnp
from jax.experimental import pallas as pl
from jax.experimental.pallas import tpu as pltpu

# ---- hyperparameters implied by the PyTorch script ----
D_MODEL = 2                      # num_features
N_LAYERS = 2
EXPAND = 16                      # hiddenSize // num_features
D_INNER = D_MODEL * EXPAND       # 32
D_STATE = 32                     # hiddenSize (d_state)
D_CONV = 16
DT_RANK = max(1, -(-D_MODEL // 16))   # ceil(d_model / 16) = 1
HIDDEN = 32                      # classifier input dim
NUM_CLASSES = 1
RMS_EPS = 1e-5

# ---- packed parameter slab layout: (N_LAYERS, SLAB_ROWS, LANE) fp32 ----
LANE = 128
ROW_SSM = 0                          # 32 rows: [dt-fold | B | C | zeros]
ROW_A = ROW_SSM + D_INNER            # 32 rows: A = -exp(a_log)   (cols 0:32)
ROW_WIN = ROW_A + D_INNER            # D_MODEL rows: fused in_proj (cols 0:64)
ROW_WOUT = ROW_WIN + D_MODEL         # D_MODEL rows: out_proj^T   (cols 0:32)
ROW_CONVB = ROW_WOUT + D_MODEL       # conv bias
ROW_DTB = ROW_CONVB + 1              # dt_proj bias
ROW_DVEC = ROW_DTB + 1               # D skip vector
ROW_NORMW = ROW_DVEC + 1             # RMSNorm weight (cols 0:D_MODEL)
ROW_CONVW = ROW_NORMW + 1            # up to D_CONV effective conv taps
ROW_FC = ROW_CONVW + D_CONV          # fc weight rows (layer-0 slot only)
ROW_BFC = ROW_FC + NUM_CLASSES       # fc bias (layer-0 slot only)
SLAB_ROWS = ((ROW_BFC + 1 + 7) // 8) * 8

COL_DT = 0
COL_B = D_INNER
COL_C = D_INNER + D_STATE
SSM_COLS = D_INNER + 2 * D_STATE     # 96

assert SSM_COLS <= LANE and 2 * D_INNER <= LANE and HIDDEN <= LANE


def _silu(x):
    return x * jax.nn.sigmoid(x)


def _softplus(x):
    # numerically-stable softplus, simple elementwise ops for Mosaic
    return jnp.maximum(x, 0.0) + jnp.log(1.0 + jnp.exp(-jnp.abs(x)))


def mamba_classifier_kernel(x_ref, w_ref, out_ref,
                            xpad_ref, da_ref, dbx_ref, y_ref):
    x = x_ref[...].astype(jnp.float32)              # (B, L, D_MODEL)
    Bsz, L, _ = x.shape
    n_eff = xpad_ref.shape[1] - L + 1               # effective conv taps

    # zero the causal left-pad region once (stays zero across layers)
    if n_eff > 1:
        xpad_ref[:, 0:n_eff - 1, :] = jnp.zeros(
            (Bsz, n_eff - 1, D_INNER), jnp.float32)

    y_gated = None
    for layer in range(N_LAYERS):                   # static 2-layer loop
        # ---- RMSNorm (pre-norm of the residual block) ----
        nw = w_ref[layer, ROW_NORMW, 0:D_MODEL]     # (D_MODEL,)
        var = jnp.mean(x * x, axis=-1, keepdims=True)
        xn = x * jax.lax.rsqrt(var + RMS_EPS) * nw[None, None, :]

        # ---- fused in_proj (x-branch | z-branch): K=2 broadcast FMAs (VPU) ----
        xz = jnp.zeros((Bsz, L, 2 * D_INNER), jnp.float32)
        for c in range(D_MODEL):
            w_row = w_ref[layer, ROW_WIN + c, 0:2 * D_INNER]   # (64,)
            xz = xz + xn[:, :, c:c + 1] * w_row[None, None, :]
        xin = xz[:, :, 0:D_INNER]                   # (B, L, D_INNER)
        z = xz[:, :, D_INNER:2 * D_INNER]           # (B, L, D_INNER)

        # ---- causal depthwise conv: effective taps over zero-padded scratch ----
        xpad_ref[:, n_eff - 1:n_eff - 1 + L, :] = xin
        xc = jnp.zeros((Bsz, L, D_INNER), jnp.float32)
        for j in range(n_eff):
            tap = w_ref[layer, ROW_CONVW + j, 0:D_INNER]       # (D_INNER,)
            xc = xc + tap[None, None, :] * xpad_ref[:, j:j + L, :]
        cb = w_ref[layer, ROW_CONVB, 0:D_INNER]
        xc = _silu(xc + cb[None, None, :])

        # ---- fused SSM projections: one lane-dense (K=32 -> N=128) MXU pass ----
        w_ssm = w_ref[layer, ROW_SSM:ROW_SSM + D_INNER, :]     # (32, 128)
        proj = jnp.dot(xc.reshape(Bsz * L, D_INNER), w_ssm,
                       preferred_element_type=jnp.float32).reshape(Bsz, L, LANE)
        dtb = w_ref[layer, ROW_DTB, 0:D_INNER]
        delta = _softplus(proj[:, :, COL_DT:COL_DT + D_INNER]
                          + dtb[None, None, :])                # (B, L, D_INNER)
        Bmat = proj[:, :, COL_B:COL_B + D_STATE]               # (B, L, D_STATE)
        Cmat = proj[:, :, COL_C:COL_C + D_STATE]               # (B, L, D_STATE)

        A = w_ref[layer, ROW_A:ROW_A + D_INNER, 0:D_STATE]     # (DI, DS), = -exp(a_log)

        # ---- hoist all exps out of the recurrence (one big EUP push) ----
        da_ref[...] = jnp.exp(delta[:, :, :, None] * A[None, None, :, :])
        dbx_ref[...] = (delta * xc)[:, :, :, None] * Bmat[:, :, None, :]

        # ---- selective scan: per-t body is mul/add + one lane reduce ----
        # TODO(synk): (B, DI, DS) only fills 32/128 lanes; a lane-dense repack
        # of the scan state would further cut VPU work at larger scales.
        h = jnp.zeros((Bsz, D_INNER, D_STATE), jnp.float32)
        for t in range(L):
            h = da_ref[:, t] * h + dbx_ref[:, t]
            y_ref[:, t, :] = jnp.sum(h * Cmat[:, t, :][:, None, :], axis=-1)

        dvec = w_ref[layer, ROW_DVEC, 0:D_INNER]
        y = y_ref[...] + dvec[None, None, :] * xc

        # ---- gate, out_proj (N=2 lane reductions) + residual ----
        y_gated = y * _silu(z)                      # (B, L, D_INNER)
        cols = []
        for c in range(D_MODEL):
            wo = w_ref[layer, ROW_WOUT + c, 0:D_INNER]
            cols.append(jnp.sum(y_gated * wo[None, None, :],
                                axis=-1, keepdims=True))
        x = x + jnp.concatenate(cols, axis=-1)      # (B, L, D_MODEL)

    # ---- classifier head: fc(h_n), N=1 -> lane reduction ----
    h_n = y_gated[:, L - 1, :]                      # (B, HIDDEN)
    logit_cols = []
    for c in range(NUM_CLASSES):
        wfc = w_ref[0, ROW_FC + c, 0:HIDDEN]
        logit_cols.append(jnp.sum(h_n * wfc[None, :], axis=-1, keepdims=True))
    logits = jnp.concatenate(logit_cols, axis=-1)   # (B, NUM_CLASSES)
    logits = logits + w_ref[0, ROW_BFC, 0:NUM_CLASSES][None, :]
    out_ref[...] = logits


def pack_params(params, L):
    """Fold/fuse weights offline and pack everything into one fp32 slab."""
    (norm_w, w_in_x, w_in_z, conv_w, conv_b, w_delta, w_b, w_c,
     w_dt, dt_b, a_log, d_vec, w_out, w_fc, b_fc) = params
    n_eff = min(D_CONV, L)                          # dead conv taps dropped
    slab = jnp.zeros((N_LAYERS, SLAB_ROWS, LANE), jnp.float32)
    for layer in range(N_LAYERS):
        w_dfold = w_delta[layer] @ w_dt[layer]      # (DI, DI), rank-1 fold
        ssm = jnp.concatenate([w_dfold, w_b[layer], w_c[layer]], axis=1)
        slab = slab.at[layer, ROW_SSM:ROW_SSM + D_INNER, :SSM_COLS].set(ssm)
        a_mat = -jnp.exp(a_log[layer])              # precompute A here
        slab = slab.at[layer, ROW_A:ROW_A + D_INNER, :D_STATE].set(a_mat)
        w_in = jnp.concatenate([w_in_x[layer], w_in_z[layer]], axis=1)
        slab = slab.at[layer, ROW_WIN:ROW_WIN + D_MODEL, :2 * D_INNER].set(w_in)
        slab = slab.at[layer, ROW_WOUT:ROW_WOUT + D_MODEL, :D_INNER].set(
            w_out[layer].T)
        slab = slab.at[layer, ROW_CONVB, :D_INNER].set(conv_b[layer])
        slab = slab.at[layer, ROW_DTB, :D_INNER].set(dt_b[layer])
        slab = slab.at[layer, ROW_DVEC, :D_INNER].set(d_vec[layer])
        slab = slab.at[layer, ROW_NORMW, :D_MODEL].set(norm_w[layer])
        cw_eff = conv_w[layer, D_CONV - n_eff:, :]  # (n_eff, DI)
        slab = slab.at[layer, ROW_CONVW:ROW_CONVW + n_eff, :D_INNER].set(cw_eff)
    slab = slab.at[0, ROW_FC:ROW_FC + NUM_CLASSES, :HIDDEN].set(w_fc.T)
    slab = slab.at[0, ROW_BFC, :NUM_CLASSES].set(b_fc.reshape(-1))
    return slab, n_eff


def mamba_sequence_classifier(x, params):
    """x: (B, L, D_MODEL) float32 -> logits: (B,) float32 (== .squeeze(-1))."""
    B, L, _ = x.shape
    w_slab, n_eff = pack_params(params, L)
    # Tiny shapes: no grid; x + one packed weight slab = 2 VMEM operands.
    out = pl.pallas_call(
        mamba_classifier_kernel,
        out_shape=jax.ShapeDtypeStruct((B, NUM_CLASSES), jnp.float32),
        in_specs=[pl.BlockSpec(memory_space=pltpu.MemorySpace.VMEM)] * 2,
        out_specs=pl.BlockSpec(memory_space=pltpu.MemorySpace.VMEM),
        scratch_shapes=[
            pltpu.VMEM((B, L + n_eff - 1, D_INNER), jnp.float32),   # conv pad
            pltpu.VMEM((B, L, D_INNER, D_STATE), jnp.float32),      # dA
            pltpu.VMEM((B, L, D_INNER, D_STATE), jnp.float32),      # dt*B*x
            pltpu.VMEM((B, L, D_INNER), jnp.float32),               # scan y
        ],
    )(x, w_slab)
    return out[:, 0]                                # logits.squeeze(-1)


def init_params(key):
    ks = jax.random.split(key, 10)

    def nrm(k, shape, scale=0.02):
        return (scale * jax.random.normal(k, shape)).astype(jnp.float32)

    norm_w = jnp.ones((N_LAYERS, D_MODEL), jnp.float32)
    w_in_x = nrm(ks[0], (N_LAYERS, D_MODEL, D_INNER))
    w_in_z = nrm(ks[1], (N_LAYERS, D_MODEL, D_INNER))
    conv_w = nrm(ks[2], (N_LAYERS, D_CONV, D_INNER), 0.1)
    conv_b = jnp.zeros((N_LAYERS, D_INNER), jnp.float32)
    w_delta = nrm(ks[3], (N_LAYERS, D_INNER, DT_RANK))
    w_b = nrm(ks[4], (N_LAYERS, D_INNER, D_STATE))
    w_c = nrm(ks[5], (N_LAYERS, D_INNER, D_STATE))
    w_dt = nrm(ks[6], (N_LAYERS, DT_RANK, D_INNER), 0.5)
    dt_b = jnp.full((N_LAYERS, D_INNER), -4.0, jnp.float32)
    a_log = jnp.log(
        jnp.broadcast_to(
            jnp.arange(1, D_STATE + 1, dtype=jnp.float32),
            (N_LAYERS, D_INNER, D_STATE),
        )
    ) + 0.0
    d_vec = jnp.ones((N_LAYERS, D_INNER), jnp.float32)
    w_out = nrm(ks[7], (N_LAYERS, D_INNER, D_MODEL))
    w_fc = nrm(ks[8], (HIDDEN, NUM_CLASSES))
    b_fc = jnp.zeros((1, NUM_CLASSES), jnp.float32)
    return (norm_w, w_in_x, w_in_z, conv_w, conv_b, w_delta, w_b, w_c,
            w_dt, dt_b, a_log, d_vec, w_out, w_fc, b_fc)


if __name__ == "__main__":
    key = jax.random.PRNGKey(0)
    kx, kp = jax.random.split(key)
    B, L = 2, 8
    x = jax.random.normal(kx, (B, L, D_MODEL), dtype=jnp.float32)
    params = init_params(kp)

    logits = mamba_sequence_classifier(x, params)
    jax.block_until_ready(logits)
    assert logits.shape == (B,), logits.shape
    assert logits.dtype == jnp.float32
    print("KERNEL_OK")
</pallas_src>

<mosaic_0001>
module attributes {stable_mosaic.version = 11 : i64} {
  func.func @mamba_classifier_kernel(%arg0: memref<2x8x2xf32, #tpu.memory_space<vmem>>, %arg1: memref<2x96x128xf32, #tpu.memory_space<vmem>>, %arg2: memref<2x1xf32, #tpu.memory_space<vmem>>, %arg3: memref<2x15x32xf32, #tpu.memory_space<vmem>>, %arg4: memref<2x8x32x32xf32, #tpu.memory_space<vmem>>, %arg5: memref<2x8x32x32xf32, #tpu.memory_space<vmem>>, %arg6: memref<2x8x32xf32, #tpu.memory_space<vmem>>) attributes {dimension_semantics = [], scalar_prefetch = 0 : i64, scratch_operands = 4 : i64, tpu.core_type = #tpu.core_type<tc>} {
    %c0 = arith.constant 0 : index
    %c0_0 = arith.constant 0 : index
    %c0_1 = arith.constant 0 : index
    %0 = vector.load %arg0[%c0, %c0_0, %c0_1] : memref<2x8x2xf32, #tpu.memory_space<vmem>>, vector<2x8x2xf32>
    %cst = arith.constant 0.000000e+00 : f32
    %1 = vector.broadcast %cst : f32 to vector<2x7x32xf32>
    %c0_2 = arith.constant 0 : index
    %c0_3 = arith.constant 0 : index
    %c0_4 = arith.constant 0 : index
    %2 = vector.load %arg3[%c0_2, %c0_3, %c0_4] : memref<2x15x32xf32, #tpu.memory_space<vmem>>, vector<2x7x32xf32>
    tpu.vector_store %arg3[%c0_2, %c0_3, %c0_4], %1 {strides = array<i32>} : memref<2x15x32xf32, #tpu.memory_space<vmem>>, vector<2x7x32xf32>,
    %c0_5 = arith.constant 0 : index
    %c71 = arith.constant 71 : index
    %c0_6 = arith.constant 0 : index
    %3 = vector.load %arg1[%c0_5, %c71, %c0_6] : memref<2x96x128xf32, #tpu.memory_space<vmem>>, vector<1x1x2xf32>
    %4 = vector.shape_cast %3 : vector<1x1x2xf32> to vector<2xf32>
    %5 = arith.mulf %0, %0 : vector<2x8x2xf32>
    %cst_7 = arith.constant dense<0.000000e+00> : vector<2x8xf32>
    %6 = vector.multi_reduction <add>, %5, %cst_7 [2] : vector<2x8x2xf32> to vector<2x8xf32>
    %7 = vector.shape_cast %6 : vector<2x8xf32> to vector<2x8x1xf32>
    %cst_8 = arith.constant 2.000000e+00 : f32
    %8 = vector.broadcast %cst_8 : f32 to vector<2x8x1xf32>
    %9 = arith.divf %7, %8 : vector<2x8x1xf32>
    %cst_9 = arith.constant 9.99999974E-6 : f32
    %10 = vector.broadcast %cst_9 : f32 to vector<2x8x1xf32>
    %11 = arith.addf %9, %10 : vector<2x8x1xf32>
    %12 = math.rsqrt %11 : vector<2x8x1xf32>
    %13 = vector.broadcast %12 : vector<2x8x1xf32> to vector<2x8x2xf32>
    %14 = arith.mulf %0, %13 : vector<2x8x2xf32>
    %15 = vector.shape_cast %4 : vector<2xf32> to vector<1x1x2xf32>
    %16 = vector.broadcast %15 : vector<1x1x2xf32> to vector<2x8x2xf32>
    %17 = arith.mulf %14, %16 : vector<2x8x2xf32>
    %cst_10 = arith.constant 0.000000e+00 : f32
    %18 = vector.broadcast %cst_10 : f32 to vector<2x8x64xf32>
    %c0_11 = arith.constant 0 : index
    %c64 = arith.constant 64 : index
    %c0_12 = arith.constant 0 : index
    %19 = vector.load %arg1[%c0_11, %c64, %c0_12] : memref<2x96x128xf32, #tpu.memory_space<vmem>>, vector<1x1x64xf32>
    %20 = vector.shape_cast %19 : vector<1x1x64xf32> to vector<64xf32>
    %21 = vector.extract_strided_slice %17 {offsets = [0, 0, 0], sizes = [2, 8, 1], strides = [1, 1, 1]} : vector<2x8x2xf32> to vector<2x8x1xf32>
    %22 = vector.shape_cast %20 : vector<64xf32> to vector<1x1x64xf32>
    %23 = vector.broadcast %21 : vector<2x8x1xf32> to vector<2x8x64xf32>
    %24 = vector.broadcast %22 : vector<1x1x64xf32> to vector<2x8x64xf32>
    %25 = arith.mulf %23, %24 : vector<2x8x64xf32>
    %26 = arith.addf %18, %25 : vector<2x8x64xf32>
    %c0_13 = arith.constant 0 : index
    %c65 = arith.constant 65 : index
    %c0_14 = arith.constant 0 : index
    %27 = vector.load %arg1[%c0_13, %c65, %c0_14] : memref<2x96x128xf32, #tpu.memory_space<vmem>>, vector<1x1x64xf32>
    %28 = vector.shape_cast %27 : vector<1x1x64xf32> to vector<64xf32>
    %29 = vector.extract_strided_slice %17 {offsets = [0, 0, 1], sizes = [2, 8, 1], strides = [1, 1, 1]} : vector<2x8x2xf32> to vector<2x8x1xf32>
    %30 = vector.shape_cast %28 : vector<64xf32> to vector<1x1x64xf32>
    %31 = vector.broadcast %29 : vector<2x8x1xf32> to vector<2x8x64xf32>
    %32 = vector.broadcast %30 : vector<1x1x64xf32> to vector<2x8x64xf32>
    %33 = arith.mulf %31, %32 : vector<2x8x64xf32>
    %34 = arith.addf %26, %33 : vector<2x8x64xf32>
    %35 = vector.extract_strided_slice %34 {offsets = [0, 0, 0], sizes = [2, 8, 32], strides = [1, 1, 1]} : vector<2x8x64xf32> to vector<2x8x32xf32>
    %36 = vector.extract_strided_slice %34 {offsets = [0, 0, 32], sizes = [2, 8, 32], strides = [1, 1, 1]} : vector<2x8x64xf32> to vector<2x8x32xf32>
    %c0_15 = arith.constant 0 : index
    %c7 = arith.constant 7 : index
    %c0_16 = arith.constant 0 : index
    %37 = vector.load %arg3[%c0_15, %c7, %c0_16] : memref<2x15x32xf32, #tpu.memory_space<vmem>>, vector<2x8x32xf32>
    tpu.vector_store %arg3[%c0_15, %c7, %c0_16], %35 {strides = array<i32>} : memref<2x15x32xf32, #tpu.memory_space<vmem>>, vector<2x8x32xf32>,
    %cst_17 = arith.constant 0.000000e+00 : f32
    %38 = vector.broadcast %cst_17 : f32 to vector<2x8x32xf32>
    %c0_18 = arith.constant 0 : index
    %c72 = arith.constant 72 : index
    %c0_19 = arith.constant 0 : index
    %39 = vector.load %arg1[%c0_18, %c72, %c0_19] : memref<2x96x128xf32, #tpu.memory_space<vmem>>, vector<1x1x32xf32>
    %40 = vector.shape_cast %39 : vector<1x1x32xf32> to vector<32xf32>
    %41 = vector.shape_cast %40 : vector<32xf32> to vector<1x1x32xf32>
    %c0_20 = arith.constant 0 : index
    %c0_21 = arith.constant 0 : index
    %c0_22 = arith.constant 0 : index
    %42 = vector.load %arg3[%c0_20, %c0_21, %c0_22] : memref<2x15x32xf32, #tpu.memory_space<vmem>>, vector<2x8x32xf32>
    %43 = vector.broadcast %41 : vector<1x1x32xf32> to vector<2x8x32xf32>
    %44 = arith.mulf %43, %42 : vector<2x8x32xf32>
    %45 = arith.addf %38, %44 : vector<2x8x32xf32>
    %c0_23 = arith.constant 0 : index
    %c73 = arith.constant 73 : index
    %c0_24 = arith.constant 0 : index
    %46 = vector.load %arg1[%c0_23, %c73, %c0_24] : memref<2x96x128xf32, #tpu.memory_space<vmem>>, vector<1x1x32xf32>
    %47 = vector.shape_cast %46 : vector<1x1x32xf32> to vector<32xf32>
    %48 = vector.shape_cast %47 : vector<32xf32> to vector<1x1x32xf32>
    %c0_25 = arith.constant 0 : index
    %c1 = arith.constant 1 : index
    %c0_26 = arith.constant 0 : index
    %49 = vector.load %arg3[%c0_25, %c1, %c0_26] : memref<2x15x32xf32, #tpu.memory_space<vmem>>, vector<2x8x32xf32>
    %50 = vector.broadcast %48 : vector<1x1x32xf32> to vector<2x8x32xf32>
    %51 = arith.mulf %50, %49 : vector<2x8x32xf32>
    %52 = arith.addf %45, %51 : vector<2x8x32xf32>
    %c0_27 = arith.constant 0 : index
    %c74 = arith.constant 74 : index
    %c0_28 = arith.constant 0 : index
    %53 = vector.load %arg1[%c0_27, %c74, %c0_28] : memref<2x96x128xf32, #tpu.memory_space<vmem>>, vector<1x1x32xf32>
    %54 = vector.shape_cast %53 : vector<1x1x32xf32> to vector<32xf32>
    %55 = vector.shape_cast %54 : vector<32xf32> to vector<1x1x32xf32>
    %c0_29 = arith.constant 0 : index
    %c2 = arith.constant 2 : index
    %c0_30 = arith.constant 0 : index
    %56 = vector.load %arg3[%c0_29, %c2, %c0_30] : memref<2x15x32xf32, #tpu.memory_space<vmem>>, vector<2x8x32xf32>
    %57 = vector.broadcast %55 : vector<1x1x32xf32> to vector<2x8x32xf32>
    %58 = arith.mulf %57, %56 : vector<2x8x32xf32>
    %59 = arith.addf %52, %58 : vector<2x8x32xf32>
    %c0_31 = arith.constant 0 : index
    %c75 = arith.constant 75 : index
    %c0_32 = arith.constant 0 : index
    %60 = vector.load %arg1[%c0_31, %c75, %c0_32] : memref<2x96x128xf32, #tpu.memory_space<vmem>>, vector<1x1x32xf32>
    %61 = vector.shape_cast %60 : vector<1x1x32xf32> to vector<32xf32>
    %62 = vector.shape_cast %61 : vector<32xf32> to vector<1x1x32xf32>
    %c0_33 = arith.constant 0 : index
    %c3 = arith.constant 3 : index
    %c0_34 = arith.constant 0 : index
    %63 = vector.load %arg3[%c0_33, %c3, %c0_34] : memref<2x15x32xf32, #tpu.memory_space<vmem>>, vector<2x8x32xf32>
    %64 = vector.broadcast %62 : vector<1x1x32xf32> to vector<2x8x32xf32>
    %65 = arith.mulf %64, %63 : vector<2x8x32xf32>
    %66 = arith.addf %59, %65 : vector<2x8x32xf32>
    %c0_35 = arith.constant 0 : index
    %c76 = arith.constant 76 : index
    %c0_36 = arith.constant 0 : index
    %67 = vector.load %arg1[%c0_35, %c76, %c0_36] : memref<2x96x128xf32, #tpu.memory_space<vmem>>, vector<1x1x32xf32>
    %68 = vector.shape_cast %67 : vector<1x1x32xf32> to vector<32xf32>
    %69 = vector.shape_cast %68 : vector<32xf32> to vector<1x1x32xf32>
    %c0_37 = arith.constant 0 : index
    %c4 = arith.constant 4 : index
    %c0_38 = arith.constant 0 : index
    %70 = vector.load %arg3[%c0_37, %c4, %c0_38] : memref<2x15x32xf32, #tpu.memory_space<vmem>>, vector<2x8x32xf32>
    %71 = vector.broadcast %69 : vector<1x1x32xf32> to vector<2x8x32xf32>
    %72 = arith.mulf %71, %70 : vector<2x8x32xf32>
    %73 = arith.addf %66, %72 : vector<2x8x32xf32>
    %c0_39 = arith.constant 0 : index
    %c77 = arith.constant 77 : index
    %c0_40 = arith.constant 0 : index
    %74 = vector.load %arg1[%c0_39, %c77, %c0_40] : memref<2x96x128xf32, #tpu.memory_space<vmem>>, vector<1x1x32xf32>
    %75 = vector.shape_cast %74 : vector<1x1x32xf32> to vector<32xf32>
    %76 = vector.shape_cast %75 : vector<32xf32> to vector<1x1x32xf32>
    %c0_41 = arith.constant 0 : index
    %c5 = arith.constant 5 : index
    %c0_42 = arith.constant 0 : index
    %77 = vector.load %arg3[%c0_41, %c5, %c0_42] : memref<2x15x32xf32, #tpu.memory_space<vmem>>, vector<2x8x32xf32>
    %78 = vector.broadcast %76 : vector<1x1x32xf32> to vector<2x8x32xf32>
    %79 = arith.mulf %78, %77 : vector<2x8x32xf32>
    %80 = arith.addf %73, %79 : vector<2x8x32xf32>
    %c0_43 = arith.constant 0 : index
    %c78 = arith.constant 78 : index
    %c0_44 = arith.constant 0 : index
    %81 = vector.load %arg1[%c0_43, %c78, %c0_44] : memref<2x96x128xf32, #tpu.memory_space<vmem>>, vector<1x1x32xf32>
    %82 = vector.shape_cast %81 : vector<1x1x32xf32> to vector<32xf32>
    %83 = vector.shape_cast %82 : vector<32xf32> to vector<1x1x32xf32>
    %c0_45 = arith.constant 0 : index
    %c6 = arith.constant 6 : index
    %c0_46 = arith.constant 0 : index
    %84 = vector.load %arg3[%c0_45, %c6, %c0_46] : memref<2x15x32xf32, #tpu.memory_space<vmem>>, vector<2x8x32xf32>
    %85 = vector.broadcast %83 : vector<1x1x32xf32> to vector<2x8x32xf32>
    %86 = arith.mulf %85, %84 : vector<2x8x32xf32>
    %87 = arith.addf %80, %86 : vector<2x8x32xf32>
    %c0_47 = arith.constant 0 : index
    %c79 = arith.constant 79 : index
    %c0_48 = arith.constant 0 : index
    %88 = vector.load %arg1[%c0_47, %c79, %c0_48] : memref<2x96x128xf32, #tpu.memory_space<vmem>>, vector<1x1x32xf32>
    %89 = vector.shape_cast %88 : vector<1x1x32xf32> to vector<32xf32>
    %90 = vector.shape_cast %89 : vector<32xf32> to vector<1x1x32xf32>
    %c0_49 = arith.constant 0 : index
    %c7_50 = arith.constant 7 : index
    %c0_51 = arith.constant 0 : index
    %91 = vector.load %arg3[%c0_49, %c7_50, %c0_51] : memref<2x15x32xf32, #tpu.memory_space<vmem>>, vector<2x8x32xf32>
    %92 = vector.broadcast %90 : vector<1x1x32xf32> to vector<2x8x32xf32>
    %93 = arith.mulf %92, %91 : vector<2x8x32xf32>
    %94 = arith.addf %87, %93 : vector<2x8x32xf32>
    %c0_52 = arith.constant 0 : index
    %c68 = arith.constant 68 : index
    %c0_53 = arith.constant 0 : index
    %95 = vector.load %arg1[%c0_52, %c68, %c0_53] : memref<2x96x128xf32, #tpu.memory_space<vmem>>, vector<1x1x32xf32>
    %96 = vector.shape_cast %95 : vector<1x1x32xf32> to vector<32xf32>
    %97 = vector.shape_cast %96 : vector<32xf32> to vector<1x1x32xf32>
    %98 = vector.broadcast %97 : vector<1x1x32xf32> to vector<2x8x32xf32>
    %99 = arith.addf %94, %98 : vector<2x8x32xf32>
    %100 = arith.negf %99 : vector<2x8x32xf32>
    %101 = math.exp %100 : vector<2x8x32xf32>
    %cst_54 = arith.constant 1.000000e+00 : f32
    %102 = vector.broadcast %cst_54 : f32 to vector<2x8x32xf32>
    %103 = arith.addf %102, %101 : vector<2x8x32xf32>
    %104 = arith.divf %102, %103 : vector<2x8x32xf32>
    %105 = arith.mulf %99, %104 : vector<2x8x32xf32>
    %c0_55 = arith.constant 0 : index
    %c0_56 = arith.constant 0 : index
    %c0_57 = arith.constant 0 : index
    %106 = vector.load %arg1[%c0_55, %c0_56, %c0_57] : memref<2x96x128xf32, #tpu.memory_space<vmem>>, vector<1x32x128xf32>
    %107 = vector.shape_cast %106 : vector<1x32x128xf32> to vector<32x128xf32>
    %108 = vector.shape_cast %105 : vector<2x8x32xf32> to vector<16x32xf32>
    %cst_58 = arith.constant dense<0.000000e+00> : vector<16x128xf32>
    %109 = tpu.matmul %108, %107, %cst_58 {dimension_numbers = #tpu.dot_dimension_numbers<[1], [0], [0], [1], [0, 0, 1, 1], [], []>} : vector<16x32xf32>, vector<32x128xf32>, vector<16x128xf32> -> vector<16x128xf32>
    %110 = vector.shape_cast %109 : vector<16x128xf32> to vector<2x8x128xf32>
    %c0_59 = arith.constant 0 : index
    %c69 = arith.constant 69 : index
    %c0_60 = arith.constant 0 : index
    %111 = vector.load %arg1[%c0_59, %c69, %c0_60] : memref<2x96x128xf32, #tpu.memory_space<vmem>>, vector<1x1x32xf32>
    %112 = vector.shape_cast %111 : vector<1x1x32xf32> to vector<32xf32>
    %113 = vector.extract_strided_slice %110 {offsets = [0, 0, 0], sizes = [2, 8, 32], strides = [1, 1, 1]} : vector<2x8x128xf32> to vector<2x8x32xf32>
    %114 = vector.shape_cast %112 : vector<32xf32> to vector<1x1x32xf32>
    %115 = vector.broadcast %114 : vector<1x1x32xf32> to vector<2x8x32xf32>
    %116 = arith.addf %113, %115 : vector<2x8x32xf32>
    %cst_61 = arith.constant 0.000000e+00 : f32
    %117 = vector.broadcast %cst_61 : f32 to vector<2x8x32xf32>
    %118 = arith.maximumf %116, %117 : vector<2x8x32xf32>
    %119 = math.absf %116 : vector<2x8x32xf32>
    %cst_62 = arith.constant 0.000000e+00 : f32
    %120 = vector.broadcast %cst_62 : f32 to vector<2x8x32xf32>
    %121 = arith.subf %120, %119 : vector<2x8x32xf32>
    %122 = math.exp %121 : vector<2x8x32xf32>
    %cst_63 = arith.constant 1.000000e+00 : f32
    %123 = vector.broadcast %cst_63 : f32 to vector<2x8x32xf32>
    %124 = arith.addf %123, %122 : vector<2x8x32xf32>
    %125 = math.log %124 : vector<2x8x32xf32>
    %126 = arith.addf %118, %125 : vector<2x8x32xf32>
    %127 = vector.extract_strided_slice %110 {offsets = [0, 0, 32], sizes = [2, 8, 32], strides = [1, 1, 1]} : vector<2x8x128xf32> to vector<2x8x32xf32>
    %128 = vector.extract_strided_slice %110 {offsets = [0, 0, 64], sizes = [2, 8, 32], strides = [1, 1, 1]} : vector<2x8x128xf32> to vector<2x8x32xf32>
    %c0_64 = arith.constant 0 : index
    %c32 = arith.constant 32 : index
    %c0_65 = arith.constant 0 : index
    %129 = vector.load %arg1[%c0_64, %c32, %c0_65] : memref<2x96x128xf32, #tpu.memory_space<vmem>>, vector<1x32x32xf32>
    %130 = vector.shape_cast %129 : vector<1x32x32xf32> to vector<32x32xf32>
    %131 = vector.shape_cast %126 : vector<2x8x32xf32> to vector<2x8x32x1xf32>
    %132 = vector.shape_cast %130 : vector<32x32xf32> to vector<1x1x32x32xf32>
    %133 = vector.broadcast %131 : vector<2x8x32x1xf32> to vector<2x8x32x32xf32>
    %134 = vector.broadcast %132 : vector<1x1x32x32xf32> to vector<2x8x32x32xf32>
    %135 = arith.mulf %133, %134 : vector<2x8x32x32xf32>
    %136 = math.exp %135 : vector<2x8x32x32xf32>
    %c0_66 = arith.constant 0 : index
    %c0_67 = arith.constant 0 : index
    %c0_68 = arith.constant 0 : index
    %c0_69 = arith.constant 0 : index
    %137 = vector.load %arg4[%c0_66, %c0_67, %c0_68, %c0_69] : memref<2x8x32x32xf32, #tpu.memory_space<vmem>>, vector<2x8x32x32xf32>
    tpu.vector_store %arg4[%c0_66, %c0_67, %c0_68, %c0_69], %136 {strides = array<i32>} : memref<2x8x32x32xf32, #tpu.memory_space<vmem>>, vector<2x8x32x32xf32>,
    %138 = arith.mulf %126, %105 : vector<2x8x32xf32>
    %139 = vector.shape_cast %138 : vector<2x8x32xf32> to vector<2x8x32x1xf32>
    %140 = vector.shape_cast %127 : vector<2x8x32xf32> to vector<2x8x1x32xf32>
    %141 = vector.broadcast %139 : vector<2x8x32x1xf32> to vector<2x8x32x32xf32>
    %142 = vector.broadcast %140 : vector<2x8x1x32xf32> to vector<2x8x32x32xf32>
    %143 = arith.mulf %141, %142 : vector<2x8x32x32xf32>
    %c0_70 = arith.constant 0 : index
    %c0_71 = arith.constant 0 : index
    %c0_72 = arith.constant 0 : index
    %c0_73 = arith.constant 0 : index
    %144 = vector.load %arg5[%c0_70, %c0_71, %c0_72, %c0_73] : memref<2x8x32x32xf32, #tpu.memory_space<vmem>>, vector<2x8x32x32xf32>
    tpu.vector_store %arg5[%c0_70, %c0_71, %c0_72, %c0_73], %143 {strides = array<i32>} : memref<2x8x32x32xf32, #tpu.memory_space<vmem>>, vector<2x8x32x32xf32>,
    %cst_74 = arith.constant 0.000000e+00 : f32
    %145 = vector.broadcast %cst_74 : f32 to vector<2x32x32xf32>
    %c0_75 = arith.constant 0 : index
    %c0_76 = arith.constant 0 : index
    %c0_77 = arith.constant 0 : index
    %c0_78 = arith.constant 0 : index
    %146 = vector.load %arg4[%c0_75, %c0_76, %c0_77, %c0_78] : memref<2x8x32x32xf32, #tpu.memory_space<vmem>>, vector<2x1x32x32xf32>
    %147 = vector.shape_cast %146 : vector<2x1x32x32xf32> to vector<2x32x32xf32>
    %148 = arith.mulf %147, %145 : vector<2x32x32xf32>
    %c0_79 = arith.constant 0 : index
    %c0_80 = arith.constant 0 : index
    %c0_81 = arith.constant 0 : index
    %c0_82 = arith.constant 0 : index
    %149 = vector.load %arg5[%c0_79, %c0_80, %c0_81, %c0_82] : memref<2x8x32x32xf32, #tpu.memory_space<vmem>>, vector<2x1x32x32xf32>
    %150 = vector.shape_cast %149 : vector<2x1x32x32xf32> to vector<2x32x32xf32>
    %151 = arith.addf %148, %150 : vector<2x32x32xf32>
    %152 = vector.extract_strided_slice %128 {offsets = [0, 0, 0], sizes = [2, 1, 32], strides = [1, 1, 1]} : vector<2x8x32xf32> to vector<2x1x32xf32>
    %153 = vector.shape_cast %152 : vector<2x1x32xf32> to vector<2x32xf32>
    %154 = vector.shape_cast %153 : vector<2x32xf32> to vector<2x1x32xf32>
    %155 = vector.broadcast %154 : vector<2x1x32xf32> to vector<2x32x32xf32>
    %156 = arith.mulf %151, %155 : vector<2x32x32xf32>
    %cst_83 = arith.constant dense<0.000000e+00> : vector<2x32xf32>
    %157 = vector.multi_reduction <add>, %156, %cst_83 [2] : vector<2x32x32xf32> to vector<2x32xf32>
    %c0_84 = arith.constant 0 : index
    %c0_85 = arith.constant 0 : index
    %c0_86 = arith.constant 0 : index
    %158 = vector.load %arg6[%c0_84, %c0_85, %c0_86] : memref<2x8x32xf32, #tpu.memory_space<vmem>>, vector<2x1x32xf32>
    %159 = vector.shape_cast %158 : vector<2x1x32xf32> to vector<2x32xf32>
    %160 = vector.shape_cast %157 : vector<2x32xf32> to vector<2x1x32xf32>
    tpu.vector_store %arg6[%c0_84, %c0_85, %c0_86], %160 {strides = array<i32>} : memref<2x8x32xf32, #tpu.memory_space<vmem>>, vector<2x1x32xf32>,
    %c0_87 = arith.constant 0 : index
    %c1_88 = arith.constant 1 : index
    %c0_89 = arith.constant 0 : index
    %c0_90 = arith.constant 0 : index
    %161 = vector.load %arg4[%c0_87, %c1_88, %c0_89, %c0_90] : memref<2x8x32x32xf32, #tpu.memory_space<vmem>>, vector<2x1x32x32xf32>
    %162 = vector.shape_cast %161 : vector<2x1x32x32xf32> to vector<2x32x32xf32>
    %163 = arith.mulf %162, %151 : vector<2x32x32xf32>
    %c0_91 = arith.constant 0 : index
    %c1_92 = arith.constant 1 : index
    %c0_93 = arith.constant 0 : index
    %c0_94 = arith.constant 0 : index
    %164 = vector.load %arg5[%c0_91, %c1_92, %c0_93, %c0_94] : memref<2x8x32x32xf32, #tpu.memory_space<vmem>>, vector<2x1x32x32xf32>
    %165 = vector.shape_cast %164 : vector<2x1x32x32xf32> to vector<2x32x32xf32>
    %166 = arith.addf %163, %165 : vector<2x32x32xf32>
    %167 = vector.extract_strided_slice %128 {offsets = [0, 1, 0], sizes = [2, 1, 32], strides = [1, 1, 1]} : vector<2x8x32xf32> to vector<2x1x32xf32>
    %168 = vector.shape_cast %167 : vector<2x1x32xf32> to vector<2x32xf32>
    %169 = vector.shape_cast %168 : vector<2x32xf32> to vector<2x1x32xf32>
    %170 = vector.broadcast %169 : vector<2x1x32xf32> to vector<2x32x32xf32>
    %171 = arith.mulf %166, %170 : vector<2x32x32xf32>
    %cst_95 = arith.constant dense<0.000000e+00> : vector<2x32xf32>
    %172 = vector.multi_reduction <add>, %171, %cst_95 [2] : vector<2x32x32xf32> to vector<2x32xf32>
    %c0_96 = arith.constant 0 : index
    %c1_97 = arith.constant 1 : index
    %c0_98 = arith.constant 0 : index
    %173 = vector.load %arg6[%c0_96, %c1_97, %c0_98] : memref<2x8x32xf32, #tpu.memory_space<vmem>>, vector<2x1x32xf32>
    %174 = vector.shape_cast %173 : vector<2x1x32xf32> to vector<2x32xf32>
    %175 = vector.shape_cast %172 : vector<2x32xf32> to vector<2x1x32xf32>
    tpu.vector_store %arg6[%c0_96, %c1_97, %c0_98], %175 {strides = array<i32>} : memref<2x8x32xf32, #tpu.memory_space<vmem>>, vector<2x1x32xf32>,
    %c0_99 = arith.constant 0 : index
    %c2_100 = arith.constant 2 : index
    %c0_101 = arith.constant 0 : index
    %c0_102 = arith.constant 0 : index
    %176 = vector.load %arg4[%c0_99, %c2_100, %c0_101, %c0_102] : memref<2x8x32x32xf32, #tpu.memory_space<vmem>>, vector<2x1x32x32xf32>
    %177 = vector.shape_cast %176 : vector<2x1x32x32xf32> to vector<2x32x32xf32>
    %178 = arith.mulf %177, %166 : vector<2x32x32xf32>
    %c0_103 = arith.constant 0 : index
    %c2_104 = arith.constant 2 : index
    %c0_105 = arith.constant 0 : index
    %c0_106 = arith.constant 0 : index
    %179 = vector.load %arg5[%c0_103, %c2_104, %c0_105, %c0_106] : memref<2x8x32x32xf32, #tpu.memory_space<vmem>>, vector<2x1x32x32xf32>
    %180 = vector.shape_cast %179 : vector<2x1x32x32xf32> to vector<2x32x32xf32>
    %181 = arith.addf %178, %180 : vector<2x32x32xf32>
    %182 = vector.extract_strided_slice %128 {offsets = [0, 2, 0], sizes = [2, 1, 32], strides = [1, 1, 1]} : vector<2x8x32xf32> to vector<2x1x32xf32>
    %183 = vector.shape_cast %182 : vector<2x1x32xf32> to vector<2x32xf32>
    %184 = vector.shape_cast %183 : vector<2x32xf32> to vector<2x1x32xf32>
    %185 = vector.broadcast %184 : vector<2x1x32xf32> to vector<2x32x32xf32>
    %186 = arith.mulf %181, %185 : vector<2x32x32xf32>
    %cst_107 = arith.constant dense<0.000000e+00> : vector<2x32xf32>
    %187 = vector.multi_reduction <add>, %186, %cst_107 [2] : vector<2x32x32xf32> to vector<2x32xf32>
    %c0_108 = arith.constant 0 : index
    %c2_109 = arith.constant 2 : index
    %c0_110 = arith.constant 0 : index
    %188 = vector.load %arg6[%c0_108, %c2_109, %c0_110] : memref<2x8x32xf32, #tpu.memory_space<vmem>>, vector<2x1x32xf32>
    %189 = vector.shape_cast %188 : vector<2x1x32xf32> to vector<2x32xf32>
    %190 = vector.shape_cast %187 : vector<2x32xf32> to vector<2x1x32xf32>
    tpu.vector_store %arg6[%c0_108, %c2_109, %c0_110], %190 {strides = array<i32>} : memref<2x8x32xf32, #tpu.memory_space<vmem>>, vector<2x1x32xf32>,
    %c0_111 = arith.constant 0 : index
    %c3_112 = arith.constant 3 : index
    %c0_113 = arith.constant 0 : index
    %c0_114 = arith.constant 0 : index
    %191 = vector.load %arg4[%c0_111, %c3_112, %c0_113, %c0_114] : memref<2x8x32x32xf32, #tpu.memory_space<vmem>>, vector<2x1x32x32xf32>
    %192 = vector.shape_cast %191 : vector<2x1x32x32xf32> to vector<2x32x32xf32>
    %193 = arith.mulf %192, %181 : vector<2x32x32xf32>
    %c0_115 = arith.constant 0 : index
    %c3_116 = arith.constant 3 : index
    %c0_117 = arith.constant 0 : index
    %c0_118 = arith.constant 0 : index
    %194 = vector.load %arg5[%c0_115, %c3_116, %c0_117, %c0_118] : memref<2x8x32x32xf32, #tpu.memory_space<vmem>>, vector<2x1x32x32xf32>
    %195 = vector.shape_cast %194 : vector<2x1x32x32xf32> to vector<2x32x32xf32>
    %196 = arith.addf %193, %195 : vector<2x32x32xf32>
    %197 = vector.extract_strided_slice %128 {offsets = [0, 3, 0], sizes = [2, 1, 32], strides = [1, 1, 1]} : vector<2x8x32xf32> to vector<2x1x32xf32>
    %198 = vector.shape_cast %197 : vector<2x1x32xf32> to vector<2x32xf32>
    %199 = vector.shape_cast %198 : vector<2x32xf32> to vector<2x1x32xf32>
    %200 = vector.broadcast %199 : vector<2x1x32xf32> to vector<2x32x32xf32>
    %201 = arith.mulf %196, %200 : vector<2x32x32xf32>
    %cst_119 = arith.constant dense<0.000000e+00> : vector<2x32xf32>
    %202 = vector.multi_reduction <add>, %201, %cst_119 [2] : vector<2x32x32xf32> to vector<2x32xf32>
    %c0_120 = arith.constant 0 : index
    %c3_121 = arith.constant 3 : index
    %c0_122 = arith.constant 0 : index
    %203 = vector.load %arg6[%c0_120, %c3_121, %c0_122] : memref<2x8x32xf32, #tpu.memory_space<vmem>>, vector<2x1x32xf32>
    %204 = vector.shape_cast %203 : vector<2x1x32xf32> to vector<2x32xf32>
    %205 = vector.shape_cast %202 : vector<2x32xf32> to vector<2x1x32xf32>
    tpu.vector_store %arg6[%c0_120, %c3_121, %c0_122], %205 {strides = array<i32>} : memref<2x8x32xf32, #tpu.memory_space<vmem>>, vector<2x1x32xf32>,
    %c0_123 = arith.constant 0 : index
    %c4_124 = arith.constant 4 : index
    %c0_125 = arith.constant 0 : index
    %c0_126 = arith.constant 0 : index
    %206 = vector.load %arg4[%c0_123, %c4_124, %c0_125, %c0_126] : memref<2x8x32x32xf32, #tpu.memory_space<vmem>>, vector<2x1x32x32xf32>
    %207 = vector.shape_cast %206 : vector<2x1x32x32xf32> to vector<2x32x32xf32>
    %208 = arith.mulf %207, %196 : vector<2x32x32xf32>
    %c0_127 = arith.constant 0 : index
    %c4_128 = arith.constant 4 : index
    %c0_129 = arith.constant 0 : index
    %c0_130 = arith.constant 0 : index
    %209 = vector.load %arg5[%c0_127, %c4_128, %c0_129, %c0_130] : memref<2x8x32x32xf32, #tpu.memory_space<vmem>>, vector<2x1x32x32xf32>
    %210 = vector.shape_cast %209 : vector<2x1x32x32xf32> to vector<2x32x32xf32>
    %211 = arith.addf %208, %210 : vector<2x32x32xf32>
    %212 = vector.extract_strided_slice %128 {offsets = [0, 4, 0], sizes = [2, 1, 32], strides = [1, 1, 1]} : vector<2x8x32xf32> to vector<2x1x32xf32>
    %213 = vector.shape_cast %212 : vector<2x1x32xf32> to vector<2x32xf32>
    %214 = vector.shape_cast %213 : vector<2x32xf32> to vector<2x1x32xf32>
    %215 = vector.broadcast %214 : vector<2x1x32xf32> to vector<2x32x32xf32>
    %216 = arith.mulf %211, %215 : vector<2x32x32xf32>
    %cst_131 = arith.constant dense<0.000000e+00> : vector<2x32xf32>
    %217 = vector.multi_reduction <add>, %216, %cst_131 [2] : vector<2x32x32xf32> to vector<2x32xf32>
    %c0_132 = arith.constant 0 : index
    %c4_133 = arith.constant 4 : index
    %c0_134 = arith.constant 0 : index
    %218 = vector.load %arg6[%c0_132, %c4_133, %c0_134] : memref<2x8x32xf32, #tpu.memory_space<vmem>>, vector<2x1x32xf32>
    %219 = vector.shape_cast %218 : vector<2x1x32xf32> to vector<2x32xf32>
    %220 = vector.shape_cast %217 : vector<2x32xf32> to vector<2x1x32xf32>
    tpu.vector_store %arg6[%c0_132, %c4_133, %c0_134], %220 {strides = array<i32>} : memref<2x8x32xf32, #tpu.memory_space<vmem>>, vector<2x1x32xf32>,
    %c0_135 = arith.constant 0 : index
    %c5_136 = arith.constant 5 : index
    %c0_137 = arith.constant 0 : index
    %c0_138 = arith.constant 0 : index
    %221 = vector.load %arg4[%c0_135, %c5_136, %c0_137, %c0_138] : memref<2x8x32x32xf32, #tpu.memory_space<vmem>>, vector<2x1x32x32xf32>
    %222 = vector.shape_cast %221 : vector<2x1x32x32xf32> to vector<2x32x32xf32>
    %223 = arith.mulf %222, %211 : vector<2x32x32xf32>
    %c0_139 = arith.constant 0 : index
    %c5_140 = arith.constant 5 : index
    %c0_141 = arith.constant 0 : index
    %c0_142 = arith.constant 0 : index
    %224 = vector.load %arg5[%c0_139, %c5_140, %c0_141, %c0_142] : memref<2x8x32x32xf32, #tpu.memory_space<vmem>>, vector<2x1x32x32xf32>
    %225 = vector.shape_cast %224 : vector<2x1x32x32xf32> to vector<2x32x32xf32>
    %226 = arith.addf %223, %225 : vector<2x32x32xf32>
    %227 = vector.extract_strided_slice %128 {offsets = [0, 5, 0], sizes = [2, 1, 32], strides = [1, 1, 1]} : vector<2x8x32xf32> to vector<2x1x32xf32>
    %228 = vector.shape_cast %227 : vector<2x1x32xf32> to vector<2x32xf32>
    %229 = vector.shape_cast %228 : vector<2x32xf32> to vector<2x1x32xf32>
    %230 = vector.broadcast %229 : vector<2x1x32xf32> to vector<2x32x32xf32>
    %231 = arith.mulf %226, %230 : vector<2x32x32xf32>
    %cst_143 = arith.constant dense<0.000000e+00> : vector<2x32xf32>
    %232 = vector.multi_reduction <add>, %231, %cst_143 [2] : vector<2x32x32xf32> to vector<2x32xf32>
    %c0_144 = arith.constant 0 : index
    %c5_145 = arith.constant 5 : index
    %c0_146 = arith.constant 0 : index
    %233 = vector.load %arg6[%c0_144, %c5_145, %c0_146] : memref<2x8x32xf32, #tpu.memory_space<vmem>>, vector<2x1x32xf32>
    %234 = vector.shape_cast %233 : vector<2x1x32xf32> to vector<2x32xf32>
    %235 = vector.shape_cast %232 : vector<2x32xf32> to vector<2x1x32xf32>
    tpu.vector_store %arg6[%c0_144, %c5_145, %c0_146], %235 {strides = array<i32>} : memref<2x8x32xf32, #tpu.memory_space<vmem>>, vector<2x1x32xf32>,
    %c0_147 = arith.constant 0 : index
    %c6_148 = arith.constant 6 : index
    %c0_149 = arith.constant 0 : index
    %c0_150 = arith.constant 0 : index
    %236 = vector.load %arg4[%c0_147, %c6_148, %c0_149, %c0_150] : memref<2x8x32x32xf32, #tpu.memory_space<vmem>>, vector<2x1x32x32xf32>
    %237 = vector.shape_cast %236 : vector<2x1x32x32xf32> to vector<2x32x32xf32>
    %238 = arith.mulf %237, %226 : vector<2x32x32xf32>
    %c0_151 = arith.constant 0 : index
    %c6_152 = arith.constant 6 : index
    %c0_153 = arith.constant 0 : index
    %c0_154 = arith.constant 0 : index
    %239 = vector.load %arg5[%c0_151, %c6_152, %c0_153, %c0_154] : memref<2x8x32x32xf32, #tpu.memory_space<vmem>>, vector<2x1x32x32xf32>
    %240 = vector.shape_cast %239 : vector<2x1x32x32xf32> to vector<2x32x32xf32>
    %241 = arith.addf %238, %240 : vector<2x32x32xf32>
    %242 = vector.extract_strided_slice %128 {offsets = [0, 6, 0], sizes = [2, 1, 32], strides = [1, 1, 1]} : vector<2x8x32xf32> to vector<2x1x32xf32>
    %243 = vector.shape_cast %242 : vector<2x1x32xf32> to vector<2x32xf32>
    %244 = vector.shape_cast %243 : vector<2x32xf32> to vector<2x1x32xf32>
    %245 = vector.broadcast %244 : vector<2x1x32xf32> to vector<2x32x32xf32>
    %246 = arith.mulf %241, %245 : vector<2x32x32xf32>
    %cst_155 = arith.constant dense<0.000000e+00> : vector<2x32xf32>
    %247 = vector.multi_reduction <add>, %246, %cst_155 [2] : vector<2x32x32xf32> to vector<2x32xf32>
    %c0_156 = arith.constant 0 : index
    %c6_157 = arith.constant 6 : index
    %c0_158 = arith.constant 0 : index
    %248 = vector.load %arg6[%c0_156, %c6_157, %c0_158] : memref<2x8x32xf32, #tpu.memory_space<vmem>>, vector<2x1x32xf32>
    %249 = vector.shape_cast %248 : vector<2x1x32xf32> to vector<2x32xf32>
    %250 = vector.shape_cast %247 : vector<2x32xf32> to vector<2x1x32xf32>
    tpu.vector_store %arg6[%c0_156, %c6_157, %c0_158], %250 {strides = array<i32>} : memref<2x8x32xf32, #tpu.memory_space<vmem>>, vector<2x1x32xf32>,
    %c0_159 = arith.constant 0 : index
    %c7_160 = arith.constant 7 : index
    %c0_161 = arith.constant 0 : index
    %c0_162 = arith.constant 0 : index
    %251 = vector.load %arg4[%c0_159, %c7_160, %c0_161, %c0_162] : memref<2x8x32x32xf32, #tpu.memory_space<vmem>>, vector<2x1x32x32xf32>
    %252 = vector.shape_cast %251 : vector<2x1x32x32xf32> to vector<2x32x32xf32>
    %253 = arith.mulf %252, %241 : vector<2x32x32xf32>
    %c0_163 = arith.constant 0 : index
    %c7_164 = arith.constant 7 : index
    %c0_165 = arith.constant 0 : index
    %c0_166 = arith.constant 0 : index
    %254 = vector.load %arg5[%c0_163, %c7_164, %c0_165, %c0_166] : memref<2x8x32x32xf32, #tpu.memory_space<vmem>>, vector<2x1x32x32xf32>
    %255 = vector.shape_cast %254 : vector<2x1x32x32xf32> to vector<2x32x32xf32>
    %256 = arith.addf %253, %255 : vector<2x32x32xf32>
    %257 = vector.extract_strided_slice %128 {offsets = [0, 7, 0], sizes = [2, 1, 32], strides = [1, 1, 1]} : vector<2x8x32xf32> to vector<2x1x32xf32>
    %258 = vector.shape_cast %257 : vector<2x1x32xf32> to vector<2x32xf32>
    %259 = vector.shape_cast %258 : vector<2x32xf32> to vector<2x1x32xf32>
    %260 = vector.broadcast %259 : vector<2x1x32xf32> to vector<2x32x32xf32>
    %261 = arith.mulf %256, %260 : vector<2x32x32xf32>
    %cst_167 = arith.constant dense<0.000000e+00> : vector<2x32xf32>
    %262 = vector.multi_reduction <add>, %261, %cst_167 [2] : vector<2x32x32xf32> to vector<2x32xf32>
    %c0_168 = arith.constant 0 : index
    %c7_169 = arith.constant 7 : index
    %c0_170 = arith.constant 0 : index
    %263 = vector.load %arg6[%c0_168, %c7_169, %c0_170] : memref<2x8x32xf32, #tpu.memory_space<vmem>>, vector<2x1x32xf32>
    %264 = vector.shape_cast %263 : vector<2x1x32xf32> to vector<2x32xf32>
    %265 = vector.shape_cast %262 : vector<2x32xf32> to vector<2x1x32xf32>
    tpu.vector_store %arg6[%c0_168, %c7_169, %c0_170], %265 {strides = array<i32>} : memref<2x8x32xf32, #tpu.memory_space<vmem>>, vector<2x1x32xf32>,
    %c0_171 = arith.constant 0 : index
    %c70 = arith.constant 70 : index
    %c0_172 = arith.constant 0 : index
    %266 = vector.load %arg1[%c0_171, %c70, %c0_172] : memref<2x96x128xf32, #tpu.memory_space<vmem>>, vector<1x1x32xf32>
    %267 = vector.shape_cast %266 : vector<1x1x32xf32> to vector<32xf32>
    %c0_173 = arith.constant 0 : index
    %c0_174 = arith.constant 0 : index
    %c0_175 = arith.constant 0 : index
    %268 = vector.load %arg6[%c0_173, %c0_174, %c0_175] : memref<2x8x32xf32, #tpu.memory_space<vmem>>, vector<2x8x32xf32>
    %269 = vector.shape_cast %267 : vector<32xf32> to vector<1x1x32xf32>
    %270 = vector.broadcast %269 : vector<1x1x32xf32> to vector<2x8x32xf32>
    %271 = arith.mulf %270, %105 : vector<2x8x32xf32>
    %272 = arith.addf %268, %271 : vector<2x8x32xf32>
    %273 = arith.negf %36 : vector<2x8x32xf32>
    %274 = math.exp %273 : vector<2x8x32xf32>
    %cst_176 = arith.constant 1.000000e+00 : f32
    %275 = vector.broadcast %cst_176 : f32 to vector<2x8x32xf32>
    %276 = arith.addf %275, %274 : vector<2x8x32xf32>
    %277 = arith.divf %275, %276 : vector<2x8x32xf32>
    %278 = arith.mulf %36, %277 : vector<2x8x32xf32>
    %279 = arith.mulf %272, %278 : vector<2x8x32xf32>
    %c0_177 = arith.constant 0 : index
    %c66 = arith.constant 66 : index
    %c0_178 = arith.constant 0 : index
    %280 = vector.load %arg1[%c0_177, %c66, %c0_178] : memref<2x96x128xf32, #tpu.memory_space<vmem>>, vector<1x1x32xf32>
    %281 = vector.shape_cast %280 : vector<1x1x32xf32> to vector<32xf32>
    %282 = vector.shape_cast %281 : vector<32xf32> to vector<1x1x32xf32>
    %283 = vector.broadcast %282 : vector<1x1x32xf32> to vector<2x8x32xf32>
    %284 = arith.mulf %279, %283 : vector<2x8x32xf32>
    %cst_179 = arith.constant dense<0.000000e+00> : vector<2x8xf32>
    %285 = vector.multi_reduction <add>, %284, %cst_179 [2] : vector<2x8x32xf32> to vector<2x8xf32>
    %286 = vector.shape_cast %285 : vector<2x8xf32> to vector<2x8x1xf32>
    %c0_180 = arith.constant 0 : index
    %c67 = arith.constant 67 : index
    %c0_181 = arith.constant 0 : index
    %287 = vector.load %arg1[%c0_180, %c67, %c0_181] : memref<2x96x128xf32, #tpu.memory_space<vmem>>, vector<1x1x32xf32>
    %288 = vector.shape_cast %287 : vector<1x1x32xf32> to vector<32xf32>
    %289 = vector.shape_cast %288 : vector<32xf32> to vector<1x1x32xf32>
    %290 = vector.broadcast %289 : vector<1x1x32xf32> to vector<2x8x32xf32>
    %291 = arith.mulf %279, %290 : vector<2x8x32xf32>
    %cst_182 = arith.constant dense<0.000000e+00> : vector<2x8xf32>
    %292 = vector.multi_reduction <add>, %291, %cst_182 [2] : vector<2x8x32xf32> to vector<2x8xf32>
    %293 = vector.shape_cast %292 : vector<2x8xf32> to vector<2x8x1xf32>
    %294 = tpu.concatenate %286, %293 in 2 : vector<2x8x1xf32>, vector<2x8x1xf32> -> vector<2x8x2xf32>
    %295 = arith.addf %0, %294 : vector<2x8x2xf32>
    %c1_183 = arith.constant 1 : index
    %c71_184 = arith.constant 71 : index
    %c0_185 = arith.constant 0 : index
    %296 = vector.load %arg1[%c1_183, %c71_184, %c0_185] : memref<2x96x128xf32, #tpu.memory_space<vmem>>, vector<1x1x2xf32>
    %297 = vector.shape_cast %296 : vector<1x1x2xf32> to vector<2xf32>
    %298 = arith.mulf %295, %295 : vector<2x8x2xf32>
    %cst_186 = arith.constant dense<0.000000e+00> : vector<2x8xf32>
    %299 = vector.multi_reduction <add>, %298, %cst_186 [2] : vector<2x8x2xf32> to vector<2x8xf32>
    %300 = vector.shape_cast %299 : vector<2x8xf32> to vector<2x8x1xf32>
    %cst_187 = arith.constant 2.000000e+00 : f32
    %301 = vector.broadcast %cst_187 : f32 to vector<2x8x1xf32>
    %302 = arith.divf %300, %301 : vector<2x8x1xf32>
    %cst_188 = arith.constant 9.99999974E-6 : f32
    %303 = vector.broadcast %cst_188 : f32 to vector<2x8x1xf32>
    %304 = arith.addf %302, %303 : vector<2x8x1xf32>
    %305 = math.rsqrt %304 : vector<2x8x1xf32>
    %306 = vector.broadcast %305 : vector<2x8x1xf32> to vector<2x8x2xf32>
    %307 = arith.mulf %295, %306 : vector<2x8x2xf32>
    %308 = vector.shape_cast %297 : vector<2xf32> to vector<1x1x2xf32>
    %309 = vector.broadcast %308 : vector<1x1x2xf32> to vector<2x8x2xf32>
    %310 = arith.mulf %307, %309 : vector<2x8x2xf32>
    %cst_189 = arith.constant 0.000000e+00 : f32
    %311 = vector.broadcast %cst_189 : f32 to vector<2x8x64xf32>
    %c1_190 = arith.constant 1 : index
    %c64_191 = arith.constant 64 : index
    %c0_192 = arith.constant 0 : index
    %312 = vector.load %arg1[%c1_190, %c64_191, %c0_192] : memref<2x96x128xf32, #tpu.memory_space<vmem>>, vector<1x1x64xf32>
    %313 = vector.shape_cast %312 : vector<1x1x64xf32> to vector<64xf32>
    %314 = vector.extract_strided_slice %310 {offsets = [0, 0, 0], sizes = [2, 8, 1], strides = [1, 1, 1]} : vector<2x8x2xf32> to vector<2x8x1xf32>
    %315 = vector.shape_cast %313 : vector<64xf32> to vector<1x1x64xf32>
    %316 = vector.broadcast %314 : vector<2x8x1xf32> to vector<2x8x64xf32>
    %317 = vector.broadcast %315 : vector<1x1x64xf32> to vector<2x8x64xf32>
    %318 = arith.mulf %316, %317 : vector<2x8x64xf32>
    %319 = arith.addf %311, %318 : vector<2x8x64xf32>
    %c1_193 = arith.constant 1 : index
    %c65_194 = arith.constant 65 : index
    %c0_195 = arith.constant 0 : index
    %320 = vector.load %arg1[%c1_193, %c65_194, %c0_195] : memref<2x96x128xf32, #tpu.memory_space<vmem>>, vector<1x1x64xf32>
    %321 = vector.shape_cast %320 : vector<1x1x64xf32> to vector<64xf32>
    %322 = vector.extract_strided_slice %310 {offsets = [0, 0, 1], sizes = [2, 8, 1], strides = [1, 1, 1]} : vector<2x8x2xf32> to vector<2x8x1xf32>
    %323 = vector.shape_cast %321 : vector<64xf32> to vector<1x1x64xf32>
    %324 = vector.broadcast %322 : vector<2x8x1xf32> to vector<2x8x64xf32>
    %325 = vector.broadcast %323 : vector<1x1x64xf32> to vector<2x8x64xf32>
    %326 = arith.mulf %324, %325 : vector<2x8x64xf32>
    %327 = arith.addf %319, %326 : vector<2x8x64xf32>
    %328 = vector.extract_strided_slice %327 {offsets = [0, 0, 0], sizes = [2, 8, 32], strides = [1, 1, 1]} : vector<2x8x64xf32> to vector<2x8x32xf32>
    %329 = vector.extract_strided_slice %327 {offsets = [0, 0, 32], sizes = [2, 8, 32], strides = [1, 1, 1]} : vector<2x8x64xf32> to vector<2x8x32xf32>
    %c0_196 = arith.constant 0 : index
    %c7_197 = arith.constant 7 : index
    %c0_198 = arith.constant 0 : index
    %330 = vector.load %arg3[%c0_196, %c7_197, %c0_198] : memref<2x15x32xf32, #tpu.memory_space<vmem>>, vector<2x8x32xf32>
    tpu.vector_store %arg3[%c0_196, %c7_197, %c0_198], %328 {strides = array<i32>} : memref<2x15x32xf32, #tpu.memory_space<vmem>>, vector<2x8x32xf32>,
    %cst_199 = arith.constant 0.000000e+00 : f32
    %331 = vector.broadcast %cst_199 : f32 to vector<2x8x32xf32>
    %c1_200 = arith.constant 1 : index
    %c72_201 = arith.constant 72 : index
    %c0_202 = arith.constant 0 : index
    %332 = vector.load %arg1[%c1_200, %c72_201, %c0_202] : memref<2x96x128xf32, #tpu.memory_space<vmem>>, vector<1x1x32xf32>
    %333 = vector.shape_cast %332 : vector<1x1x32xf32> to vector<32xf32>
    %334 = vector.shape_cast %333 : vector<32xf32> to vector<1x1x32xf32>
    %c0_203 = arith.constant 0 : index
    %c0_204 = arith.constant 0 : index
    %c0_205 = arith.constant 0 : index
    %335 = vector.load %arg3[%c0_203, %c0_204, %c0_205] : memref<2x15x32xf32, #tpu.memory_space<vmem>>, vector<2x8x32xf32>
    %336 = vector.broadcast %334 : vector<1x1x32xf32> to vector<2x8x32xf32>
    %337 = arith.mulf %336, %335 : vector<2x8x32xf32>
    %338 = arith.addf %331, %337 : vector<2x8x32xf32>
    %c1_206 = arith.constant 1 : index
    %c73_207 = arith.constant 73 : index
    %c0_208 = arith.constant 0 : index
    %339 = vector.load %arg1[%c1_206, %c73_207, %c0_208] : memref<2x96x128xf32, #tpu.memory_space<vmem>>, vector<1x1x32xf32>
    %340 = vector.shape_cast %339 : vector<1x1x32xf32> to vector<32xf32>
    %341 = vector.shape_cast %340 : vector<32xf32> to vector<1x1x32xf32>
    %c0_209 = arith.constant 0 : index
    %c1_210 = arith.constant 1 : index
    %c0_211 = arith.constant 0 : index
    %342 = vector.load %arg3[%c0_209, %c1_210, %c0_211] : memref<2x15x32xf32, #tpu.memory_space<vmem>>, vector<2x8x32xf32>
    %343 = vector.broadcast %341 : vector<1x1x32xf32> to vector<2x8x32xf32>
    %344 = arith.mulf %343, %342 : vector<2x8x32xf32>
    %345 = arith.addf %338, %344 : vector<2x8x32xf32>
    %c1_212 = arith.constant 1 : index
    %c74_213 = arith.constant 74 : index
    %c0_214 = arith.constant 0 : index
    %346 = vector.load %arg1[%c1_212, %c74_213, %c0_214] : memref<2x96x128xf32, #tpu.memory_space<vmem>>, vector<1x1x32xf32>
    %347 = vector.shape_cast %346 : vector<1x1x32xf32> to vector<32xf32>
    %348 = vector.shape_cast %347 : vector<32xf32> to vector<1x1x32xf32>
    %c0_215 = arith.constant 0 : index
    %c2_216 = arith.constant 2 : index
    %c0_217 = arith.constant 0 : index
    %349 = vector.load %arg3[%c0_215, %c2_216, %c0_217] : memref<2x15x32xf32, #tpu.memory_space<vmem>>, vector<2x8x32xf32>
    %350 = vector.broadcast %348 : vector<1x1x32xf32> to vector<2x8x32xf32>
    %351 = arith.mulf %350, %349 : vector<2x8x32xf32>
    %352 = arith.addf %345, %351 : vector<2x8x32xf32>
    %c1_218 = arith.constant 1 : index
    %c75_219 = arith.constant 75 : index
    %c0_220 = arith.constant 0 : index
    %353 = vector.load %arg1[%c1_218, %c75_219, %c0_220] : memref<2x96x128xf32, #tpu.memory_space<vmem>>, vector<1x1x32xf32>
    %354 = vector.shape_cast %353 : vector<1x1x32xf32> to vector<32xf32>
    %355 = vector.shape_cast %354 : vector<32xf32> to vector<1x1x32xf32>
    %c0_221 = arith.constant 0 : index
    %c3_222 = arith.constant 3 : index
    %c0_223 = arith.constant 0 : index
    %356 = vector.load %arg3[%c0_221, %c3_222, %c0_223] : memref<2x15x32xf32, #tpu.memory_space<vmem>>, vector<2x8x32xf32>
    %357 = vector.broadcast %355 : vector<1x1x32xf32> to vector<2x8x32xf32>
    %358 = arith.mulf %357, %356 : vector<2x8x32xf32>
    %359 = arith.addf %352, %358 : vector<2x8x32xf32>
    %c1_224 = arith.constant 1 : index
    %c76_225 = arith.constant 76 : index
    %c0_226 = arith.constant 0 : index
    %360 = vector.load %arg1[%c1_224, %c76_225, %c0_226] : memref<2x96x128xf32, #tpu.memory_space<vmem>>, vector<1x1x32xf32>
    %361 = vector.shape_cast %360 : vector<1x1x32xf32> to vector<32xf32>
    %362 = vector.shape_cast %361 : vector<32xf32> to vector<1x1x32xf32>
    %c0_227 = arith.constant 0 : index
    %c4_228 = arith.constant 4 : index
    %c0_229 = arith.constant 0 : index
    %363 = vector.load %arg3[%c0_227, %c4_228, %c0_229] : memref<2x15x32xf32, #tpu.memory_space<vmem>>, vector<2x8x32xf32>
    %364 = vector.broadcast %362 : vector<1x1x32xf32> to vector<2x8x32xf32>
    %365 = arith.mulf %364, %363 : vector<2x8x32xf32>
    %366 = arith.addf %359, %365 : vector<2x8x32xf32>
    %c1_230 = arith.constant 1 : index
    %c77_231 = arith.constant 77 : index
    %c0_232 = arith.constant 0 : index
    %367 = vector.load %arg1[%c1_230, %c77_231, %c0_232] : memref<2x96x128xf32, #tpu.memory_space<vmem>>, vector<1x1x32xf32>
    %368 = vector.shape_cast %367 : vector<1x1x32xf32> to vector<32xf32>
    %369 = vector.shape_cast %368 : vector<32xf32> to vector<1x1x32xf32>
    %c0_233 = arith.constant 0 : index
    %c5_234 = arith.constant 5 : index
    %c0_235 = arith.constant 0 : index
    %370 = vector.load %arg3[%c0_233, %c5_234, %c0_235] : memref<2x15x32xf32, #tpu.memory_space<vmem>>, vector<2x8x32xf32>
    %371 = vector.broadcast %369 : vector<1x1x32xf32> to vector<2x8x32xf32>
    %372 = arith.mulf %371, %370 : vector<2x8x32xf32>
    %373 = arith.addf %366, %372 : vector<2x8x32xf32>
    %c1_236 = arith.constant 1 : index
    %c78_237 = arith.constant 78 : index
    %c0_238 = arith.constant 0 : index
    %374 = vector.load %arg1[%c1_236, %c78_237, %c0_238] : memref<2x96x128xf32, #tpu.memory_space<vmem>>, vector<1x1x32xf32>
    %375 = vector.shape_cast %374 : vector<1x1x32xf32> to vector<32xf32>
    %376 = vector.shape_cast %375 : vector<32xf32> to vector<1x1x32xf32>
    %c0_239 = arith.constant 0 : index
    %c6_240 = arith.constant 6 : index
    %c0_241 = arith.constant 0 : index
    %377 = vector.load %arg3[%c0_239, %c6_240, %c0_241] : memref<2x15x32xf32, #tpu.memory_space<vmem>>, vector<2x8x32xf32>
    %378 = vector.broadcast %376 : vector<1x1x32xf32> to vector<2x8x32xf32>
    %379 = arith.mulf %378, %377 : vector<2x8x32xf32>
    %380 = arith.addf %373, %379 : vector<2x8x32xf32>
    %c1_242 = arith.constant 1 : index
    %c79_243 = arith.constant 79 : index
    %c0_244 = arith.constant 0 : index
    %381 = vector.load %arg1[%c1_242, %c79_243, %c0_244] : memref<2x96x128xf32, #tpu.memory_space<vmem>>, vector<1x1x32xf32>
    %382 = vector.shape_cast %381 : vector<1x1x32xf32> to vector<32xf32>
    %383 = vector.shape_cast %382 : vector<32xf32> to vector<1x1x32xf32>
    %c0_245 = arith.constant 0 : index
    %c7_246 = arith.constant 7 : index
    %c0_247 = arith.constant 0 : index
    %384 = vector.load %arg3[%c0_245, %c7_246, %c0_247] : memref<2x15x32xf32, #tpu.memory_space<vmem>>, vector<2x8x32xf32>
    %385 = vector.broadcast %383 : vector<1x1x32xf32> to vector<2x8x32xf32>
    %386 = arith.mulf %385, %384 : vector<2x8x32xf32>
    %387 = arith.addf %380, %386 : vector<2x8x32xf32>
    %c1_248 = arith.constant 1 : index
    %c68_249 = arith.constant 68 : index
    %c0_250 = arith.constant 0 : index
    %388 = vector.load %arg1[%c1_248, %c68_249, %c0_250] : memref<2x96x128xf32, #tpu.memory_space<vmem>>, vector<1x1x32xf32>
    %389 = vector.shape_cast %388 : vector<1x1x32xf32> to vector<32xf32>
    %390 = vector.shape_cast %389 : vector<32xf32> to vector<1x1x32xf32>
    %391 = vector.broadcast %390 : vector<1x1x32xf32> to vector<2x8x32xf32>
    %392 = arith.addf %387, %391 : vector<2x8x32xf32>
    %393 = arith.negf %392 : vector<2x8x32xf32>
    %394 = math.exp %393 : vector<2x8x32xf32>
    %cst_251 = arith.constant 1.000000e+00 : f32
    %395 = vector.broadcast %cst_251 : f32 to vector<2x8x32xf32>
    %396 = arith.addf %395, %394 : vector<2x8x32xf32>
    %397 = arith.divf %395, %396 : vector<2x8x32xf32>
    %398 = arith.mulf %392, %397 : vector<2x8x32xf32>
    %c1_252 = arith.constant 1 : index
    %c0_253 = arith.constant 0 : index
    %c0_254 = arith.constant 0 : index
    %399 = vector.load %arg1[%c1_252, %c0_253, %c0_254] : memref<2x96x128xf32, #tpu.memory_space<vmem>>, vector<1x32x128xf32>
    %400 = vector.shape_cast %399 : vector<1x32x128xf32> to vector<32x128xf32>
    %401 = vector.shape_cast %398 : vector<2x8x32xf32> to vector<16x32xf32>
    %cst_255 = arith.constant dense<0.000000e+00> : vector<16x128xf32>
    %402 = tpu.matmul %401, %400, %cst_255 {dimension_numbers = #tpu.dot_dimension_numbers<[1], [0], [0], [1], [0, 0, 1, 1], [], []>} : vector<16x32xf32>, vector<32x128xf32>, vector<16x128xf32> -> vector<16x128xf32>
    %403 = vector.shape_cast %402 : vector<16x128xf32> to vector<2x8x128xf32>
    %c1_256 = arith.constant 1 : index
    %c69_257 = arith.constant 69 : index
    %c0_258 = arith.constant 0 : index
    %404 = vector.load %arg1[%c1_256, %c69_257, %c0_258] : memref<2x96x128xf32, #tpu.memory_space<vmem>>, vector<1x1x32xf32>
    %405 = vector.shape_cast %404 : vector<1x1x32xf32> to vector<32xf32>
    %406 = vector.extract_strided_slice %403 {offsets = [0, 0, 0], sizes = [2, 8, 32], strides = [1, 1, 1]} : vector<2x8x128xf32> to vector<2x8x32xf32>
    %407 = vector.shape_cast %405 : vector<32xf32> to vector<1x1x32xf32>
    %408 = vector.broadcast %407 : vector<1x1x32xf32> to vector<2x8x32xf32>
    %409 = arith.addf %406, %408 : vector<2x8x32xf32>
    %cst_259 = arith.constant 0.000000e+00 : f32
    %410 = vector.broadcast %cst_259 : f32 to vector<2x8x32xf32>
    %411 = arith.maximumf %409, %410 : vector<2x8x32xf32>
    %412 = math.absf %409 : vector<2x8x32xf32>
    %cst_260 = arith.constant 0.000000e+00 : f32
    %413 = vector.broadcast %cst_260 : f32 to vector<2x8x32xf32>
    %414 = arith.subf %413, %412 : vector<2x8x32xf32>
    %415 = math.exp %414 : vector<2x8x32xf32>
    %cst_261 = arith.constant 1.000000e+00 : f32
    %416 = vector.broadcast %cst_261 : f32 to vector<2x8x32xf32>
    %417 = arith.addf %416, %415 : vector<2x8x32xf32>
    %418 = math.log %417 : vector<2x8x32xf32>
    %419 = arith.addf %411, %418 : vector<2x8x32xf32>
    %420 = vector.extract_strided_slice %403 {offsets = [0, 0, 32], sizes = [2, 8, 32], strides = [1, 1, 1]} : vector<2x8x128xf32> to vector<2x8x32xf32>
    %421 = vector.extract_strided_slice %403 {offsets = [0, 0, 64], sizes = [2, 8, 32], strides = [1, 1, 1]} : vector<2x8x128xf32> to vector<2x8x32xf32>
    %c1_262 = arith.constant 1 : index
    %c32_263 = arith.constant 32 : index
    %c0_264 = arith.constant 0 : index
    %422 = vector.load %arg1[%c1_262, %c32_263, %c0_264] : memref<2x96x128xf32, #tpu.memory_space<vmem>>, vector<1x32x32xf32>
    %423 = vector.shape_cast %422 : vector<1x32x32xf32> to vector<32x32xf32>
    %424 = vector.shape_cast %419 : vector<2x8x32xf32> to vector<2x8x32x1xf32>
    %425 = vector.shape_cast %423 : vector<32x32xf32> to vector<1x1x32x32xf32>
    %426 = vector.broadcast %424 : vector<2x8x32x1xf32> to vector<2x8x32x32xf32>
    %427 = vector.broadcast %425 : vector<1x1x32x32xf32> to vector<2x8x32x32xf32>
    %428 = arith.mulf %426, %427 : vector<2x8x32x32xf32>
    %429 = math.exp %428 : vector<2x8x32x32xf32>
    %c0_265 = arith.constant 0 : index
    %c0_266 = arith.constant 0 : index
    %c0_267 = arith.constant 0 : index
    %c0_268 = arith.constant 0 : index
    %430 = vector.load %arg4[%c0_265, %c0_266, %c0_267, %c0_268] : memref<2x8x32x32xf32, #tpu.memory_space<vmem>>, vector<2x8x32x32xf32>
    tpu.vector_store %arg4[%c0_265, %c0_266, %c0_267, %c0_268], %429 {strides = array<i32>} : memref<2x8x32x32xf32, #tpu.memory_space<vmem>>, vector<2x8x32x32xf32>,
    %431 = arith.mulf %419, %398 : vector<2x8x32xf32>
    %432 = vector.shape_cast %431 : vector<2x8x32xf32> to vector<2x8x32x1xf32>
    %433 = vector.shape_cast %420 : vector<2x8x32xf32> to vector<2x8x1x32xf32>
    %434 = vector.broadcast %432 : vector<2x8x32x1xf32> to vector<2x8x32x32xf32>
    %435 = vector.broadcast %433 : vector<2x8x1x32xf32> to vector<2x8x32x32xf32>
    %436 = arith.mulf %434, %435 : vector<2x8x32x32xf32>
    %c0_269 = arith.constant 0 : index
    %c0_270 = arith.constant 0 : index
    %c0_271 = arith.constant 0 : index
    %c0_272 = arith.constant 0 : index
    %437 = vector.load %arg5[%c0_269, %c0_270, %c0_271, %c0_272] : memref<2x8x32x32xf32, #tpu.memory_space<vmem>>, vector<2x8x32x32xf32>
    tpu.vector_store %arg5[%c0_269, %c0_270, %c0_271, %c0_272], %436 {strides = array<i32>} : memref<2x8x32x32xf32, #tpu.memory_space<vmem>>, vector<2x8x32x32xf32>,
    %cst_273 = arith.constant 0.000000e+00 : f32
    %438 = vector.broadcast %cst_273 : f32 to vector<2x32x32xf32>
    %c0_274 = arith.constant 0 : index
    %c0_275 = arith.constant 0 : index
    %c0_276 = arith.constant 0 : index
    %c0_277 = arith.constant 0 : index
    %439 = vector.load %arg4[%c0_274, %c0_275, %c0_276, %c0_277] : memref<2x8x32x32xf32, #tpu.memory_space<vmem>>, vector<2x1x32x32xf32>
    %440 = vector.shape_cast %439 : vector<2x1x32x32xf32> to vector<2x32x32xf32>
    %441 = arith.mulf %440, %438 : vector<2x32x32xf32>
    %c0_278 = arith.constant 0 : index
    %c0_279 = arith.constant 0 : index
    %c0_280 = arith.constant 0 : index
    %c0_281 = arith.constant 0 : index
    %442 = vector.load %arg5[%c0_278, %c0_279, %c0_280, %c0_281] : memref<2x8x32x32xf32, #tpu.memory_space<vmem>>, vector<2x1x32x32xf32>
    %443 = vector.shape_cast %442 : vector<2x1x32x32xf32> to vector<2x32x32xf32>
    %444 = arith.addf %441, %443 : vector<2x32x32xf32>
    %445 = vector.extract_strided_slice %421 {offsets = [0, 0, 0], sizes = [2, 1, 32], strides = [1, 1, 1]} : vector<2x8x32xf32> to vector<2x1x32xf32>
    %446 = vector.shape_cast %445 : vector<2x1x32xf32> to vector<2x32xf32>
    %447 = vector.shape_cast %446 : vector<2x32xf32> to vector<2x1x32xf32>
    %448 = vector.broadcast %447 : vector<2x1x32xf32> to vector<2x32x32xf32>
    %449 = arith.mulf %444, %448 : vector<2x32x32xf32>
    %cst_282 = arith.constant dense<0.000000e+00> : vector<2x32xf32>
    %450 = vector.multi_reduction <add>, %449, %cst_282 [2] : vector<2x32x32xf32> to vector<2x32xf32>
    %c0_283 = arith.constant 0 : index
    %c0_284 = arith.constant 0 : index
    %c0_285 = arith.constant 0 : index
    %451 = vector.load %arg6[%c0_283, %c0_284, %c0_285] : memref<2x8x32xf32, #tpu.memory_space<vmem>>, vector<2x1x32xf32>
    %452 = vector.shape_cast %451 : vector<2x1x32xf32> to vector<2x32xf32>
    %453 = vector.shape_cast %450 : vector<2x32xf32> to vector<2x1x32xf32>
    tpu.vector_store %arg6[%c0_283, %c0_284, %c0_285], %453 {strides = array<i32>} : memref<2x8x32xf32, #tpu.memory_space<vmem>>, vector<2x1x32xf32>,
    %c0_286 = arith.constant 0 : index
    %c1_287 = arith.constant 1 : index
    %c0_288 = arith.constant 0 : index
    %c0_289 = arith.constant 0 : index
    %454 = vector.load %arg4[%c0_286, %c1_287, %c0_288, %c0_289] : memref<2x8x32x32xf32, #tpu.memory_space<vmem>>, vector<2x1x32x32xf32>
    %455 = vector.shape_cast %454 : vector<2x1x32x32xf32> to vector<2x32x32xf32>
    %456 = arith.mulf %455, %444 : vector<2x32x32xf32>
    %c0_290 = arith.constant 0 : index
    %c1_291 = arith.constant 1 : index
    %c0_292 = arith.constant 0 : index
    %c0_293 = arith.constant 0 : index
    %457 = vector.load %arg5[%c0_290, %c1_291, %c0_292, %c0_293] : memref<2x8x32x32xf32, #tpu.memory_space<vmem>>, vector<2x1x32x32xf32>
    %458 = vector.shape_cast %457 : vector<2x1x32x32xf32> to vector<2x32x32xf32>
    %459 = arith.addf %456, %458 : vector<2x32x32xf32>
    %460 = vector.extract_strided_slice %421 {offsets = [0, 1, 0], sizes = [2, 1, 32], strides = [1, 1, 1]} : vector<2x8x32xf32> to vector<2x1x32xf32>
    %461 = vector.shape_cast %460 : vector<2x1x32xf32> to vector<2x32xf32>
    %462 = vector.shape_cast %461 : vector<2x32xf32> to vector<2x1x32xf32>
    %463 = vector.broadcast %462 : vector<2x1x32xf32> to vector<2x32x32xf32>
    %464 = arith.mulf %459, %463 : vector<2x32x32xf32>
    %cst_294 = arith.constant dense<0.000000e+00> : vector<2x32xf32>
    %465 = vector.multi_reduction <add>, %464, %cst_294 [2] : vector<2x32x32xf32> to vector<2x32xf32>
    %c0_295 = arith.constant 0 : index
    %c1_296 = arith.constant 1 : index
    %c0_297 = arith.constant 0 : index
    %466 = vector.load %arg6[%c0_295, %c1_296, %c0_297] : memref<2x8x32xf32, #tpu.memory_space<vmem>>, vector<2x1x32xf32>
    %467 = vector.shape_cast %466 : vector<2x1x32xf32> to vector<2x32xf32>
    %468 = vector.shape_cast %465 : vector<2x32xf32> to vector<2x1x32xf32>
    tpu.vector_store %arg6[%c0_295, %c1_296, %c0_297], %468 {strides = array<i32>} : memref<2x8x32xf32, #tpu.memory_space<vmem>>, vector<2x1x32xf32>,
    %c0_298 = arith.constant 0 : index
    %c2_299 = arith.constant 2 : index
    %c0_300 = arith.constant 0 : index
    %c0_301 = arith.constant 0 : index
    %469 = vector.load %arg4[%c0_298, %c2_299, %c0_300, %c0_301] : memref<2x8x32x32xf32, #tpu.memory_space<vmem>>, vector<2x1x32x32xf32>
    %470 = vector.shape_cast %469 : vector<2x1x32x32xf32> to vector<2x32x32xf32>
    %471 = arith.mulf %470, %459 : vector<2x32x32xf32>
    %c0_302 = arith.constant 0 : index
    %c2_303 = arith.constant 2 : index
    %c0_304 = arith.constant 0 : index
    %c0_305 = arith.constant 0 : index
    %472 = vector.load %arg5[%c0_302, %c2_303, %c0_304, %c0_305] : memref<2x8x32x32xf32, #tpu.memory_space<vmem>>, vector<2x1x32x32xf32>
    %473 = vector.shape_cast %472 : vector<2x1x32x32xf32> to vector<2x32x32xf32>
    %474 = arith.addf %471, %473 : vector<2x32x32xf32>
    %475 = vector.extract_strided_slice %421 {offsets = [0, 2, 0], sizes = [2, 1, 32], strides = [1, 1, 1]} : vector<2x8x32xf32> to vector<2x1x32xf32>
    %476 = vector.shape_cast %475 : vector<2x1x32xf32> to vector<2x32xf32>
    %477 = vector.shape_cast %476 : vector<2x32xf32> to vector<2x1x32xf32>
    %478 = vector.broadcast %477 : vector<2x1x32xf32> to vector<2x32x32xf32>
    %479 = arith.mulf %474, %478 : vector<2x32x32xf32>
    %cst_306 = arith.constant dense<0.000000e+00> : vector<2x32xf32>
    %480 = vector.multi_reduction <add>, %479, %cst_306 [2] : vector<2x32x32xf32> to vector<2x32xf32>
    %c0_307 = arith.constant 0 : index
    %c2_308 = arith.constant 2 : index
    %c0_309 = arith.constant 0 : index
    %481 = vector.load %arg6[%c0_307, %c2_308, %c0_309] : memref<2x8x32xf32, #tpu.memory_space<vmem>>, vector<2x1x32xf32>
    %482 = vector.shape_cast %481 : vector<2x1x32xf32> to vector<2x32xf32>
    %483 = vector.shape_cast %480 : vector<2x32xf32> to vector<2x1x32xf32>
    tpu.vector_store %arg6[%c0_307, %c2_308, %c0_309], %483 {strides = array<i32>} : memref<2x8x32xf32, #tpu.memory_space<vmem>>, vector<2x1x32xf32>,
    %c0_310 = arith.constant 0 : index
    %c3_311 = arith.constant 3 : index
    %c0_312 = arith.constant 0 : index
    %c0_313 = arith.constant 0 : index
    %484 = vector.load %arg4[%c0_310, %c3_311, %c0_312, %c0_313] : memref<2x8x32x32xf32, #tpu.memory_space<vmem>>, vector<2x1x32x32xf32>
    %485 = vector.shape_cast %484 : vector<2x1x32x32xf32> to vector<2x32x32xf32>
    %486 = arith.mulf %485, %474 : vector<2x32x32xf32>
    %c0_314 = arith.constant 0 : index
    %c3_315 = arith.constant 3 : index
    %c0_316 = arith.constant 0 : index
    %c0_317 = arith.constant 0 : index
    %487 = vector.load %arg5[%c0_314, %c3_315, %c0_316, %c0_317] : memref<2x8x32x32xf32, #tpu.memory_space<vmem>>, vector<2x1x32x32xf32>
    %488 = vector.shape_cast %487 : vector<2x1x32x32xf32> to vector<2x32x32xf32>
    %489 = arith.addf %486, %488 : vector<2x32x32xf32>
    %490 = vector.extract_strided_slice %421 {offsets = [0, 3, 0], sizes = [2, 1, 32], strides = [1, 1, 1]} : vector<2x8x32xf32> to vector<2x1x32xf32>
    %491 = vector.shape_cast %490 : vector<2x1x32xf32> to vector<2x32xf32>
    %492 = vector.shape_cast %491 : vector<2x32xf32> to vector<2x1x32xf32>
    %493 = vector.broadcast %492 : vector<2x1x32xf32> to vector<2x32x32xf32>
    %494 = arith.mulf %489, %493 : vector<2x32x32xf32>
    %cst_318 = arith.constant dense<0.000000e+00> : vector<2x32xf32>
    %495 = vector.multi_reduction <add>, %494, %cst_318 [2] : vector<2x32x32xf32> to vector<2x32xf32>
    %c0_319 = arith.constant 0 : index
    %c3_320 = arith.constant 3 : index
    %c0_321 = arith.constant 0 : index
    %496 = vector.load %arg6[%c0_319, %c3_320, %c0_321] : memref<2x8x32xf32, #tpu.memory_space<vmem>>, vector<2x1x32xf32>
    %497 = vector.shape_cast %496 : vector<2x1x32xf32> to vector<2x32xf32>
    %498 = vector.shape_cast %495 : vector<2x32xf32> to vector<2x1x32xf32>
    tpu.vector_store %arg6[%c0_319, %c3_320, %c0_321], %498 {strides = array<i32>} : memref<2x8x32xf32, #tpu.memory_space<vmem>>, vector<2x1x32xf32>,
    %c0_322 = arith.constant 0 : index
    %c4_323 = arith.constant 4 : index
    %c0_324 = arith.constant 0 : index
    %c0_325 = arith.constant 0 : index
    %499 = vector.load %arg4[%c0_322, %c4_323, %c0_324, %c0_325] : memref<2x8x32x32xf32, #tpu.memory_space<vmem>>, vector<2x1x32x32xf32>
    %500 = vector.shape_cast %499 : vector<2x1x32x32xf32> to vector<2x32x32xf32>
    %501 = arith.mulf %500, %489 : vector<2x32x32xf32>
    %c0_326 = arith.constant 0 : index
    %c4_327 = arith.constant 4 : index
    %c0_328 = arith.constant 0 : index
    %c0_329 = arith.constant 0 : index
    %502 = vector.load %arg5[%c0_326, %c4_327, %c0_328, %c0_329] : memref<2x8x32x32xf32, #tpu.memory_space<vmem>>, vector<2x1x32x32xf32>
    %503 = vector.shape_cast %502 : vector<2x1x32x32xf32> to vector<2x32x32xf32>
    %504 = arith.addf %501, %503 : vector<2x32x32xf32>
    %505 = vector.extract_strided_slice %421 {offsets = [0, 4, 0], sizes = [2, 1, 32], strides = [1, 1, 1]} : vector<2x8x32xf32> to vector<2x1x32xf32>
    %506 = vector.shape_cast %505 : vector<2x1x32xf32> to vector<2x32xf32>
    %507 = vector.shape_cast %506 : vector<2x32xf32> to vector<2x1x32xf32>
    %508 = vector.broadcast %507 : vector<2x1x32xf32> to vector<2x32x32xf32>
    %509 = arith.mulf %504, %508 : vector<2x32x32xf32>
    %cst_330 = arith.constant dense<0.000000e+00> : vector<2x32xf32>
    %510 = vector.multi_reduction <add>, %509, %cst_330 [2] : vector<2x32x32xf32> to vector<2x32xf32>
    %c0_331 = arith.constant 0 : index
    %c4_332 = arith.constant 4 : index
    %c0_333 = arith.constant 0 : index
    %511 = vector.load %arg6[%c0_331, %c4_332, %c0_333] : memref<2x8x32xf32, #tpu.memory_space<vmem>>, vector<2x1x32xf32>
    %512 = vector.shape_cast %511 : vector<2x1x32xf32> to vector<2x32xf32>
    %513 = vector.shape_cast %510 : vector<2x32xf32> to vector<2x1x32xf32>
    tpu.vector_store %arg6[%c0_331, %c4_332, %c0_333], %513 {strides = array<i32>} : memref<2x8x32xf32, #tpu.memory_space<vmem>>, vector<2x1x32xf32>,
    %c0_334 = arith.constant 0 : index
    %c5_335 = arith.constant 5 : index
    %c0_336 = arith.constant 0 : index
    %c0_337 = arith.constant 0 : index
    %514 = vector.load %arg4[%c0_334, %c5_335, %c0_336, %c0_337] : memref<2x8x32x32xf32, #tpu.memory_space<vmem>>, vector<2x1x32x32xf32>
    %515 = vector.shape_cast %514 : vector<2x1x32x32xf32> to vector<2x32x32xf32>
    %516 = arith.mulf %515, %504 : vector<2x32x32xf32>
    %c0_338 = arith.constant 0 : index
    %c5_339 = arith.constant 5 : index
    %c0_340 = arith.constant 0 : index
    %c0_341 = arith.constant 0 : index
    %517 = vector.load %arg5[%c0_338, %c5_339, %c0_340, %c0_341] : memref<2x8x32x32xf32, #tpu.memory_space<vmem>>, vector<2x1x32x32xf32>
    %518 = vector.shape_cast %517 : vector<2x1x32x32xf32> to vector<2x32x32xf32>
    %519 = arith.addf %516, %518 : vector<2x32x32xf32>
    %520 = vector.extract_strided_slice %421 {offsets = [0, 5, 0], sizes = [2, 1, 32], strides = [1, 1, 1]} : vector<2x8x32xf32> to vector<2x1x32xf32>
    %521 = vector.shape_cast %520 : vector<2x1x32xf32> to vector<2x32xf32>
    %522 = vector.shape_cast %521 : vector<2x32xf32> to vector<2x1x32xf32>
    %523 = vector.broadcast %522 : vector<2x1x32xf32> to vector<2x32x32xf32>
    %524 = arith.mulf %519, %523 : vector<2x32x32xf32>
    %cst_342 = arith.constant dense<0.000000e+00> : vector<2x32xf32>
    %525 = vector.multi_reduction <add>, %524, %cst_342 [2] : vector<2x32x32xf32> to vector<2x32xf32>
    %c0_343 = arith.constant 0 : index
    %c5_344 = arith.constant 5 : index
    %c0_345 = arith.constant 0 : index
    %526 = vector.load %arg6[%c0_343, %c5_344, %c0_345] : memref<2x8x32xf32, #tpu.memory_space<vmem>>, vector<2x1x32xf32>
    %527 = vector.shape_cast %526 : vector<2x1x32xf32> to vector<2x32xf32>
    %528 = vector.shape_cast %525 : vector<2x32xf32> to vector<2x1x32xf32>
    tpu.vector_store %arg6[%c0_343, %c5_344, %c0_345], %528 {strides = array<i32>} : memref<2x8x32xf32, #tpu.memory_space<vmem>>, vector<2x1x32xf32>,
    %c0_346 = arith.constant 0 : index
    %c6_347 = arith.constant 6 : index
    %c0_348 = arith.constant 0 : index
    %c0_349 = arith.constant 0 : index
    %529 = vector.load %arg4[%c0_346, %c6_347, %c0_348, %c0_349] : memref<2x8x32x32xf32, #tpu.memory_space<vmem>>, vector<2x1x32x32xf32>
    %530 = vector.shape_cast %529 : vector<2x1x32x32xf32> to vector<2x32x32xf32>
    %531 = arith.mulf %530, %519 : vector<2x32x32xf32>
    %c0_350 = arith.constant 0 : index
    %c6_351 = arith.constant 6 : index
    %c0_352 = arith.constant 0 : index
    %c0_353 = arith.constant 0 : index
    %532 = vector.load %arg5[%c0_350, %c6_351, %c0_352, %c0_353] : memref<2x8x32x32xf32, #tpu.memory_space<vmem>>, vector<2x1x32x32xf32>
    %533 = vector.shape_cast %532 : vector<2x1x32x32xf32> to vector<2x32x32xf32>
    %534 = arith.addf %531, %533 : vector<2x32x32xf32>
    %535 = vector.extract_strided_slice %421 {offsets = [0, 6, 0], sizes = [2, 1, 32], strides = [1, 1, 1]} : vector<2x8x32xf32> to vector<2x1x32xf32>
    %536 = vector.shape_cast %535 : vector<2x1x32xf32> to vector<2x32xf32>
    %537 = vector.shape_cast %536 : vector<2x32xf32> to vector<2x1x32xf32>
    %538 = vector.broadcast %537 : vector<2x1x32xf32> to vector<2x32x32xf32>
    %539 = arith.mulf %534, %538 : vector<2x32x32xf32>
    %cst_354 = arith.constant dense<0.000000e+00> : vector<2x32xf32>
    %540 = vector.multi_reduction <add>, %539, %cst_354 [2] : vector<2x32x32xf32> to vector<2x32xf32>
    %c0_355 = arith.constant 0 : index
    %c6_356 = arith.constant 6 : index
    %c0_357 = arith.constant 0 : index
    %541 = vector.load %arg6[%c0_355, %c6_356, %c0_357] : memref<2x8x32xf32, #tpu.memory_space<vmem>>, vector<2x1x32xf32>
    %542 = vector.shape_cast %541 : vector<2x1x32xf32> to vector<2x32xf32>
    %543 = vector.shape_cast %540 : vector<2x32xf32> to vector<2x1x32xf32>
    tpu.vector_store %arg6[%c0_355, %c6_356, %c0_357], %543 {strides = array<i32>} : memref<2x8x32xf32, #tpu.memory_space<vmem>>, vector<2x1x32xf32>,
    %c0_358 = arith.constant 0 : index
    %c7_359 = arith.constant 7 : index
    %c0_360 = arith.constant 0 : index
    %c0_361 = arith.constant 0 : index
    %544 = vector.load %arg4[%c0_358, %c7_359, %c0_360, %c0_361] : memref<2x8x32x32xf32, #tpu.memory_space<vmem>>, vector<2x1x32x32xf32>
    %545 = vector.shape_cast %544 : vector<2x1x32x32xf32> to vector<2x32x32xf32>
    %546 = arith.mulf %545, %534 : vector<2x32x32xf32>
    %c0_362 = arith.constant 0 : index
    %c7_363 = arith.constant 7 : index
    %c0_364 = arith.constant 0 : index
    %c0_365 = arith.constant 0 : index
    %547 = vector.load %arg5[%c0_362, %c7_363, %c0_364, %c0_365] : memref<2x8x32x32xf32, #tpu.memory_space<vmem>>, vector<2x1x32x32xf32>
    %548 = vector.shape_cast %547 : vector<2x1x32x32xf32> to vector<2x32x32xf32>
    %549 = arith.addf %546, %548 : vector<2x32x32xf32>
    %550 = vector.extract_strided_slice %421 {offsets = [0, 7, 0], sizes = [2, 1, 32], strides = [1, 1, 1]} : vector<2x8x32xf32> to vector<2x1x32xf32>
    %551 = vector.shape_cast %550 : vector<2x1x32xf32> to vector<2x32xf32>
    %552 = vector.shape_cast %551 : vector<2x32xf32> to vector<2x1x32xf32>
    %553 = vector.broadcast %552 : vector<2x1x32xf32> to vector<2x32x32xf32>
    %554 = arith.mulf %549, %553 : vector<2x32x32xf32>
    %cst_366 = arith.constant dense<0.000000e+00> : vector<2x32xf32>
    %555 = vector.multi_reduction <add>, %554, %cst_366 [2] : vector<2x32x32xf32> to vector<2x32xf32>
    %c0_367 = arith.constant 0 : index
    %c7_368 = arith.constant 7 : index
    %c0_369 = arith.constant 0 : index
    %556 = vector.load %arg6[%c0_367, %c7_368, %c0_369] : memref<2x8x32xf32, #tpu.memory_space<vmem>>, vector<2x1x32xf32>
    %557 = vector.shape_cast %556 : vector<2x1x32xf32> to vector<2x32xf32>
    %558 = vector.shape_cast %555 : vector<2x32xf32> to vector<2x1x32xf32>
    tpu.vector_store %arg6[%c0_367, %c7_368, %c0_369], %558 {strides = array<i32>} : memref<2x8x32xf32, #tpu.memory_space<vmem>>, vector<2x1x32xf32>,
    %c1_370 = arith.constant 1 : index
    %c70_371 = arith.constant 70 : index
    %c0_372 = arith.constant 0 : index
    %559 = vector.load %arg1[%c1_370, %c70_371, %c0_372] : memref<2x96x128xf32, #tpu.memory_space<vmem>>, vector<1x1x32xf32>
    %560 = vector.shape_cast %559 : vector<1x1x32xf32> to vector<32xf32>
    %c0_373 = arith.constant 0 : index
    %c0_374 = arith.constant 0 : index
    %c0_375 = arith.constant 0 : index
    %561 = vector.load %arg6[%c0_373, %c0_374, %c0_375] : memref<2x8x32xf32, #tpu.memory_space<vmem>>, vector<2x8x32xf32>
    %562 = vector.shape_cast %560 : vector<32xf32> to vector<1x1x32xf32>
    %563 = vector.broadcast %562 : vector<1x1x32xf32> to vector<2x8x32xf32>
    %564 = arith.mulf %563, %398 : vector<2x8x32xf32>
    %565 = arith.addf %561, %564 : vector<2x8x32xf32>
    %566 = arith.negf %329 : vector<2x8x32xf32>
    %567 = math.exp %566 : vector<2x8x32xf32>
    %cst_376 = arith.constant 1.000000e+00 : f32
    %568 = vector.broadcast %cst_376 : f32 to vector<2x8x32xf32>
    %569 = arith.addf %568, %567 : vector<2x8x32xf32>
    %570 = arith.divf %568, %569 : vector<2x8x32xf32>
    %571 = arith.mulf %329, %570 : vector<2x8x32xf32>
    %572 = arith.mulf %565, %571 : vector<2x8x32xf32>
    %573 = vector.extract_strided_slice %572 {offsets = [0, 7, 0], sizes = [2, 1, 32], strides = [1, 1, 1]} : vector<2x8x32xf32> to vector<2x1x32xf32>
    %574 = vector.shape_cast %573 : vector<2x1x32xf32> to vector<2x32xf32>
    %c0_377 = arith.constant 0 : index
    %c88 = arith.constant 88 : index
    %c0_378 = arith.constant 0 : index
    %575 = vector.load %arg1[%c0_377, %c88, %c0_378] : memref<2x96x128xf32, #tpu.memory_space<vmem>>, vector<1x1x32xf32>
    %576 = vector.shape_cast %575 : vector<1x1x32xf32> to vector<32xf32>
    %577 = vector.shape_cast %576 : vector<32xf32> to vector<1x32xf32>
    %578 = vector.broadcast %577 : vector<1x32xf32> to vector<2x32xf32>
    %579 = arith.mulf %574, %578 : vector<2x32xf32>
    %cst_379 = arith.constant dense<0.000000e+00> : vector<2xf32>
    %580 = vector.multi_reduction <add>, %579, %cst_379 [1] : vector<2x32xf32> to vector<2xf32>
    %581 = vector.shape_cast %580 : vector<2xf32> to vector<2x1xf32>
    %c0_380 = arith.constant 0 : index
    %c89 = arith.constant 89 : index
    %c0_381 = arith.constant 0 : index
    %582 = vector.load %arg1[%c0_380, %c89, %c0_381] : memref<2x96x128xf32, #tpu.memory_space<vmem>>, vector<1x1x1xf32>
    %583 = vector.shape_cast %582 : vector<1x1x1xf32> to vector<1xf32>
    %584 = vector.shape_cast %583 : vector<1xf32> to vector<1x1xf32>
    %585 = vector.broadcast %584 : vector<1x1xf32> to vector<2x1xf32>
    %586 = arith.addf %581, %585 : vector<2x1xf32>
    %c0_382 = arith.constant 0 : index
    %c0_383 = arith.constant 0 : index
    %587 = vector.load %arg2[%c0_382, %c0_383] : memref<2x1xf32, #tpu.memory_space<vmem>>, vector<2x1xf32>
    tpu.vector_store %arg2[%c0_382, %c0_383], %586 {strides = array<i32>} : memref<2x1xf32, #tpu.memory_space<vmem>>, vector<2x1xf32>,
    return
  }
}

</mosaic_0001>

<llo_original>
// kernel: tpu_custom_call.1
$region0: #{tpu_custom_call.1}
  #allocation0 [shape = 'u32[]', space=smem, size = 0x4, offset = 0x4, fixed_abs, tag = 'smem constant byte address 0x4 - core index']
  #allocation1 [shape = 'u32[72,128]{1,0:T(1,128)}', space=vmem, size = 0x9000, scoped, tag = 'internal scratch']
  #allocation2 [shape = 'f32[2,15,32]{2,1,0:T(8,128)}', space=vmem, size = 0x4000, scoped, tag = 'scratch operand']
  #allocation3 [shape = 'f32[2,8,32,32]{3,2,1,0:T(8,128)}', space=vmem, size = 0x40000, scoped, tag = 'scratch operand']
  #allocation4 [shape = 'f32[2,8,32,32]{3,2,1,0:T(8,128)}', space=vmem, size = 0x40000, scoped, tag = 'scratch operand']
  #allocation5 [shape = 'f32[2,8,32]{2,1,0:T(8,128)}', space=vmem, size = 0x2000, scoped, tag = 'scratch operand']
  %s0 = inlined_call_operand.vmem [shape: f32[2,8,2], index: 0, kind: input, shape index: {}]
  %s1 = inlined_call_operand.hbm [shape: f32[2,96,128], index: 1, kind: input, shape index: {}]
  %s2 = inlined_call_operand.vmem [shape: f32[2,1], index: 2, kind: output, shape index: {}]
  %s3 = sld [smem:[#allocation0]]
  $region22: #{tpu_custom_call.1} parent=0
    _
  %s5 = ssub.s32 1, %s3
  %s6 = scalar_select 0, %s5, %s3
  $region1: #{tpu_custom_call.1} parent=0
    #allocation6 [shape = 'u8[98304]{0}', space=vmem, size = 0x18000, scoped, tag = 'input window, operand 1, single buffered']
    #allocation7 [shape = 's32[1]{0}', space=sflag, size = 0x4, scoped, tag = 'scoped memory for tpu_custom_call.1']
    %7 = vsyncpa [#allocation7], 0
    // Predicated region
    $region2: #{tpu_custom_call.1} parent=1 // pred_check
      _
    $region3: #{tpu_custom_call.1} parent=1 // pred_check_branch
      %9 = sbr.rel (0) target = $region5
    $region4: #{tpu_custom_call.1} parent=1 // pred_region
      _
    $region5: #{tpu_custom_call.1} parent=1 // pred_fallthru
      _
    // Predicated region
    $region6: #{tpu_custom_call.1} parent=1 // pred_check
      _
    $region7: #{tpu_custom_call.1} parent=1 // pred_check_branch
      %11 = sbr.rel (0) target = $region9
    $region8: #{tpu_custom_call.1} parent=1 // pred_region
      %13 = vsyncadd [#allocation7], 0
      %s14 = sshll.u32 %s1, 4
      %s15 = int_to_ptr.hbm [resolvable:$true] %s14
      %s16 = sshll.u32 [#allocation6], 4
      %s17 = int_to_ptr.vmem [resolvable:$true] %s16
      %22 = dma.hbm_to_vmem [thread:$0]  %s15, 3072, %s17, [#allocation7], 128, 128, 8
    $region9: #{tpu_custom_call.1} parent=1 // pred_fallthru
      _
    // Predicated region
    $region10: #{tpu_custom_call.1} parent=1 // pred_check
      _
    $region11: #{tpu_custom_call.1} parent=1 // pred_check_branch
      %24 = sbr.rel (0) target = $region13
    $region12: #{tpu_custom_call.1} parent=1 // pred_region
      %26 = dma.done [#allocation7], 3072
    $region13: #{tpu_custom_call.1} parent=1 // pred_fallthru
      _
    %v27 = vld [vmem:[%s0] sm:$0xff]
    %v28 = vld [vmem:[%s0 + $0x8] sm:$0xff]
    %vm29 = vcmask 260096
    %30 = vst.msk [vmem:[#allocation2] sm:$0x7f] %vm29, 0.0
    %31 = vst.msk [vmem:[#allocation2 + $0x10] sm:$0x7f] %vm29, 0.0
    %v32 = vld [vmem:[#allocation6 + $0x47] sm:$0x1]
    %v33 = vmul.f32 %v27, %v27
    %v34 = vmul.f32 %v28, %v28
    %vm35 = vcmask 15360
    %v36 = vsel %vm35, %v33, 0.0
    %37 = vadd.xlane.f32.xlu0 %v36
    %v38 = vpop.xlane.xlu0 %37
    %v39 = vsel %vm35, %v34, 0.0
    %40 = vadd.xlane.f32.xlu0 %v39
    %v41 = vpop.xlane.xlu0 %40
    %v42 = vrcp.pop 2.0
    %v43 = vmul.f32 2.0, %v42
    %v44 = vsub.f32 1.0, %v43
    %v45 = vmul.f32 %v42, %v44
    %v46 = vadd.f32 %v42, %v45
    %vm47 = vweird.f32 %v42
    %v48 = vsel %vm47, %v42, %v46
    %v49 = vmul.f32 %v38, %v48
    %v50 = vmul.f32 %v41, %v48
    %v51 = vadd.f32 %v49, 1e-05
    %v52 = vadd.f32 %v50, 1e-05
    %v53 = vrsqrt.pop %v51
    %v54 = vmul.f32 %v53, %v51
    %v55 = vmul.f32 %v54, %v53
    %v56 = vmul.f32 0.5, %v55
    %v57 = vsub.f32 1.5, %v56
    %v58 = vmul.f32 %v53, %v57
    %vm59 = vweird.f32 %v51
    %vm60 = vweird.f32 %v53
    %vm61 = vmor %vm59, %vm60
    %v62 = vsel %vm61, %v53, %v58
    %v63 = vrsqrt.pop %v52
    %v64 = vmul.f32 %v63, %v52
    %v65 = vmul.f32 %v64, %v63
    %v66 = vmul.f32 0.5, %v65
    %v67 = vsub.f32 1.5, %v66
    %v68 = vmul.f32 %v63, %v67
    %vm69 = vweird.f32 %v52
    %vm70 = vweird.f32 %v63
    %vm71 = vmor %vm69, %vm70
    %v72 = vsel %vm71, %v63, %v68
    %v73 = vmul.f32 %v27, %v62
    %v74 = vmul.f32 %v28, %v72
    %v75 = vperm.slane %v32, 0
    %v76 = vmul.f32 %v73, %v75
    %v77 = vmul.f32 %v74, %v75
    %v78 = vld [vmem:[#allocation6 + $0x40] sm:$0x1]
    %80 = vset.pattern.permute.xlu0 0
    %81 = vperm.xlu0 %80, %v76
    %v82 = vpop.permute.xlu0 %81
    %85 = vset.pattern.permute.xlu0 0
    %86 = vperm.xlu0 %85, %v77
    %v87 = vpop.permute.xlu0 %86
    %v89 = vperm.slane %v78, 0
    %v90 = vmul.f32 %v82, %v89
    %v91 = vmul.f32 %v87, %v89
    %v92 = vadd.f32 %v90, 0.0
    %v93 = vadd.f32 %v91, 0.0
    %v94 = vld [vmem:[#allocation6 + $0x41] sm:$0x1]
    %95 = vset.pattern.permute.xlu0 1
    %96 = vperm.xlu0 %95, %v76
    %v97 = vpop.permute.xlu0 %96
    %99 = vset.pattern.permute.xlu0 1
    %100 = vperm.xlu0 %99, %v77
    %v101 = vpop.permute.xlu0 %100
    %v103 = vperm.slane %v94, 0
    %v104 = vmul.f32 %v97, %v103
    %v105 = vmul.f32 %v101, %v103
    %v106 = vadd.f32 %v92, %v104
    %v107 = vadd.f32 %v93, %v105
    %vm108 = vcmask 261120
    %109 = vst.msk [vmem:[#allocation2 + $0x7] sm:$0xff] %vm108, %v106
    %110 = vst.msk [vmem:[#allocation2 + $0x17] sm:$0xff] %vm108, %v107
    %v111 = vld [vmem:[#allocation6 + $0x48] sm:$0x1]
    %v112 = vld [vmem:[#allocation2] sm:$0xff]
    %v113 = vld [vmem:[#allocation2 + $0x10] sm:$0xff]
    %v114 = vperm.slane %v111, 0
    %v115 = vmul.f32 %v114, %v112
    %v116 = vmul.f32 %v114, %v113
    %v117 = vadd.f32 %v115, 0.0
    %v118 = vadd.f32 %v116, 0.0
    %v119 = vld [vmem:[#allocation6 + $0x49] sm:$0x1]
    %v120 = vld [vmem:[#allocation2 + $0x1] sm:$0xff]
    %v121 = vld [vmem:[#allocation2 + $0x11] sm:$0xff]
    %v122 = vperm.slane %v119, 0
    %v123 = vmul.f32 %v122, %v120
    %v124 = vmul.f32 %v122, %v121
    %v125 = vadd.f32 %v117, %v123
    %v126 = vadd.f32 %v118, %v124
    %v127 = vld [vmem:[#allocation6 + $0x4a] sm:$0x1]
    %v128 = vld [vmem:[#allocation2 + $0x2] sm:$0xff]
    %v129 = vld [vmem:[#allocation2 + $0x12] sm:$0xff]
    %v130 = vperm.slane %v127, 0
    %v131 = vmul.f32 %v130, %v128
    %v132 = vmul.f32 %v130, %v129
    %v133 = vadd.f32 %v125, %v131
    %v134 = vadd.f32 %v126, %v132
    %v135 = vld [vmem:[#allocation6 + $0x4b] sm:$0x1]
    %v136 = vld [vmem:[#allocation2 + $0x3] sm:$0xff]
    %v137 = vld [vmem:[#allocation2 + $0x13] sm:$0xff]
    %v138 = vperm.slane %v135, 0
    %v139 = vmul.f32 %v138, %v136
    %v140 = vmul.f32 %v138, %v137
    %v141 = vadd.f32 %v133, %v139
    %v142 = vadd.f32 %v134, %v140
    %v143 = vld [vmem:[#allocation6 + $0x4c] sm:$0x1]
    %v144 = vld [vmem:[#allocation2 + $0x4] sm:$0xff]
    %v145 = vld [vmem:[#allocation2 + $0x14] sm:$0xff]
    %v146 = vperm.slane %v143, 0
    %v147 = vmul.f32 %v146, %v144
    %v148 = vmul.f32 %v146, %v145
    %v149 = vadd.f32 %v141, %v147
    %v150 = vadd.f32 %v142, %v148
    %v151 = vld [vmem:[#allocation6 + $0x4d] sm:$0x1]
    %v152 = vld [vmem:[#allocation2 + $0x5] sm:$0xff]
    %v153 = vld [vmem:[#allocation2 + $0x15] sm:$0xff]
    %v154 = vperm.slane %v151, 0
    %v155 = vmul.f32 %v154, %v152
    %v156 = vmul.f32 %v154, %v153
    %v157 = vadd.f32 %v149, %v155
    %v158 = vadd.f32 %v150, %v156
    %v159 = vld [vmem:[#allocation6 + $0x4e] sm:$0x1]
    %v160 = vld [vmem:[#allocation2 + $0x6] sm:$0xff]
    %v161 = vld [vmem:[#allocation2 + $0x16] sm:$0xff]
    %v162 = vperm.slane %v159, 0
    %v163 = vmul.f32 %v162, %v160
    %v164 = vmul.f32 %v162, %v161
    %v165 = vadd.f32 %v157, %v163
    %v166 = vadd.f32 %v158, %v164
    %v167 = vld [vmem:[#allocation6 + $0x4f] sm:$0x1]
    %v168 = vld [vmem:[#allocation2 + $0x7] sm:$0xff]
    %v169 = vld [vmem:[#allocation2 + $0x17] sm:$0xff]
    %v170 = vperm.slane %v167, 0
    %v171 = vmul.f32 %v170, %v168
    %v172 = vmul.f32 %v170, %v169
    %v173 = vadd.f32 %v165, %v171
    %v174 = vadd.f32 %v166, %v172
    %v175 = vld [vmem:[#allocation6 + $0x44] sm:$0x1]
    %v176 = vperm.slane %v175, 0
    %v177 = vadd.f32 %v173, %v176
    %v178 = vadd.f32 %v174, %v176
    %v179 = vxor.u32 %v177, 2147483648
    %v180 = vxor.u32 %v178, 2147483648
    %v181 = vmul.f32 %v179, 1.442695
    %v182 = vpow.pop %v181
    %v183 = vmul.f32 %v180, 1.442695
    %v184 = vpow.pop %v183
    %v185 = vadd.f32 %v182, 1.0
    %v186 = vadd.f32 %v184, 1.0
    %v187 = vrcp.pop %v185
    %v188 = vmul.f32 %v185, %v187
    %v189 = vsub.f32 1.0, %v188
    %v190 = vmul.f32 %v187, %v189
    %v191 = vadd.f32 %v187, %v190
    %vm192 = vweird.f32 %v185
    %vm193 = vweird.f32 %v187
    %vm194 = vmor %vm192, %vm193
    %v195 = vsel %vm194, %v187, %v191
    %v196 = vand.u32 2147483647, %v185
    %vm197 = vcmp.eq.f32.partialorder %v196, 8.507059e+37
    %v198 = vand.u32 %v185, 2147483648
    %v199 = vor.u32 1.1754944e-38, %v198
    %v200 = vsel %vm197, %v199, %v195
    %v201 = vmul.f32 1.0, %v200
    %v202 = vrcp.pop %v186
    %v203 = vmul.f32 %v186, %v202
    %v204 = vsub.f32 1.0, %v203
    %v205 = vmul.f32 %v202, %v204
    %v206 = vadd.f32 %v202, %v205
    %vm207 = vweird.f32 %v186
    %vm208 = vweird.f32 %v202
    %vm209 = vmor %vm207, %vm208
    %v210 = vsel %vm209, %v202, %v206
    %v211 = vand.u32 2147483647, %v186
    %vm212 = vcmp.eq.f32.partialorder %v211, 8.507059e+37
    %v213 = vand.u32 %v186, 2147483648
    %v214 = vor.u32 1.1754944e-38, %v213
    %v215 = vsel %vm212, %v214, %v210
    %v216 = vmul.f32 1.0, %v215
    %v217 = vmul.f32 %v177, %v201
    %v218 = vmul.f32 %v178, %v216
    %v219 = vld [vmem:[#allocation6] sm:$0xff]
    %v220 = vld [vmem:[#allocation6 + $0x8] sm:$0xff]
    %v221 = vld [vmem:[#allocation6 + $0x10] sm:$0xff]
    %v222 = vld [vmem:[#allocation6 + $0x18] sm:$0xff]
    %v224 = vsel %vm108, %v217, 0
    %v227 = vsel %vm108, %v218, 0
    %229 = vmatpush.msra.mxu0 0.0
    %230 = vmatpush.msra.mxu0 0.0
    %231 = vmatpush.msra.mxu0 0.0
    %232 = vmatpush.msra.mxu0 0.0
    %233 = vmatpush.msra.mxu0 0.0
    %234 = vmatpush.msra.mxu0 0.0
    %235 = vmatpush.msra.mxu0 0.0
    %236 = vmatpush.msra.mxu0 0.0
    %237 = vmatpush.msra.mxu0 0.0
    %238 = vmatpush.msra.mxu0 0.0
    %239 = vmatpush.msra.mxu0 0.0
    %240 = vmatpush.msra.mxu0 0.0
    %241 = vmatpush.msra.mxu0 %v222
    %242 = vmatpush.msra.mxu0 %v221
    %243 = vmatpush.msra.mxu0 %v220
    %244 = vmatpush.msra.mxu0 %v219
    %245 = vmatmul.f32.gmra.mxu0 %v224
    %v246 = vpop.f32.mrf.mxu0
    %v247 = vadd.f32 0.0, %v246
    %248 = vmatmul.f32.gmra.mxu0 %v227
    %v249 = vpop.f32.mrf.mxu0
    %v250 = vadd.f32 0.0, %v249
    %251 = vdwg.mxu0
    %v252 = vld [vmem:[#allocation6 + $0x45] sm:$0x1]
    %v253 = vperm.slane %v252, 0
    %v254 = vadd.f32 %v247, %v253
    %v255 = vadd.f32 %v250, %v253
    %v256 = vmax.f32 %v254, 0.0
    %v257 = vmax.f32 %v255, 0.0
    %v258 = vand.u32 2147483647, %v254
    %v259 = vand.u32 2147483647, %v255
    %v260 = vsub.f32 0.0, %v258
    %v261 = vsub.f32 0.0, %v259
    %v262 = vmul.f32 %v260, 1.442695
    %v263 = vpow.pop %v262
    %v264 = vmul.f32 %v261, 1.442695
    %v265 = vpow.pop %v264
    %v266 = vadd.f32 %v263, 1.0
    %v267 = vadd.f32 %v265, 1.0
    %v268 = vlog2.pop %v266
    %v269 = vmul.f32 %v268, 0.6931472
    %v270 = vlog2.pop %v267
    %v271 = vmul.f32 %v270, 0.6931472
    %v272 = vadd.f32 %v256, %v269
    %v273 = vadd.f32 %v257, %v271
    %v274 = vld [vmem:[#allocation6 + $0x20] sm:$0xff]
    %v275 = vld [vmem:[#allocation6 + $0x28] sm:$0xff]
    %v276 = vld [vmem:[#allocation6 + $0x30] sm:$0xff]
    %v277 = vld [vmem:[#allocation6 + $0x38] sm:$0xff]
    %v278 = vperm.slane %v272, 0
    %v279 = vlaneseq
    %v280 = vshrl.u32 %v279, 7
    %282 = vset.pattern.permute.xlu0 %v280
    %283 = vperm.xlu0 %282, %v278
    %v284 = vpop.permute.xlu0 %283
    %v285 = vlaneseq
    %v286 = vshrl.u32 %v285, 7
    %v287 = vadd.s32 %v286, 8
    %288 = vset.pattern.permute.xlu0 %v287
    %289 = vperm.xlu0 %288, %v278
    %v290 = vpop.permute.xlu0 %289
    %v291 = vlaneseq
    %v292 = vshrl.u32 %v291, 7
    %v293 = vadd.s32 %v292, 16
    %294 = vset.pattern.permute.xlu0 %v293
    %295 = vperm.xlu0 %294, %v278
    %v296 = vpop.permute.xlu0 %295
    %v297 = vlaneseq
    %v298 = vshrl.u32 %v297, 7
    %v299 = vadd.s32 %v298, 24
    %300 = vset.pattern.permute.xlu0 %v299
    %301 = vperm.xlu0 %300, %v278
    %v302 = vpop.permute.xlu0 %301
    %v303 = vperm.slane %v272, 1
    %v304 = vlaneseq
    %v305 = vshrl.u32 %v304, 7
    %307 = vset.pattern.permute.xlu0 %v305
    %308 = vperm.xlu0 %307, %v303
    %v309 = vpop.permute.xlu0 %308
    %v310 = vlaneseq
    %v311 = vshrl.u32 %v310, 7
    %v312 = vadd.s32 %v311, 8
    %313 = vset.pattern.permute.xlu0 %v312
    %314 = vperm.xlu0 %313, %v303
    %v315 = vpop.permute.xlu0 %314
    %v316 = vlaneseq
    %v317 = vshrl.u32 %v316, 7
    %v318 = vadd.s32 %v317, 16
    %319 = vset.pattern.permute.xlu0 %v318
    %320 = vperm.xlu0 %319, %v303
    %v321 = vpop.permute.xlu0 %320
    %v322 = vlaneseq
    %v323 = vshrl.u32 %v322, 7
    %v324 = vadd.s32 %v323, 24
    %325 = vset.pattern.permute.xlu0 %v324
    %326 = vperm.xlu0 %325, %v303
    %v327 = vpop.permute.xlu0 %326
    %v328 = vperm.slane %v272, 2
    %v329 = vlaneseq
    %v330 = vshrl.u32 %v329, 7
    %332 = vset.pattern.permute.xlu0 %v330
    %333 = vperm.xlu0 %332, %v328
    %v334 = vpop.permute.xlu0 %333
    %v335 = vlaneseq
    %v336 = vshrl.u32 %v335, 7
    %v337 = vadd.s32 %v336, 8
    %338 = vset.pattern.permute.xlu0 %v337
    %339 = vperm.xlu0 %338, %v328
    %v340 = vpop.permute.xlu0 %339
    %v341 = vlaneseq
    %v342 = vshrl.u32 %v341, 7
    %v343 = vadd.s32 %v342, 16
    %344 = vset.pattern.permute.xlu0 %v343
    %345 = vperm.xlu0 %344, %v328
    %v346 = vpop.permute.xlu0 %345
    %v347 = vlaneseq
    %v348 = vshrl.u32 %v347, 7
    %v349 = vadd.s32 %v348, 24
    %350 = vset.pattern.permute.xlu0 %v349
    %351 = vperm.xlu0 %350, %v328
    %v352 = vpop.permute.xlu0 %351
    %v353 = vperm.slane %v272, 3
    %v354 = vlaneseq
    %v355 = vshrl.u32 %v354, 7
    %357 = vset.pattern.permute.xlu0 %v355
    %358 = vperm.xlu0 %357, %v353
    %v359 = vpop.permute.xlu0 %358
    %v360 = vlaneseq
    %v361 = vshrl.u32 %v360, 7
    %v362 = vadd.s32 %v361, 8
    %363 = vset.pattern.permute.xlu0 %v362
    %364 = vperm.xlu0 %363, %v353
    %v365 = vpop.permute.xlu0 %364
    %v366 = vlaneseq
    %v367 = vshrl.u32 %v366, 7
    %v368 = vadd.s32 %v367, 16
    %369 = vset.pattern.permute.xlu0 %v368
    %370 = vperm.xlu0 %369, %v353
    %v371 = vpop.permute.xlu0 %370
    %v372 = vlaneseq
    %v373 = vshrl.u32 %v372, 7
    %v374 = vadd.s32 %v373, 24
    %375 = vset.pattern.permute.xlu0 %v374
    %376 = vperm.xlu0 %375, %v353
    %v377 = vpop.permute.xlu0 %376
    %v378 = vperm.slane %v272, 4
    %v379 = vlaneseq
    %v380 = vshrl.u32 %v379, 7
    %382 = vset.pattern.permute.xlu0 %v380
    %383 = vperm.xlu0 %382, %v378
    %v384 = vpop.permute.xlu0 %383
    %v385 = vlaneseq
    %v386 = vshrl.u32 %v385, 7
    %v387 = vadd.s32 %v386, 8
    %388 = vset.pattern.permute.xlu0 %v387
    %389 = vperm.xlu0 %388, %v378
    %v390 = vpop.permute.xlu0 %389
    %v391 = vlaneseq
    %v392 = vshrl.u32 %v391, 7
    %v393 = vadd.s32 %v392, 16
    %394 = vset.pattern.permute.xlu0 %v393
    %395 = vperm.xlu0 %394, %v378
    %v396 = vpop.permute.xlu0 %395
    %v397 = vlaneseq
    %v398 = vshrl.u32 %v397, 7
    %v399 = vadd.s32 %v398, 24
    %400 = vset.pattern.permute.xlu0 %v399
    %401 = vperm.xlu0 %400, %v378
    %v402 = vpop.permute.xlu0 %401
    %v403 = vperm.slane %v272, 5
    %v404 = vlaneseq
    %v405 = vshrl.u32 %v404, 7
    %407 = vset.pattern.permute.xlu0 %v405
    %408 = vperm.xlu0 %407, %v403
    %v409 = vpop.permute.xlu0 %408
    %v410 = vlaneseq
    %v411 = vshrl.u32 %v410, 7
    %v412 = vadd.s32 %v411, 8
    %413 = vset.pattern.permute.xlu0 %v412
    %414 = vperm.xlu0 %413, %v403
    %v415 = vpop.permute.xlu0 %414
    %v416 = vlaneseq
    %v417 = vshrl.u32 %v416, 7
    %v418 = vadd.s32 %v417, 16
    %419 = vset.pattern.permute.xlu0 %v418
    %420 = vperm.xlu0 %419, %v403
    %v421 = vpop.permute.xlu0 %420
    %v422 = vlaneseq
    %v423 = vshrl.u32 %v422, 7
    %v424 = vadd.s32 %v423, 24
    %425 = vset.pattern.permute.xlu0 %v424
    %426 = vperm.xlu0 %425, %v403
    %v427 = vpop.permute.xlu0 %426
    %v428 = vperm.slane %v272, 6
    %v429 = vlaneseq
    %v430 = vshrl.u32 %v429, 7
    %432 = vset.pattern.permute.xlu0 %v430
    %433 = vperm.xlu0 %432, %v428
    %v434 = vpop.permute.xlu0 %433
    %v435 = vlaneseq
    %v436 = vshrl.u32 %v435, 7
    %v437 = vadd.s32 %v436, 8
    %438 = vset.pattern.permute.xlu0 %v437
    %439 = vperm.xlu0 %438, %v428
    %v440 = vpop.permute.xlu0 %439
    %v441 = vlaneseq
    %v442 = vshrl.u32 %v441, 7
    %v443 = vadd.s32 %v442, 16
    %444 = vset.pattern.permute.xlu0 %v443
    %445 = vperm.xlu0 %444, %v428
    %v446 = vpop.permute.xlu0 %445
    %v447 = vlaneseq
    %v448 = vshrl.u32 %v447, 7
    %v449 = vadd.s32 %v448, 24
    %450 = vset.pattern.permute.xlu0 %v449
    %451 = vperm.xlu0 %450, %v428
    %v452 = vpop.permute.xlu0 %451
    %v453 = vperm.slane %v272, 7
    %v454 = vlaneseq
    %v455 = vshrl.u32 %v454, 7
    %457 = vset.pattern.permute.xlu0 %v455
    %458 = vperm.xlu0 %457, %v453
    %v459 = vpop.permute.xlu0 %458
    %v460 = vlaneseq
    %v461 = vshrl.u32 %v460, 7
    %v462 = vadd.s32 %v461, 8
    %463 = vset.pattern.permute.xlu0 %v462
    %464 = vperm.xlu0 %463, %v453
    %v465 = vpop.permute.xlu0 %464
    %v466 = vlaneseq
    %v467 = vshrl.u32 %v466, 7
    %v468 = vadd.s32 %v467, 16
    %469 = vset.pattern.permute.xlu0 %v468
    %470 = vperm.xlu0 %469, %v453
    %v471 = vpop.permute.xlu0 %470
    %v472 = vlaneseq
    %v473 = vshrl.u32 %v472, 7
    %v474 = vadd.s32 %v473, 24
    %475 = vset.pattern.permute.xlu0 %v474
    %476 = vperm.xlu0 %475, %v453
    %v477 = vpop.permute.xlu0 %476
    %v478 = vperm.slane %v273, 0
    %v479 = vlaneseq
    %v480 = vshrl.u32 %v479, 7
    %482 = vset.pattern.permute.xlu0 %v480
    %483 = vperm.xlu0 %482, %v478
    %v484 = vpop.permute.xlu0 %483
    %v485 = vlaneseq
    %v486 = vshrl.u32 %v485, 7
    %v487 = vadd.s32 %v486, 8
    %488 = vset.pattern.permute.xlu0 %v487
    %489 = vperm.xlu0 %488, %v478
    %v490 = vpop.permute.xlu0 %489
    %v491 = vlaneseq
    %v492 = vshrl.u32 %v491, 7
    %v493 = vadd.s32 %v492, 16
    %494 = vset.pattern.permute.xlu0 %v493
    %495 = vperm.xlu0 %494, %v478
    %v496 = vpop.permute.xlu0 %495
    %v497 = vlaneseq
    %v498 = vshrl.u32 %v497, 7
    %v499 = vadd.s32 %v498, 24
    %500 = vset.pattern.permute.xlu0 %v499
    %501 = vperm.xlu0 %500, %v478
    %v502 = vpop.permute.xlu0 %501
    %v503 = vperm.slane %v273, 1
    %v504 = vlaneseq
    %v505 = vshrl.u32 %v504, 7
    %507 = vset.pattern.permute.xlu0 %v505
    %508 = vperm.xlu0 %507, %v503
    %v509 = vpop.permute.xlu0 %508
    %v510 = vlaneseq
    %v511 = vshrl.u32 %v510, 7
    %v512 = vadd.s32 %v511, 8
    %513 = vset.pattern.permute.xlu0 %v512
    %514 = vperm.xlu0 %513, %v503
    %v515 = vpop.permute.xlu0 %514
    %v516 = vlaneseq
    %v517 = vshrl.u32 %v516, 7
    %v518 = vadd.s32 %v517, 16
    %519 = vset.pattern.permute.xlu0 %v518
    %520 = vperm.xlu0 %519, %v503
    %v521 = vpop.permute.xlu0 %520
    %v522 = vlaneseq
    %v523 = vshrl.u32 %v522, 7
    %v524 = vadd.s32 %v523, 24
    %525 = vset.pattern.permute.xlu0 %v524
    %526 = vperm.xlu0 %525, %v503
    %v527 = vpop.permute.xlu0 %526
    %v528 = vperm.slane %v273, 2
    %v529 = vlaneseq
    %v530 = vshrl.u32 %v529, 7
    %532 = vset.pattern.permute.xlu0 %v530
    %533 = vperm.xlu0 %532, %v528
    %v534 = vpop.permute.xlu0 %533
    %v535 = vlaneseq
    %v536 = vshrl.u32 %v535, 7
    %v537 = vadd.s32 %v536, 8
    %538 = vset.pattern.permute.xlu0 %v537
    %539 = vperm.xlu0 %538, %v528
    %v540 = vpop.permute.xlu0 %539
    %v541 = vlaneseq
    %v542 = vshrl.u32 %v541, 7
    %v543 = vadd.s32 %v542, 16
    %544 = vset.pattern.permute.xlu0 %v543
    %545 = vperm.xlu0 %544, %v528
    %v546 = vpop.permute.xlu0 %545
    %v547 = vlaneseq
    %v548 = vshrl.u32 %v547, 7
    %v549 = vadd.s32 %v548, 24
    %550 = vset.pattern.permute.xlu0 %v549
    %551 = vperm.xlu0 %550, %v528
    %v552 = vpop.permute.xlu0 %551
    %v553 = vperm.slane %v273, 3
    %v554 = vlaneseq
    %v555 = vshrl.u32 %v554, 7
    %557 = vset.pattern.permute.xlu0 %v555
    %558 = vperm.xlu0 %557, %v553
    %v559 = vpop.permute.xlu0 %558
    %v560 = vlaneseq
    %v561 = vshrl.u32 %v560, 7
    %v562 = vadd.s32 %v561, 8
    %563 = vset.pattern.permute.xlu0 %v562
    %564 = vperm.xlu0 %563, %v553
    %v565 = vpop.permute.xlu0 %564
    %v566 = vlaneseq
    %v567 = vshrl.u32 %v566, 7
    %v568 = vadd.s32 %v567, 16
    %569 = vset.pattern.permute.xlu0 %v568
    %570 = vperm.xlu0 %569, %v553
    %v571 = vpop.permute.xlu0 %570
    %v572 = vlaneseq
    %v573 = vshrl.u32 %v572, 7
    %v574 = vadd.s32 %v573, 24
    %575 = vset.pattern.permute.xlu0 %v574
    %576 = vperm.xlu0 %575, %v553
    %v577 = vpop.permute.xlu0 %576
    %v578 = vperm.slane %v273, 4
    %v579 = vlaneseq
    %v580 = vshrl.u32 %v579, 7
    %582 = vset.pattern.permute.xlu0 %v580
    %583 = vperm.xlu0 %582, %v578
    %v584 = vpop.permute.xlu0 %583
    %v585 = vlaneseq
    %v586 = vshrl.u32 %v585, 7
    %v587 = vadd.s32 %v586, 8
    %588 = vset.pattern.permute.xlu0 %v587
    %589 = vperm.xlu0 %588, %v578
    %v590 = vpop.permute.xlu0 %589
    %v591 = vlaneseq
    %v592 = vshrl.u32 %v591, 7
    %v593 = vadd.s32 %v592, 16
    %594 = vset.pattern.permute.xlu0 %v593
    %595 = vperm.xlu0 %594, %v578
    %v596 = vpop.permute.xlu0 %595
    %v597 = vlaneseq
    %v598 = vshrl.u32 %v597, 7
    %v599 = vadd.s32 %v598, 24
    %600 = vset.pattern.permute.xlu0 %v599
    %601 = vperm.xlu0 %600, %v578
    %v602 = vpop.permute.xlu0 %601
    %v603 = vperm.slane %v273, 5
    %v604 = vlaneseq
    %v605 = vshrl.u32 %v604, 7
    %607 = vset.pattern.permute.xlu0 %v605
    %608 = vperm.xlu0 %607, %v603
    %v609 = vpop.permute.xlu0 %608
    %v610 = vlaneseq
    %v611 = vshrl.u32 %v610, 7
    %v612 = vadd.s32 %v611, 8
    %613 = vset.pattern.permute.xlu0 %v612
    %614 = vperm.xlu0 %613, %v603
    %v615 = vpop.permute.xlu0 %614
    %v616 = vlaneseq
    %v617 = vshrl.u32 %v616, 7
    %v618 = vadd.s32 %v617, 16
    %619 = vset.pattern.permute.xlu0 %v618
    %620 = vperm.xlu0 %619, %v603
    %v621 = vpop.permute.xlu0 %620
    %v622 = vlaneseq
    %v623 = vshrl.u32 %v622, 7
    %v624 = vadd.s32 %v623, 24
    %625 = vset.pattern.permute.xlu0 %v624
    %626 = vperm.xlu0 %625, %v603
    %v627 = vpop.permute.xlu0 %626
    %v628 = vperm.slane %v273, 6
    %v629 = vlaneseq
    %v630 = vshrl.u32 %v629, 7
    %632 = vset.pattern.permute.xlu0 %v630
    %633 = vperm.xlu0 %632, %v628
    %v634 = vpop.permute.xlu0 %633
    %v635 = vlaneseq
    %v636 = vshrl.u32 %v635, 7
    %v637 = vadd.s32 %v636, 8
    %638 = vset.pattern.permute.xlu0 %v637
    %639 = vperm.xlu0 %638, %v628
    %v640 = vpop.permute.xlu0 %639
    %v641 = vlaneseq
    %v642 = vshrl.u32 %v641, 7
    %v643 = vadd.s32 %v642, 16
    %644 = vset.pattern.permute.xlu0 %v643
    %645 = vperm.xlu0 %644, %v628
    %v646 = vpop.permute.xlu0 %645
    %v647 = vlaneseq
    %v648 = vshrl.u32 %v647, 7
    %v649 = vadd.s32 %v648, 24
    %650 = vset.pattern.permute.xlu0 %v649
    %651 = vperm.xlu0 %650, %v628
    %v652 = vpop.permute.xlu0 %651
    %v653 = vperm.slane %v273, 7
    %v654 = vlaneseq
    %v655 = vshrl.u32 %v654, 7
    %657 = vset.pattern.permute.xlu0 %v655
    %658 = vperm.xlu0 %657, %v653
    %v659 = vpop.permute.xlu0 %658
    %v660 = vlaneseq
    %v661 = vshrl.u32 %v660, 7
    %v662 = vadd.s32 %v661, 8
    %663 = vset.pattern.permute.xlu0 %v662
    %664 = vperm.xlu0 %663, %v653
    %v665 = vpop.permute.xlu0 %664
    %v666 = vlaneseq
    %v667 = vshrl.u32 %v666, 7
    %v668 = vadd.s32 %v667, 16
    %669 = vset.pattern.permute.xlu0 %v668
    %670 = vperm.xlu0 %669, %v653
    %v671 = vpop.permute.xlu0 %670
    %v672 = vlaneseq
    %v673 = vshrl.u32 %v672, 7
    %v674 = vadd.s32 %v673, 24
    %675 = vset.pattern.permute.xlu0 %v674
    %676 = vperm.xlu0 %675, %v653
    %v677 = vpop.permute.xlu0 %676
    %v678 = vmul.f32 %v284, %v274
    %v679 = vmul.f32 %v290, %v275
    %v680 = vmul.f32 %v296, %v276
    %v681 = vmul.f32 %v302, %v277
    %v682 = vmul.f32 %v309, %v274
    %v683 = vmul.f32 %v315, %v275
    %v684 = vmul.f32 %v321, %v276
    %v685 = vmul.f32 %v327, %v277
    %v686 = vmul.f32 %v334, %v274
    %v687 = vmul.f32 %v340, %v275
    %v688 = vmul.f32 %v346, %v276
    %v689 = vmul.f32 %v352, %v277
    %v690 = vmul.f32 %v359, %v274
    %v691 = vmul.f32 %v365, %v275
    %v692 = vmul.f32 %v371, %v276
    %v693 = vmul.f32 %v377, %v277
    %v694 = vmul.f32 %v384, %v274
    %v695 = vmul.f32 %v390, %v275
    %v696 = vmul.f32 %v396, %v276
    %v697 = vmul.f32 %v402, %v277
    %v698 = vmul.f32 %v409, %v274
    %v699 = vmul.f32 %v415, %v275
    %v700 = vmul.f32 %v421, %v276
    %v701 = vmul.f32 %v427, %v277
    %v702 = vmul.f32 %v434, %v274
    %v703 = vmul.f32 %v440, %v275
    %v704 = vmul.f32 %v446, %v276
    %v705 = vmul.f32 %v452, %v277
    %v706 = vmul.f32 %v459, %v274
    %v707 = vmul.f32 %v465, %v275
    %v708 = vmul.f32 %v471, %v276
    %v709 = vmul.f32 %v477, %v277
    %v710 = vmul.f32 %v484, %v274
    %v711 = vmul.f32 %v490, %v275
    %v712 = vmul.f32 %v496, %v276
    %v713 = vmul.f32 %v502, %v277
    %v714 = vmul.f32 %v509, %v274
    %v715 = vmul.f32 %v515, %v275
    %v716 = vmul.f32 %v521, %v276
    %v717 = vmul.f32 %v527, %v277
    %v718 = vmul.f32 %v534, %v274
    %v719 = vmul.f32 %v540, %v275
    %v720 = vmul.f32 %v546, %v276
    %v721 = vmul.f32 %v552, %v277
    %v722 = vmul.f32 %v559, %v274
    %v723 = vmul.f32 %v565, %v275
    %v724 = vmul.f32 %v571, %v276
    %v725 = vmul.f32 %v577, %v277
    %v726 = vmul.f32 %v584, %v274
    %v727 = vmul.f32 %v590, %v275
    %v728 = vmul.f32 %v596, %v276
    %v729 = vmul.f32 %v602, %v277
    %v730 = vmul.f32 %v609, %v274
    %v731 = vmul.f32 %v615, %v275
    %v732 = vmul.f32 %v621, %v276
    %v733 = vmul.f32 %v627, %v277
    %v734 = vmul.f32 %v634, %v274
    %v735 = vmul.f32 %v640, %v275
    %v736 = vmul.f32 %v646, %v276
    %v737 = vmul.f32 %v652, %v277
    %v738 = vmul.f32 %v659, %v274
    %v739 = vmul.f32 %v665, %v275
    %v740 = vmul.f32 %v671, %v276
    %v741 = vmul.f32 %v677, %v277
    %v742 = vmul.f32 %v678, 1.442695
    %v743 = vpow.pop %v742
    %v744 = vmul.f32 %v679, 1.442695
    %v745 = vpow.pop %v744
    %v746 = vmul.f32 %v680, 1.442695
    %v747 = vpow.pop %v746
    %v748 = vmul.f32 %v681, 1.442695
    %v749 = vpow.pop %v748
    %v750 = vmul.f32 %v682, 1.442695
    %v751 = vpow.pop %v750
    %v752 = vmul.f32 %v683, 1.442695
    %v753 = vpow.pop %v752
    %v754 = vmul.f32 %v684, 1.442695
    %v755 = vpow.pop %v754
    %v756 = vmul.f32 %v685, 1.442695
    %v757 = vpow.pop %v756
    %v758 = vmul.f32 %v686, 1.442695
    %v759 = vpow.pop %v758
    %v760 = vmul.f32 %v687, 1.442695
    %v761 = vpow.pop %v760
    %v762 = vmul.f32 %v688, 1.442695
    %v763 = vpow.pop %v762
    %v764 = vmul.f32 %v689, 1.442695
    %v765 = vpow.pop %v764
    %v766 = vmul.f32 %v690, 1.442695
    %v767 = vpow.pop %v766
    %v768 = vmul.f32 %v691, 1.442695
    %v769 = vpow.pop %v768
    %v770 = vmul.f32 %v692, 1.442695
    %v771 = vpow.pop %v770
    %v772 = vmul.f32 %v693, 1.442695
    %v773 = vpow.pop %v772
    %v774 = vmul.f32 %v694, 1.442695
    %v775 = vpow.pop %v774
    %v776 = vmul.f32 %v695, 1.442695
    %v777 = vpow.pop %v776
    %v778 = vmul.f32 %v696, 1.442695
    %v779 = vpow.pop %v778
    %v780 = vmul.f32 %v697, 1.442695
    %v781 = vpow.pop %v780
    %v782 = vmul.f32 %v698, 1.442695
    %v783 = vpow.pop %v782
    %v784 = vmul.f32 %v699, 1.442695
    %v785 = vpow.pop %v784
    %v786 = vmul.f32 %v700, 1.442695
    %v787 = vpow.pop %v786
    %v788 = vmul.f32 %v701, 1.442695
    %v789 = vpow.pop %v788
    %v790 = vmul.f32 %v702, 1.442695
    %v791 = vpow.pop %v790
    %v792 = vmul.f32 %v703, 1.442695
    %v793 = vpow.pop %v792
    %v794 = vmul.f32 %v704, 1.442695
    %v795 = vpow.pop %v794
    %v796 = vmul.f32 %v705, 1.442695
    %v797 = vpow.pop %v796
    %v798 = vmul.f32 %v706, 1.442695
    %v799 = vpow.pop %v798
    %v800 = vmul.f32 %v707, 1.442695
    %v801 = vpow.pop %v800
    %v802 = vmul.f32 %v708, 1.442695
    %v803 = vpow.pop %v802
    %v804 = vmul.f32 %v709, 1.442695
    %v805 = vpow.pop %v804
    %v806 = vmul.f32 %v710, 1.442695
    %v807 = vpow.pop %v806
    %v808 = vmul.f32 %v711, 1.442695
    %v809 = vpow.pop %v808
    %v810 = vmul.f32 %v712, 1.442695
    %v811 = vpow.pop %v810
    %v812 = vmul.f32 %v713, 1.442695
    %v813 = vpow.pop %v812
    %v814 = vmul.f32 %v714, 1.442695
    %v815 = vpow.pop %v814
    %v816 = vmul.f32 %v715, 1.442695
    %v817 = vpow.pop %v816
    %v818 = vmul.f32 %v716, 1.442695
    %v819 = vpow.pop %v818
    %v820 = vmul.f32 %v717, 1.442695
    %v821 = vpow.pop %v820
    %v822 = vmul.f32 %v718, 1.442695
    %v823 = vpow.pop %v822
    %v824 = vmul.f32 %v719, 1.442695
    %v825 = vpow.pop %v824
    %v826 = vmul.f32 %v720, 1.442695
    %v827 = vpow.pop %v826
    %v828 = vmul.f32 %v721, 1.442695
    %v829 = vpow.pop %v828
    %v830 = vmul.f32 %v722, 1.442695
    %v831 = vpow.pop %v830
    %v832 = vmul.f32 %v723, 1.442695
    %v833 = vpow.pop %v832
    %v834 = vmul.f32 %v724, 1.442695
    %v835 = vpow.pop %v834
    %v836 = vmul.f32 %v725, 1.442695
    %v837 = vpow.pop %v836
    %v838 = vmul.f32 %v726, 1.442695
    %v839 = vpow.pop %v838
    %v840 = vmul.f32 %v727, 1.442695
    %v841 = vpow.pop %v840
    %v842 = vmul.f32 %v728, 1.442695
    %v843 = vpow.pop %v842
    %v844 = vmul.f32 %v729, 1.442695
    %v845 = vpow.pop %v844
    %v846 = vmul.f32 %v730, 1.442695
    %v847 = vpow.pop %v846
    %v848 = vmul.f32 %v731, 1.442695
    %v849 = vpow.pop %v848
    %v850 = vmul.f32 %v732, 1.442695
    %v851 = vpow.pop %v850
    %v852 = vmul.f32 %v733, 1.442695
    %v853 = vpow.pop %v852
    %v854 = vmul.f32 %v734, 1.442695
    %v855 = vpow.pop %v854
    %v856 = vmul.f32 %v735, 1.442695
    %v857 = vpow.pop %v856
    %v858 = vmul.f32 %v736, 1.442695
    %v859 = vpow.pop %v858
    %v860 = vmul.f32 %v737, 1.442695
    %v861 = vpow.pop %v860
    %v862 = vmul.f32 %v738, 1.442695
    %v863 = vpow.pop %v862
    %v864 = vmul.f32 %v739, 1.442695
    %v865 = vpow.pop %v864
    %v866 = vmul.f32 %v740, 1.442695
    %v867 = vpow.pop %v866
    %v868 = vmul.f32 %v741, 1.442695
    %v869 = vpow.pop %v868
    %870 = vst.msk [vmem:[#allocation3] sm:$0xff] %vm108, %v743
    %871 = vst.msk [vmem:[#allocation3 + $0x8] sm:$0xff] %vm108, %v745
    %872 = vst.msk [vmem:[#allocation3 + $0x10] sm:$0xff] %vm108, %v747
    %873 = vst.msk [vmem:[#allocation3 + $0x18] sm:$0xff] %vm108, %v749
    %874 = vst.msk [vmem:[#allocation3 + $0x20] sm:$0xff] %vm108, %v751
    %875 = vst.msk [vmem:[#allocation3 + $0x28] sm:$0xff] %vm108, %v753
    %876 = vst.msk [vmem:[#allocation3 + $0x30] sm:$0xff] %vm108, %v755
    %877 = vst.msk [vmem:[#allocation3 + $0x38] sm:$0xff] %vm108, %v757
    %878 = vst.msk [vmem:[#allocation3 + $0x40] sm:$0xff] %vm108, %v759
    %879 = vst.msk [vmem:[#allocation3 + $0x48] sm:$0xff] %vm108, %v761
    %880 = vst.msk [vmem:[#allocation3 + $0x50] sm:$0xff] %vm108, %v763
    %881 = vst.msk [vmem:[#allocation3 + $0x58] sm:$0xff] %vm108, %v765
    %882 = vst.msk [vmem:[#allocation3 + $0x60] sm:$0xff] %vm108, %v767
    %883 = vst.msk [vmem:[#allocation3 + $0x68] sm:$0xff] %vm108, %v769
    %884 = vst.msk [vmem:[#allocation3 + $0x70] sm:$0xff] %vm108, %v771
    %885 = vst.msk [vmem:[#allocation3 + $0x78] sm:$0xff] %vm108, %v773
    %886 = vst.msk [vmem:[#allocation3 + $0x80] sm:$0xff] %vm108, %v775
    %887 = vst.msk [vmem:[#allocation3 + $0x88] sm:$0xff] %vm108, %v777
    %888 = vst.msk [vmem:[#allocation3 + $0x90] sm:$0xff] %vm108, %v779
    %889 = vst.msk [vmem:[#allocation3 + $0x98] sm:$0xff] %vm108, %v781
    %890 = vst.msk [vmem:[#allocation3 + $0xa0] sm:$0xff] %vm108, %v783
    %891 = vst.msk [vmem:[#allocation3 + $0xa8] sm:$0xff] %vm108, %v785
    %892 = vst.msk [vmem:[#allocation3 + $0xb0] sm:$0xff] %vm108, %v787
    %893 = vst.msk [vmem:[#allocation3 + $0xb8] sm:$0xff] %vm108, %v789
    %894 = vst.msk [vmem:[#allocation3 + $0xc0] sm:$0xff] %vm108, %v791
    %895 = vst.msk [vmem:[#allocation3 + $0xc8] sm:$0xff] %vm108, %v793
    %896 = vst.msk [vmem:[#allocation3 + $0xd0] sm:$0xff] %vm108, %v795
    %897 = vst.msk [vmem:[#allocation3 + $0xd8] sm:$0xff] %vm108, %v797
    %898 = vst.msk [vmem:[#allocation3 + $0xe0] sm:$0xff] %vm108, %v799
    %899 = vst.msk [vmem:[#allocation3 + $0xe8] sm:$0xff] %vm108, %v801
    %900 = vst.msk [vmem:[#allocation3 + $0xf0] sm:$0xff] %vm108, %v803
    %901 = vst.msk [vmem:[#allocation3 + $0xf8] sm:$0xff] %vm108, %v805
    %902 = vst.msk [vmem:[#allocation3 + $0x100] sm:$0xff] %vm108, %v807
    %903 = vst.msk [vmem:[#allocation3 + $0x108] sm:$0xff] %vm108, %v809
    %904 = vst.msk [vmem:[#allocation3 + $0x110] sm:$0xff] %vm108, %v811
    %905 = vst.msk [vmem:[#allocation3 + $0x118] sm:$0xff] %vm108, %v813
    %906 = vst.msk [vmem:[#allocation3 + $0x120] sm:$0xff] %vm108, %v815
    %907 = vst.msk [vmem:[#allocation3 + $0x128] sm:$0xff] %vm108, %v817
    %908 = vst.msk [vmem:[#allocation3 + $0x130] sm:$0xff] %vm108, %v819
    %909 = vst.msk [vmem:[#allocation3 + $0x138] sm:$0xff] %vm108, %v821
    %910 = vst.msk [vmem:[#allocation3 + $0x140] sm:$0xff] %vm108, %v823
    %911 = vst.msk [vmem:[#allocation3 + $0x148] sm:$0xff] %vm108, %v825
    %912 = vst.msk [vmem:[#allocation3 + $0x150] sm:$0xff] %vm108, %v827
    %913 = vst.msk [vmem:[#allocation3 + $0x158] sm:$0xff] %vm108, %v829
    %914 = vst.msk [vmem:[#allocation3 + $0x160] sm:$0xff] %vm108, %v831
    %915 = vst.msk [vmem:[#allocation3 + $0x168] sm:$0xff] %vm108, %v833
    %916 = vst.msk [vmem:[#allocation3 + $0x170] sm:$0xff] %vm108, %v835
    %917 = vst.msk [vmem:[#allocation3 + $0x178] sm:$0xff] %vm108, %v837
    %918 = vst.msk [vmem:[#allocation3 + $0x180] sm:$0xff] %vm108, %v839
    %919 = vst.msk [vmem:[#allocation3 + $0x188] sm:$0xff] %vm108, %v841
    %920 = vst.msk [vmem:[#allocation3 + $0x190] sm:$0xff] %vm108, %v843
    %921 = vst.msk [vmem:[#allocation3 + $0x198] sm:$0xff] %vm108, %v845
    %922 = vst.msk [vmem:[#allocation3 + $0x1a0] sm:$0xff] %vm108, %v847
    %923 = vst.msk [vmem:[#allocation3 + $0x1a8] sm:$0xff] %vm108, %v849
    %924 = vst.msk [vmem:[#allocation3 + $0x1b0] sm:$0xff] %vm108, %v851
    %925 = vst.msk [vmem:[#allocation3 + $0x1b8] sm:$0xff] %vm108, %v853
    %926 = vst.msk [vmem:[#allocation3 + $0x1c0] sm:$0xff] %vm108, %v855
    %927 = vst.msk [vmem:[#allocation3 + $0x1c8] sm:$0xff] %vm108, %v857
    %928 = vst.msk [vmem:[#allocation3 + $0x1d0] sm:$0xff] %vm108, %v859
    %929 = vst.msk [vmem:[#allocation3 + $0x1d8] sm:$0xff] %vm108, %v861
    %930 = vst.msk [vmem:[#allocation3 + $0x1e0] sm:$0xff] %vm108, %v863
    %931 = vst.msk [vmem:[#allocation3 + $0x1e8] sm:$0xff] %vm108, %v865
    %932 = vst.msk [vmem:[#allocation3 + $0x1f0] sm:$0xff] %vm108, %v867
    %933 = vst.msk [vmem:[#allocation3 + $0x1f8] sm:$0xff] %vm108, %v869
    %v934 = vmul.f32 %v272, %v217
    %v935 = vmul.f32 %v273, %v218
    %v936 = vperm.slane %v934, 0
    %v937 = vlaneseq
    %v938 = vshrl.u32 %v937, 7
    %940 = vset.pattern.permute.xlu0 %v938
    %941 = vperm.xlu0 %940, %v936
    %v942 = vpop.permute.xlu0 %941
    %v943 = vlaneseq
    %v944 = vshrl.u32 %v943, 7
    %v945 = vadd.s32 %v944, 8
    %946 = vset.pattern.permute.xlu0 %v945
    %947 = vperm.xlu0 %946, %v936
    %v948 = vpop.permute.xlu0 %947
    %v949 = vlaneseq
    %v950 = vshrl.u32 %v949, 7
    %v951 = vadd.s32 %v950, 16
    %952 = vset.pattern.permute.xlu0 %v951
    %953 = vperm.xlu0 %952, %v936
    %v954 = vpop.permute.xlu0 %953
    %v955 = vlaneseq
    %v956 = vshrl.u32 %v955, 7
    %v957 = vadd.s32 %v956, 24
    %958 = vset.pattern.permute.xlu0 %v957
    %959 = vperm.xlu0 %958, %v936
    %v960 = vpop.permute.xlu0 %959
    %v961 = vperm.slane %v934, 1
    %v962 = vlaneseq
    %v963 = vshrl.u32 %v962, 7
    %965 = vset.pattern.permute.xlu0 %v963
    %966 = vperm.xlu0 %965, %v961
    %v967 = vpop.permute.xlu0 %966
    %v968 = vlaneseq
    %v969 = vshrl.u32 %v968, 7
    %v970 = vadd.s32 %v969, 8
    %971 = vset.pattern.permute.xlu0 %v970
    %972 = vperm.xlu0 %971, %v961
    %v973 = vpop.permute.xlu0 %972
    %v974 = vlaneseq
    %v975 = vshrl.u32 %v974, 7
    %v976 = vadd.s32 %v975, 16
    %977 = vset.pattern.permute.xlu0 %v976
    %978 = vperm.xlu0 %977, %v961
    %v979 = vpop.permute.xlu0 %978
    %v980 = vlaneseq
    %v981 = vshrl.u32 %v980, 7
    %v982 = vadd.s32 %v981, 24
    %983 = vset.pattern.permute.xlu0 %v982
    %984 = vperm.xlu0 %983, %v961
    %v985 = vpop.permute.xlu0 %984
    %v986 = vperm.slane %v934, 2
    %v987 = vlaneseq
    %v988 = vshrl.u32 %v987, 7
    %990 = vset.pattern.permute.xlu0 %v988
    %991 = vperm.xlu0 %990, %v986
    %v992 = vpop.permute.xlu0 %991
    %v993 = vlaneseq
    %v994 = vshrl.u32 %v993, 7
    %v995 = vadd.s32 %v994, 8
    %996 = vset.pattern.permute.xlu0 %v995
    %997 = vperm.xlu0 %996, %v986
    %v998 = vpop.permute.xlu0 %997
    %v999 = vlaneseq
    %v1000 = vshrl.u32 %v999, 7
    %v1001 = vadd.s32 %v1000, 16
    %1002 = vset.pattern.permute.xlu0 %v1001
    %1003 = vperm.xlu0 %1002, %v986
    %v1004 = vpop.permute.xlu0 %1003
    %v1005 = vlaneseq
    %v1006 = vshrl.u32 %v1005, 7
    %v1007 = vadd.s32 %v1006, 24
    %1008 = vset.pattern.permute.xlu0 %v1007
    %1009 = vperm.xlu0 %1008, %v986
    %v1010 = vpop.permute.xlu0 %1009
    %v1011 = vperm.slane %v934, 3
    %v1012 = vlaneseq
    %v1013 = vshrl.u32 %v1012, 7
    %1015 = vset.pattern.permute.xlu0 %v1013
    %1016 = vperm.xlu0 %1015, %v1011
    %v1017 = vpop.permute.xlu0 %1016
    %v1018 = vlaneseq
    %v1019 = vshrl.u32 %v1018, 7
    %v1020 = vadd.s32 %v1019, 8
    %1021 = vset.pattern.permute.xlu0 %v1020
    %1022 = vperm.xlu0 %1021, %v1011
    %v1023 = vpop.permute.xlu0 %1022
    %v1024 = vlaneseq
    %v1025 = vshrl.u32 %v1024, 7
    %v1026 = vadd.s32 %v1025, 16
    %1027 = vset.pattern.permute.xlu0 %v1026
    %1028 = vperm.xlu0 %1027, %v1011
    %v1029 = vpop.permute.xlu0 %1028
    %v1030 = vlaneseq
    %v1031 = vshrl.u32 %v1030, 7
    %v1032 = vadd.s32 %v1031, 24
    %1033 = vset.pattern.permute.xlu0 %v1032
    %1034 = vperm.xlu0 %1033, %v1011
    %v1035 = vpop.permute.xlu0 %1034
    %v1036 = vperm.slane %v934, 4
    %v1037 = vlaneseq
    %v1038 = vshrl.u32 %v1037, 7
    %1040 = vset.pattern.permute.xlu0 %v1038
    %1041 = vperm.xlu0 %1040, %v1036
    %v1042 = vpop.permute.xlu0 %1041
    %v1043 = vlaneseq
    %v1044 = vshrl.u32 %v1043, 7
    %v1045 = vadd.s32 %v1044, 8
    %1046 = vset.pattern.permute.xlu0 %v1045
    %1047 = vperm.xlu0 %1046, %v1036
    %v1048 = vpop.permute.xlu0 %1047
    %v1049 = vlaneseq
    %v1050 = vshrl.u32 %v1049, 7
    %v1051 = vadd.s32 %v1050, 16
    %1052 = vset.pattern.permute.xlu0 %v1051
    %1053 = vperm.xlu0 %1052, %v1036
    %v1054 = vpop.permute.xlu0 %1053
    %v1055 = vlaneseq
    %v1056 = vshrl.u32 %v1055, 7
    %v1057 = vadd.s32 %v1056, 24
    %1058 = vset.pattern.permute.xlu0 %v1057
    %1059 = vperm.xlu0 %1058, %v1036
    %v1060 = vpop.permute.xlu0 %1059
    %v1061 = vperm.slane %v934, 5
    %v1062 = vlaneseq
    %v1063 = vshrl.u32 %v1062, 7
    %1065 = vset.pattern.permute.xlu0 %v1063
    %1066 = vperm.xlu0 %1065, %v1061
    %v1067 = vpop.permute.xlu0 %1066
    %v1068 = vlaneseq
    %v1069 = vshrl.u32 %v1068, 7
    %v1070 = vadd.s32 %v1069, 8
    %1071 = vset.pattern.permute.xlu0 %v1070
    %1072 = vperm.xlu0 %1071, %v1061
    %v1073 = vpop.permute.xlu0 %1072
    %v1074 = vlaneseq
    %v1075 = vshrl.u32 %v1074, 7
    %v1076 = vadd.s32 %v1075, 16
    %1077 = vset.pattern.permute.xlu0 %v1076
    %1078 = vperm.xlu0 %1077, %v1061
    %v1079 = vpop.permute.xlu0 %1078
    %v1080 = vlaneseq
    %v1081 = vshrl.u32 %v1080, 7
    %v1082 = vadd.s32 %v1081, 24
    %1083 = vset.pattern.permute.xlu0 %v1082
    %1084 = vperm.xlu0 %1083, %v1061
    %v1085 = vpop.permute.xlu0 %1084
    %v1086 = vperm.slane %v934, 6
    %v1087 = vlaneseq
    %v1088 = vshrl.u32 %v1087, 7
    %1090 = vset.pattern.permute.xlu0 %v1088
    %1091 = vperm.xlu0 %1090, %v1086
    %v1092 = vpop.permute.xlu0 %1091
    %v1093 = vlaneseq
    %v1094 = vshrl.u32 %v1093, 7
    %v1095 = vadd.s32 %v1094, 8
    %1096 = vset.pattern.permute.xlu0 %v1095
    %1097 = vperm.xlu0 %1096, %v1086
    %v1098 = vpop.permute.xlu0 %1097
    %v1099 = vlaneseq
    %v1100 = vshrl.u32 %v1099, 7
    %v1101 = vadd.s32 %v1100, 16
    %1102 = vset.pattern.permute.xlu0 %v1101
    %1103 = vperm.xlu0 %1102, %v1086
    %v1104 = vpop.permute.xlu0 %1103
    %v1105 = vlaneseq
    %v1106 = vshrl.u32 %v1105, 7
    %v1107 = vadd.s32 %v1106, 24
    %1108 = vset.pattern.permute.xlu0 %v1107
    %1109 = vperm.xlu0 %1108, %v1086
    %v1110 = vpop.permute.xlu0 %1109
    %v1111 = vperm.slane %v934, 7
    %v1112 = vlaneseq
    %v1113 = vshrl.u32 %v1112, 7
    %1115 = vset.pattern.permute.xlu0 %v1113
    %1116 = vperm.xlu0 %1115, %v1111
    %v1117 = vpop.permute.xlu0 %1116
    %v1118 = vlaneseq
    %v1119 = vshrl.u32 %v1118, 7
    %v1120 = vadd.s32 %v1119, 8
    %1121 = vset.pattern.permute.xlu0 %v1120
    %1122 = vperm.xlu0 %1121, %v1111
    %v1123 = vpop.permute.xlu0 %1122
    %v1124 = vlaneseq
    %v1125 = vshrl.u32 %v1124, 7
    %v1126 = vadd.s32 %v1125, 16
    %1127 = vset.pattern.permute.xlu0 %v1126
    %1128 = vperm.xlu0 %1127, %v1111
    %v1129 = vpop.permute.xlu0 %1128
    %v1130 = vlaneseq
    %v1131 = vshrl.u32 %v1130, 7
    %v1132 = vadd.s32 %v1131, 24
    %1133 = vset.pattern.permute.xlu0 %v1132
    %1134 = vperm.xlu0 %1133, %v1111
    %v1135 = vpop.permute.xlu0 %1134
    %v1136 = vperm.slane %v935, 0
    %v1137 = vlaneseq
    %v1138 = vshrl.u32 %v1137, 7
    %1140 = vset.pattern.permute.xlu0 %v1138
    %1141 = vperm.xlu0 %1140, %v1136
    %v1142 = vpop.permute.xlu0 %1141
    %v1143 = vlaneseq
    %v1144 = vshrl.u32 %v1143, 7
    %v1145 = vadd.s32 %v1144, 8
    %1146 = vset.pattern.permute.xlu0 %v1145
    %1147 = vperm.xlu0 %1146, %v1136
    %v1148 = vpop.permute.xlu0 %1147
    %v1149 = vlaneseq
    %v1150 = vshrl.u32 %v1149, 7
    %v1151 = vadd.s32 %v1150, 16
    %1152 = vset.pattern.permute.xlu0 %v1151
    %1153 = vperm.xlu0 %1152, %v1136
    %v1154 = vpop.permute.xlu0 %1153
    %v1155 = vlaneseq
    %v1156 = vshrl.u32 %v1155, 7
    %v1157 = vadd.s32 %v1156, 24
    %1158 = vset.pattern.permute.xlu0 %v1157
    %1159 = vperm.xlu0 %1158, %v1136
    %v1160 = vpop.permute.xlu0 %1159
    %v1161 = vperm.slane %v935, 1
    %v1162 = vlaneseq
    %v1163 = vshrl.u32 %v1162, 7
    %1165 = vset.pattern.permute.xlu0 %v1163
    %1166 = vperm.xlu0 %1165, %v1161
    %v1167 = vpop.permute.xlu0 %1166
    %v1168 = vlaneseq
    %v1169 = vshrl.u32 %v1168, 7
    %v1170 = vadd.s32 %v1169, 8
    %1171 = vset.pattern.permute.xlu0 %v1170
    %1172 = vperm.xlu0 %1171, %v1161
    %v1173 = vpop.permute.xlu0 %1172
    %v1174 = vlaneseq
    %v1175 = vshrl.u32 %v1174, 7
    %v1176 = vadd.s32 %v1175, 16
    %1177 = vset.pattern.permute.xlu0 %v1176
    %1178 = vperm.xlu0 %1177, %v1161
    %v1179 = vpop.permute.xlu0 %1178
    %v1180 = vlaneseq
    %v1181 = vshrl.u32 %v1180, 7
    %v1182 = vadd.s32 %v1181, 24
    %1183 = vset.pattern.permute.xlu0 %v1182
    %1184 = vperm.xlu0 %1183, %v1161
    %v1185 = vpop.permute.xlu0 %1184
    %v1186 = vperm.slane %v935, 2
    %v1187 = vlaneseq
    %v1188 = vshrl.u32 %v1187, 7
    %1190 = vset.pattern.permute.xlu0 %v1188
    %1191 = vperm.xlu0 %1190, %v1186
    %v1192 = vpop.permute.xlu0 %1191
    %v1193 = vlaneseq
    %v1194 = vshrl.u32 %v1193, 7
    %v1195 = vadd.s32 %v1194, 8
    %1196 = vset.pattern.permute.xlu0 %v1195
    %1197 = vperm.xlu0 %1196, %v1186
    %v1198 = vpop.permute.xlu0 %1197
    %v1199 = vlaneseq
    %v1200 = vshrl.u32 %v1199, 7
    %v1201 = vadd.s32 %v1200, 16
    %1202 = vset.pattern.permute.xlu0 %v1201
    %1203 = vperm.xlu0 %1202, %v1186
    %v1204 = vpop.permute.xlu0 %1203
    %v1205 = vlaneseq
    %v1206 = vshrl.u32 %v1205, 7
    %v1207 = vadd.s32 %v1206, 24
    %1208 = vset.pattern.permute.xlu0 %v1207
    %1209 = vperm.xlu0 %1208, %v1186
    %v1210 = vpop.permute.xlu0 %1209
    %v1211 = vperm.slane %v935, 3
    %v1212 = vlaneseq
    %v1213 = vshrl.u32 %v1212, 7
    %1215 = vset.pattern.permute.xlu0 %v1213
    %1216 = vperm.xlu0 %1215, %v1211
    %v1217 = vpop.permute.xlu0 %1216
    %v1218 = vlaneseq
    %v1219 = vshrl.u32 %v1218, 7
    %v1220 = vadd.s32 %v1219, 8
    %1221 = vset.pattern.permute.xlu0 %v1220
    %1222 = vperm.xlu0 %1221, %v1211
    %v1223 = vpop.permute.xlu0 %1222
    %v1224 = vlaneseq
    %v1225 = vshrl.u32 %v1224, 7
    %v1226 = vadd.s32 %v1225, 16
    %1227 = vset.pattern.permute.xlu0 %v1226
    %1228 = vperm.xlu0 %1227, %v1211
    %v1229 = vpop.permute.xlu0 %1228
    %v1230 = vlaneseq
    %v1231 = vshrl.u32 %v1230, 7
    %v1232 = vadd.s32 %v1231, 24
    %1233 = vset.pattern.permute.xlu0 %v1232
    %1234 = vperm.xlu0 %1233, %v1211
    %v1235 = vpop.permute.xlu0 %1234
    %v1236 = vperm.slane %v935, 4
    %v1237 = vlaneseq
    %v1238 = vshrl.u32 %v1237, 7
    %1240 = vset.pattern.permute.xlu0 %v1238
    %1241 = vperm.xlu0 %1240, %v1236
    %v1242 = vpop.permute.xlu0 %1241
    %v1243 = vlaneseq
    %v1244 = vshrl.u32 %v1243, 7
    %v1245 = vadd.s32 %v1244, 8
    %1246 = vset.pattern.permute.xlu0 %v1245
    %1247 = vperm.xlu0 %1246, %v1236
    %v1248 = vpop.permute.xlu0 %1247
    %v1249 = vlaneseq
    %v1250 = vshrl.u32 %v1249, 7
    %v1251 = vadd.s32 %v1250, 16
    %1252 = vset.pattern.permute.xlu0 %v1251
    %1253 = vperm.xlu0 %1252, %v1236
    %v1254 = vpop.permute.xlu0 %1253
    %v1255 = vlaneseq
    %v1256 = vshrl.u32 %v1255, 7
    %v1257 = vadd.s32 %v1256, 24
    %1258 = vset.pattern.permute.xlu0 %v1257
    %1259 = vperm.xlu0 %1258, %v1236
    %v1260 = vpop.permute.xlu0 %1259
    %v1261 = vperm.slane %v935, 5
    %v1262 = vlaneseq
    %v1263 = vshrl.u32 %v1262, 7
    %1265 = vset.pattern.permute.xlu0 %v1263
    %1266 = vperm.xlu0 %1265, %v1261
    %v1267 = vpop.permute.xlu0 %1266
    %v1268 = vlaneseq
    %v1269 = vshrl.u32 %v1268, 7
    %v1270 = vadd.s32 %v1269, 8
    %1271 = vset.pattern.permute.xlu0 %v1270
    %1272 = vperm.xlu0 %1271, %v1261
    %v1273 = vpop.permute.xlu0 %1272
    %v1274 = vlaneseq
    %v1275 = vshrl.u32 %v1274, 7
    %v1276 = vadd.s32 %v1275, 16
    %1277 = vset.pattern.permute.xlu0 %v1276
    %1278 = vperm.xlu0 %1277, %v1261
    %v1279 = vpop.permute.xlu0 %1278
    %v1280 = vlaneseq
    %v1281 = vshrl.u32 %v1280, 7
    %v1282 = vadd.s32 %v1281, 24
    %1283 = vset.pattern.permute.xlu0 %v1282
    %1284 = vperm.xlu0 %1283, %v1261
    %v1285 = vpop.permute.xlu0 %1284
    %v1286 = vperm.slane %v935, 6
    %v1287 = vlaneseq
    %v1288 = vshrl.u32 %v1287, 7
    %1290 = vset.pattern.permute.xlu0 %v1288
    %1291 = vperm.xlu0 %1290, %v1286
    %v1292 = vpop.permute.xlu0 %1291
    %v1293 = vlaneseq
    %v1294 = vshrl.u32 %v1293, 7
    %v1295 = vadd.s32 %v1294, 8
    %1296 = vset.pattern.permute.xlu0 %v1295
    %1297 = vperm.xlu0 %1296, %v1286
    %v1298 = vpop.permute.xlu0 %1297
    %v1299 = vlaneseq
    %v1300 = vshrl.u32 %v1299, 7
    %v1301 = vadd.s32 %v1300, 16
    %1302 = vset.pattern.permute.xlu0 %v1301
    %1303 = vperm.xlu0 %1302, %v1286
    %v1304 = vpop.permute.xlu0 %1303
    %v1305 = vlaneseq
    %v1306 = vshrl.u32 %v1305, 7
    %v1307 = vadd.s32 %v1306, 24
    %1308 = vset.pattern.permute.xlu0 %v1307
    %1309 = vperm.xlu0 %1308, %v1286
    %v1310 = vpop.permute.xlu0 %1309
    %v1311 = vperm.slane %v935, 7
    %v1312 = vlaneseq
    %v1313 = vshrl.u32 %v1312, 7
    %1315 = vset.pattern.permute.xlu0 %v1313
    %1316 = vperm.xlu0 %1315, %v1311
    %v1317 = vpop.permute.xlu0 %1316
    %v1318 = vlaneseq
    %v1319 = vshrl.u32 %v1318, 7
    %v1320 = vadd.s32 %v1319, 8
    %1321 = vset.pattern.permute.xlu0 %v1320
    %1322 = vperm.xlu0 %1321, %v1311
    %v1323 = vpop.permute.xlu0 %1322
    %v1324 = vlaneseq
    %v1325 = vshrl.u32 %v1324, 7
    %v1326 = vadd.s32 %v1325, 16
    %1327 = vset.pattern.permute.xlu0 %v1326
    %1328 = vperm.xlu0 %1327, %v1311
    %v1329 = vpop.permute.xlu0 %1328
    %v1330 = vlaneseq
    %v1331 = vshrl.u32 %v1330, 7
    %v1332 = vadd.s32 %v1331, 24
    %1333 = vset.pattern.permute.xlu0 %v1332
    %1334 = vperm.xlu0 %1333, %v1311
    %v1335 = vpop.permute.xlu0 %1334
    %v1338 = vrot.slane %v247, 1
    %v1339 = vrot.slane %v247, 2
    %v1340 = vrot.slane %v247, 3
    %v1341 = vrot.slane %v247, 4
    %v1342 = vrot.slane %v247, 5
    %v1343 = vrot.slane %v247, 6
    %v1344 = vrot.slane %v247, 7
    %v1345 = vrot.slane %v250, 1
    %v1346 = vrot.slane %v250, 2
    %v1347 = vrot.slane %v250, 3
    %v1348 = vrot.slane %v250, 4
    %v1349 = vrot.slane %v250, 5
    %v1350 = vrot.slane %v250, 6
    %v1351 = vrot.slane %v250, 7
    %v1352 = vperm.slane %v247, 0
    %v1353 = vperm.slane %v1338, 0
    %v1354 = vperm.slane %v1339, 0
    %v1355 = vperm.slane %v1340, 0
    %v1356 = vperm.slane %v1341, 0
    %v1357 = vperm.slane %v1342, 0
    %v1358 = vperm.slane %v1343, 0
    %v1359 = vperm.slane %v1344, 0
    %v1360 = vperm.slane %v250, 0
    %v1361 = vperm.slane %v1345, 0
    %v1362 = vperm.slane %v1346, 0
    %v1363 = vperm.slane %v1347, 0
    %v1364 = vperm.slane %v1348, 0
    %v1365 = vperm.slane %v1349, 0
    %v1366 = vperm.slane %v1350, 0
    %v1367 = vperm.slane %v1351, 0
    %v1384 = vmul.f32 %v942, %v1352
    %v1385 = vmul.f32 %v948, %v1352
    %v1386 = vmul.f32 %v954, %v1352
    %v1387 = vmul.f32 %v960, %v1352
    %v1388 = vmul.f32 %v967, %v1353
    %v1389 = vmul.f32 %v973, %v1353
    %v1390 = vmul.f32 %v979, %v1353
    %v1391 = vmul.f32 %v985, %v1353
    %v1392 = vmul.f32 %v992, %v1354
    %v1393 = vmul.f32 %v998, %v1354
    %v1394 = vmul.f32 %v1004, %v1354
    %v1395 = vmul.f32 %v1010, %v1354
    %v1396 = vmul.f32 %v1017, %v1355
    %v1397 = vmul.f32 %v1023, %v1355
    %v1398 = vmul.f32 %v1029, %v1355
    %v1399 = vmul.f32 %v1035, %v1355
    %v1400 = vmul.f32 %v1042, %v1356
    %v1401 = vmul.f32 %v1048, %v1356
    %v1402 = vmul.f32 %v1054, %v1356
    %v1403 = vmul.f32 %v1060, %v1356
    %v1404 = vmul.f32 %v1067, %v1357
    %v1405 = vmul.f32 %v1073, %v1357
    %v1406 = vmul.f32 %v1079, %v1357
    %v1407 = vmul.f32 %v1085, %v1357
    %v1408 = vmul.f32 %v1092, %v1358
    %v1409 = vmul.f32 %v1098, %v1358
    %v1410 = vmul.f32 %v1104, %v1358
    %v1411 = vmul.f32 %v1110, %v1358
    %v1412 = vmul.f32 %v1117, %v1359
    %v1413 = vmul.f32 %v1123, %v1359
    %v1414 = vmul.f32 %v1129, %v1359
    %v1415 = vmul.f32 %v1135, %v1359
    %v1416 = vmul.f32 %v1142, %v1360
    %v1417 = vmul.f32 %v1148, %v1360
    %v1418 = vmul.f32 %v1154, %v1360
    %v1419 = vmul.f32 %v1160, %v1360
    %v1420 = vmul.f32 %v1167, %v1361
    %v1421 = vmul.f32 %v1173, %v1361
    %v1422 = vmul.f32 %v1179, %v1361
    %v1423 = vmul.f32 %v1185, %v1361
    %v1424 = vmul.f32 %v1192, %v1362
    %v1425 = vmul.f32 %v1198, %v1362
    %v1426 = vmul.f32 %v1204, %v1362
    %v1427 = vmul.f32 %v1210, %v1362
    %v1428 = vmul.f32 %v1217, %v1363
    %v1429 = vmul.f32 %v1223, %v1363
    %v1430 = vmul.f32 %v1229, %v1363
    %v1431 = vmul.f32 %v1235, %v1363
    %v1432 = vmul.f32 %v1242, %v1364
    %v1433 = vmul.f32 %v1248, %v1364
    %v1434 = vmul.f32 %v1254, %v1364
    %v1435 = vmul.f32 %v1260, %v1364
    %v1436 = vmul.f32 %v1267, %v1365
    %v1437 = vmul.f32 %v1273, %v1365
    %v1438 = vmul.f32 %v1279, %v1365
    %v1439 = vmul.f32 %v1285, %v1365
    %v1440 = vmul.f32 %v1292, %v1366
    %v1441 = vmul.f32 %v1298, %v1366
    %v1442 = vmul.f32 %v1304, %v1366
    %v1443 = vmul.f32 %v1310, %v1366
    %v1444 = vmul.f32 %v1317, %v1367
    %v1445 = vmul.f32 %v1323, %v1367
    %v1446 = vmul.f32 %v1329, %v1367
    %v1447 = vmul.f32 %v1335, %v1367
    %1512 = vrot.lane.b32.xlu0 %v1384, 96
    %v1513 = vpop.permute.xlu0 %1512
    %1514 = vrot.lane.b32.xlu0 %v1385, 96
    %v1515 = vpop.permute.xlu0 %1514
    %1516 = vrot.lane.b32.xlu0 %v1386, 96
    %v1517 = vpop.permute.xlu0 %1516
    %1518 = vrot.lane.b32.xlu0 %v1387, 96
    %v1519 = vpop.permute.xlu0 %1518
    %1520 = vrot.lane.b32.xlu0 %v1388, 96
    %v1521 = vpop.permute.xlu0 %1520
    %1522 = vrot.lane.b32.xlu0 %v1389, 96
    %v1523 = vpop.permute.xlu0 %1522
    %1524 = vrot.lane.b32.xlu0 %v1390, 96
    %v1525 = vpop.permute.xlu0 %1524
    %1526 = vrot.lane.b32.xlu0 %v1391, 96
    %v1527 = vpop.permute.xlu0 %1526
    %1528 = vrot.lane.b32.xlu0 %v1392, 96
    %v1529 = vpop.permute.xlu0 %1528
    %1530 = vrot.lane.b32.xlu0 %v1393, 96
    %v1531 = vpop.permute.xlu0 %1530
    %1532 = vrot.lane.b32.xlu0 %v1394, 96
    %v1533 = vpop.permute.xlu0 %1532
    %1534 = vrot.lane.b32.xlu0 %v1395, 96
    %v1535 = vpop.permute.xlu0 %1534
    %1536 = vrot.lane.b32.xlu0 %v1396, 96
    %v1537 = vpop.permute.xlu0 %1536
    %1538 = vrot.lane.b32.xlu0 %v1397, 96
    %v1539 = vpop.permute.xlu0 %1538
    %1540 = vrot.lane.b32.xlu0 %v1398, 96
    %v1541 = vpop.permute.xlu0 %1540
    %1542 = vrot.lane.b32.xlu0 %v1399, 96
    %v1543 = vpop.permute.xlu0 %1542
    %1544 = vrot.lane.b32.xlu0 %v1400, 96
    %v1545 = vpop.permute.xlu0 %1544
    %1546 = vrot.lane.b32.xlu0 %v1401, 96
    %v1547 = vpop.permute.xlu0 %1546
    %1548 = vrot.lane.b32.xlu0 %v1402, 96
    %v1549 = vpop.permute.xlu0 %1548
    %1550 = vrot.lane.b32.xlu0 %v1403, 96
    %v1551 = vpop.permute.xlu0 %1550
    %1552 = vrot.lane.b32.xlu0 %v1404, 96
    %v1553 = vpop.permute.xlu0 %1552
    %1554 = vrot.lane.b32.xlu0 %v1405, 96
    %v1555 = vpop.permute.xlu0 %1554
    %1556 = vrot.lane.b32.xlu0 %v1406, 96
    %v1557 = vpop.permute.xlu0 %1556
    %1558 = vrot.lane.b32.xlu0 %v1407, 96
    %v1559 = vpop.permute.xlu0 %1558
    %1560 = vrot.lane.b32.xlu0 %v1408, 96
    %v1561 = vpop.permute.xlu0 %1560
    %1562 = vrot.lane.b32.xlu0 %v1409, 96
    %v1563 = vpop.permute.xlu0 %1562
    %1564 = vrot.lane.b32.xlu0 %v1410, 96
    %v1565 = vpop.permute.xlu0 %1564
    %1566 = vrot.lane.b32.xlu0 %v1411, 96
    %v1567 = vpop.permute.xlu0 %1566
    %1568 = vrot.lane.b32.xlu0 %v1412, 96
    %v1569 = vpop.permute.xlu0 %1568
    %1570 = vrot.lane.b32.xlu0 %v1413, 96
    %v1571 = vpop.permute.xlu0 %1570
    %1572 = vrot.lane.b32.xlu0 %v1414, 96
    %v1573 = vpop.permute.xlu0 %1572
    %1574 = vrot.lane.b32.xlu0 %v1415, 96
    %v1575 = vpop.permute.xlu0 %1574
    %1576 = vrot.lane.b32.xlu0 %v1416, 96
    %v1577 = vpop.permute.xlu0 %1576
    %1578 = vrot.lane.b32.xlu0 %v1417, 96
    %v1579 = vpop.permute.xlu0 %1578
    %1580 = vrot.lane.b32.xlu0 %v1418, 96
    %v1581 = vpop.permute.xlu0 %1580
    %1582 = vrot.lane.b32.xlu0 %v1419, 96
    %v1583 = vpop.permute.xlu0 %1582
    %1584 = vrot.lane.b32.xlu0 %v1420, 96
    %v1585 = vpop.permute.xlu0 %1584
    %1586 = vrot.lane.b32.xlu0 %v1421, 96
    %v1587 = vpop.permute.xlu0 %1586
    %1588 = vrot.lane.b32.xlu0 %v1422, 96
    %v1589 = vpop.permute.xlu0 %1588
    %1590 = vrot.lane.b32.xlu0 %v1423, 96
    %v1591 = vpop.permute.xlu0 %1590
    %1592 = vrot.lane.b32.xlu0 %v1424, 96
    %v1593 = vpop.permute.xlu0 %1592
    %1594 = vrot.lane.b32.xlu0 %v1425, 96
    %v1595 = vpop.permute.xlu0 %1594
    %1596 = vrot.lane.b32.xlu0 %v1426, 96
    %v1597 = vpop.permute.xlu0 %1596
    %1598 = vrot.lane.b32.xlu0 %v1427, 96
    %v1599 = vpop.permute.xlu0 %1598
    %1600 = vrot.lane.b32.xlu0 %v1428, 96
    %v1601 = vpop.permute.xlu0 %1600
    %1602 = vrot.lane.b32.xlu0 %v1429, 96
    %v1603 = vpop.permute.xlu0 %1602
    %1604 = vrot.lane.b32.xlu0 %v1430, 96
    %v1605 = vpop.permute.xlu0 %1604
    %1606 = vrot.lane.b32.xlu0 %v1431, 96
    %v1607 = vpop.permute.xlu0 %1606
    %1608 = vrot.lane.b32.xlu0 %v1432, 96
    %v1609 = vpop.permute.xlu0 %1608
    %1610 = vrot.lane.b32.xlu0 %v1433, 96
    %v1611 = vpop.permute.xlu0 %1610
    %1612 = vrot.lane.b32.xlu0 %v1434, 96
    %v1613 = vpop.permute.xlu0 %1612
    %1614 = vrot.lane.b32.xlu0 %v1435, 96
    %v1615 = vpop.permute.xlu0 %1614
    %1616 = vrot.lane.b32.xlu0 %v1436, 96
    %v1617 = vpop.permute.xlu0 %1616
    %1618 = vrot.lane.b32.xlu0 %v1437, 96
    %v1619 = vpop.permute.xlu0 %1618
    %1620 = vrot.lane.b32.xlu0 %v1438, 96
    %v1621 = vpop.permute.xlu0 %1620
    %1622 = vrot.lane.b32.xlu0 %v1439, 96
    %v1623 = vpop.permute.xlu0 %1622
    %1624 = vrot.lane.b32.xlu0 %v1440, 96
    %v1625 = vpop.permute.xlu0 %1624
    %1626 = vrot.lane.b32.xlu0 %v1441, 96
    %v1627 = vpop.permute.xlu0 %1626
    %1628 = vrot.lane.b32.xlu0 %v1442, 96
    %v1629 = vpop.permute.xlu0 %1628
    %1630 = vrot.lane.b32.xlu0 %v1443, 96
    %v1631 = vpop.permute.xlu0 %1630
    %1632 = vrot.lane.b32.xlu0 %v1444, 96
    %v1633 = vpop.permute.xlu0 %1632
    %1634 = vrot.lane.b32.xlu0 %v1445, 96
    %v1635 = vpop.permute.xlu0 %1634
    %1636 = vrot.lane.b32.xlu0 %v1446, 96
    %v1637 = vpop.permute.xlu0 %1636
    %1638 = vrot.lane.b32.xlu0 %v1447, 96
    %v1639 = vpop.permute.xlu0 %1638
    %1704 = vst.msk [vmem:[#allocation4] sm:$0xff] %vm108, %v1513
    %1705 = vst.msk [vmem:[#allocation4 + $0x8] sm:$0xff] %vm108, %v1515
    %1706 = vst.msk [vmem:[#allocation4 + $0x10] sm:$0xff] %vm108, %v1517
    %1707 = vst.msk [vmem:[#allocation4 + $0x18] sm:$0xff] %vm108, %v1519
    %1708 = vst.msk [vmem:[#allocation4 + $0x20] sm:$0xff] %vm108, %v1521
    %1709 = vst.msk [vmem:[#allocation4 + $0x28] sm:$0xff] %vm108, %v1523
    %1710 = vst.msk [vmem:[#allocation4 + $0x30] sm:$0xff] %vm108, %v1525
    %1711 = vst.msk [vmem:[#allocation4 + $0x38] sm:$0xff] %vm108, %v1527
    %1712 = vst.msk [vmem:[#allocation4 + $0x40] sm:$0xff] %vm108, %v1529
    %1713 = vst.msk [vmem:[#allocation4 + $0x48] sm:$0xff] %vm108, %v1531
    %1714 = vst.msk [vmem:[#allocation4 + $0x50] sm:$0xff] %vm108, %v1533
    %1715 = vst.msk [vmem:[#allocation4 + $0x58] sm:$0xff] %vm108, %v1535
    %1716 = vst.msk [vmem:[#allocation4 + $0x60] sm:$0xff] %vm108, %v1537
    %1717 = vst.msk [vmem:[#allocation4 + $0x68] sm:$0xff] %vm108, %v1539
    %1718 = vst.msk [vmem:[#allocation4 + $0x70] sm:$0xff] %vm108, %v1541
    %1719 = vst.msk [vmem:[#allocation4 + $0x78] sm:$0xff] %vm108, %v1543
    %1720 = vst.msk [vmem:[#allocation4 + $0x80] sm:$0xff] %vm108, %v1545
    %1721 = vst.msk [vmem:[#allocation4 + $0x88] sm:$0xff] %vm108, %v1547
    %1722 = vst.msk [vmem:[#allocation4 + $0x90] sm:$0xff] %vm108, %v1549
    %1723 = vst.msk [vmem:[#allocation4 + $0x98] sm:$0xff] %vm108, %v1551
    %1724 = vst.msk [vmem:[#allocation4 + $0xa0] sm:$0xff] %vm108, %v1553
    %1725 = vst.msk [vmem:[#allocation4 + $0xa8] sm:$0xff] %vm108, %v1555
    %1726 = vst.msk [vmem:[#allocation4 + $0xb0] sm:$0xff] %vm108, %v1557
    %1727 = vst.msk [vmem:[#allocation4 + $0xb8] sm:$0xff] %vm108, %v1559
    %1728 = vst.msk [vmem:[#allocation4 + $0xc0] sm:$0xff] %vm108, %v1561
    %1729 = vst.msk [vmem:[#allocation4 + $0xc8] sm:$0xff] %vm108, %v1563
    %1730 = vst.msk [vmem:[#allocation4 + $0xd0] sm:$0xff] %vm108, %v1565
    %1731 = vst.msk [vmem:[#allocation4 + $0xd8] sm:$0xff] %vm108, %v1567
    %1732 = vst.msk [vmem:[#allocation4 + $0xe0] sm:$0xff] %vm108, %v1569
    %1733 = vst.msk [vmem:[#allocation4 + $0xe8] sm:$0xff] %vm108, %v1571
    %1734 = vst.msk [vmem:[#allocation4 + $0xf0] sm:$0xff] %vm108, %v1573
    %1735 = vst.msk [vmem:[#allocation4 + $0xf8] sm:$0xff] %vm108, %v1575
    %1736 = vst.msk [vmem:[#allocation4 + $0x100] sm:$0xff] %vm108, %v1577
    %1737 = vst.msk [vmem:[#allocation4 + $0x108] sm:$0xff] %vm108, %v1579
    %1738 = vst.msk [vmem:[#allocation4 + $0x110] sm:$0xff] %vm108, %v1581
    %1739 = vst.msk [vmem:[#allocation4 + $0x118] sm:$0xff] %vm108, %v1583
    %1740 = vst.msk [vmem:[#allocation4 + $0x120] sm:$0xff] %vm108, %v1585
    %1741 = vst.msk [vmem:[#allocation4 + $0x128] sm:$0xff] %vm108, %v1587
    %1742 = vst.msk [vmem:[#allocation4 + $0x130] sm:$0xff] %vm108, %v1589
    %1743 = vst.msk [vmem:[#allocation4 + $0x138] sm:$0xff] %vm108, %v1591
    %1744 = vst.msk [vmem:[#allocation4 + $0x140] sm:$0xff] %vm108, %v1593
    %1745 = vst.msk [vmem:[#allocation4 + $0x148] sm:$0xff] %vm108, %v1595
    %1746 = vst.msk [vmem:[#allocation4 + $0x150] sm:$0xff] %vm108, %v1597
    %1747 = vst.msk [vmem:[#allocation4 + $0x158] sm:$0xff] %vm108, %v1599
    %1748 = vst.msk [vmem:[#allocation4 + $0x160] sm:$0xff] %vm108, %v1601
    %1749 = vst.msk [vmem:[#allocation4 + $0x168] sm:$0xff] %vm108, %v1603
    %1750 = vst.msk [vmem:[#allocation4 + $0x170] sm:$0xff] %vm108, %v1605
    %1751 = vst.msk [vmem:[#allocation4 + $0x178] sm:$0xff] %vm108, %v1607
    %1752 = vst.msk [vmem:[#allocation4 + $0x180] sm:$0xff] %vm108, %v1609
    %1753 = vst.msk [vmem:[#allocation4 + $0x188] sm:$0xff] %vm108, %v1611
    %1754 = vst.msk [vmem:[#allocation4 + $0x190] sm:$0xff] %vm108, %v1613
    %1755 = vst.msk [vmem:[#allocation4 + $0x198] sm:$0xff] %vm108, %v1615
    %1756 = vst.msk [vmem:[#allocation4 + $0x1a0] sm:$0xff] %vm108, %v1617
    %1757 = vst.msk [vmem:[#allocation4 + $0x1a8] sm:$0xff] %vm108, %v1619
    %1758 = vst.msk [vmem:[#allocation4 + $0x1b0] sm:$0xff] %vm108, %v1621
    %1759 = vst.msk [vmem:[#allocation4 + $0x1b8] sm:$0xff] %vm108, %v1623
    %1760 = vst.msk [vmem:[#allocation4 + $0x1c0] sm:$0xff] %vm108, %v1625
    %1761 = vst.msk [vmem:[#allocation4 + $0x1c8] sm:$0xff] %vm108, %v1627
    %1762 = vst.msk [vmem:[#allocation4 + $0x1d0] sm:$0xff] %vm108, %v1629
    %1763 = vst.msk [vmem:[#allocation4 + $0x1d8] sm:$0xff] %vm108, %v1631
    %1764 = vst.msk [vmem:[#allocation4 + $0x1e0] sm:$0xff] %vm108, %v1633
    %1765 = vst.msk [vmem:[#allocation4 + $0x1e8] sm:$0xff] %vm108, %v1635
    %1766 = vst.msk [vmem:[#allocation4 + $0x1f0] sm:$0xff] %vm108, %v1637
    %1767 = vst.msk [vmem:[#allocation4 + $0x1f8] sm:$0xff] %vm108, %v1639
    %v1768 = vld [vmem:[#allocation3] sm:$0xff]
    %v1769 = vld [vmem:[#allocation3 + $0x8] sm:$0xff]
    %v1770 = vld [vmem:[#allocation3 + $0x10] sm:$0xff]
    %v1771 = vld [vmem:[#allocation3 + $0x18] sm:$0xff]
    %v1772 = vld [vmem:[#allocation3 + $0x100] sm:$0xff]
    %v1773 = vld [vmem:[#allocation3 + $0x108] sm:$0xff]
    %v1774 = vld [vmem:[#allocation3 + $0x110] sm:$0xff]
    %v1775 = vld [vmem:[#allocation3 + $0x118] sm:$0xff]
    %v1776 = vmul.f32 %v1768, 0.0
    %v1777 = vmul.f32 %v1769, 0.0
    %v1778 = vmul.f32 %v1770, 0.0
    %v1779 = vmul.f32 %v1771, 0.0
    %v1780 = vmul.f32 %v1772, 0.0
    %v1781 = vmul.f32 %v1773, 0.0
    %v1782 = vmul.f32 %v1774, 0.0
    %v1783 = vmul.f32 %v1775, 0.0
    %v1784 = vld [vmem:[#allocation4] sm:$0xff]
    %v1785 = vld [vmem:[#allocation4 + $0x8] sm:$0xff]
    %v1786 = vld [vmem:[#allocation4 + $0x10] sm:$0xff]
    %v1787 = vld [vmem:[#allocation4 + $0x18] sm:$0xff]
    %v1788 = vld [vmem:[#allocation4 + $0x100] sm:$0xff]
    %v1789 = vld [vmem:[#allocation4 + $0x108] sm:$0xff]
    %v1790 = vld [vmem:[#allocation4 + $0x110] sm:$0xff]
    %v1791 = vld [vmem:[#allocation4 + $0x118] sm:$0xff]
    %v1792 = vadd.f32 %v1776, %v1784
    %v1793 = vadd.f32 %v1777, %v1785
    %v1794 = vadd.f32 %v1778, %v1786
    %v1795 = vadd.f32 %v1779, %v1787
    %v1796 = vadd.f32 %v1780, %v1788
    %v1797 = vadd.f32 %v1781, %v1789
    %v1798 = vadd.f32 %v1782, %v1790
    %v1799 = vadd.f32 %v1783, %v1791
    %v1800 = vperm.slane %v247, 0
    %v1801 = vperm.slane %v250, 0
    %1804 = vrot.lane.b32.xlu0 %v1800, 64
    %v1805 = vpop.permute.xlu0 %1804
    %1806 = vrot.lane.b32.xlu0 %v1801, 64
    %v1807 = vpop.permute.xlu0 %1806
    %v1810 = vmul.f32 %v1792, %v1805
    %v1811 = vmul.f32 %v1793, %v1805
    %v1812 = vmul.f32 %v1794, %v1805
    %v1813 = vmul.f32 %v1795, %v1805
    %v1814 = vmul.f32 %v1796, %v1807
    %v1815 = vmul.f32 %v1797, %v1807
    %v1816 = vmul.f32 %v1798, %v1807
    %v1817 = vmul.f32 %v1799, %v1807
    %v1818 = vsel %vm108, %v1810, 0.0
    %1819 = vadd.xlane.f32.xlu0 %v1818
    %v1820 = vpop.xlane.xlu0 %1819
    %v1821 = vsel %vm108, %v1811, 0.0
    %1822 = vadd.xlane.f32.xlu0 %v1821
    %v1823 = vpop.xlane.xlu0 %1822
    %v1824 = vsel %vm108, %v1812, 0.0
    %1825 = vadd.xlane.f32.xlu0 %v1824
    %v1826 = vpop.xlane.xlu0 %1825
    %v1827 = vsel %vm108, %v1813, 0.0
    %1828 = vadd.xlane.f32.xlu0 %v1827
    %v1829 = vpop.xlane.xlu0 %1828
    %v1830 = vsel %vm108, %v1814, 0.0
    %1831 = vadd.xlane.f32.xlu0 %v1830
    %v1832 = vpop.xlane.xlu0 %1831
    %v1833 = vsel %vm108, %v1815, 0.0
    %1834 = vadd.xlane.f32.xlu0 %v1833
    %v1835 = vpop.xlane.xlu0 %1834
    %v1836 = vsel %vm108, %v1816, 0.0
    %1837 = vadd.xlane.f32.xlu0 %v1836
    %v1838 = vpop.xlane.xlu0 %1837
    %v1839 = vsel %vm108, %v1817, 0.0
    %1840 = vadd.xlane.f32.xlu0 %v1839
    %v1841 = vpop.xlane.xlu0 %1840
    %v1850 = vlaneseq
    %v1851 = vand.u32 %v1850, 127
    %v1852 = vperm.slane %v1820, %v1851
    %v1853 = vadd.s32 %v1851, 4294967288
    %v1854 = vperm.slane %v1823, %v1853
    %vm1855 = vcmask 130112
    %v1856 = vsel %vm1855, %v1854, %v1852
    %v1857 = vadd.s32 %v1851, 4294967280
    %v1858 = vperm.slane %v1826, %v1857
    %vm1859 = vcmask 195712
    %v1860 = vsel %vm1859, %v1858, %v1856
    %v1861 = vadd.s32 %v1851, 4294967272
    %v1862 = vperm.slane %v1829, %v1861
    %vm1863 = vcmask 261312
    %v1864 = vsel %vm1863, %v1862, %v1860
    %v1865 = vperm.slane %v1832, %v1851
    %v1866 = vperm.slane %v1835, %v1853
    %v1867 = vsel %vm1855, %v1866, %v1865
    %v1868 = vperm.slane %v1838, %v1857
    %v1869 = vsel %vm1859, %v1868, %v1867
    %v1870 = vperm.slane %v1841, %v1861
    %v1871 = vsel %vm1863, %v1870, %v1869
    %vm1874 = vcmask 253952
    %1875 = vst.msk [vmem:[#allocation5] sm:$0x1] %vm1874, %v1864
    %1876 = vst.msk [vmem:[#allocation5 + $0x8] sm:$0x1] %vm1874, %v1871
    %s1877 = scalar_lea.vmem [#allocation3], 32
    %v1878 = vld [vmem:[%s1877] sm:$0xff]
    %v1879 = vld [vmem:[%s1877 + $0x8] sm:$0xff]
    %v1880 = vld [vmem:[%s1877 + $0x10] sm:$0xff]
    %v1881 = vld [vmem:[%s1877 + $0x18] sm:$0xff]
    %v1882 = vld [vmem:[%s1877 + $0x100] sm:$0xff]
    %v1883 = vld [vmem:[%s1877 + $0x108] sm:$0xff]
    %v1884 = vld [vmem:[%s1877 + $0x110] sm:$0xff]
    %v1885 = vld [vmem:[%s1877 + $0x118] sm:$0xff]
    %v1886 = vmul.f32 %v1878, %v1792
    %v1887 = vmul.f32 %v1879, %v1793
    %v1888 = vmul.f32 %v1880, %v1794
    %v1889 = vmul.f32 %v1881, %v1795
    %v1890 = vmul.f32 %v1882, %v1796
    %v1891 = vmul.f32 %v1883, %v1797
    %v1892 = vmul.f32 %v1884, %v1798
    %v1893 = vmul.f32 %v1885, %v1799
    %s1894 = scalar_lea.vmem [#allocation4], 32
    %v1895 = vld [vmem:[%s1894] sm:$0xff]
    %v1896 = vld [vmem:[%s1894 + $0x8] sm:$0xff]
    %v1897 = vld [vmem:[%s1894 + $0x10] sm:$0xff]
    %v1898 = vld [vmem:[%s1894 + $0x18] sm:$0xff]
    %v1899 = vld [vmem:[%s1894 + $0x100] sm:$0xff]
    %v1900 = vld [vmem:[%s1894 + $0x108] sm:$0xff]
    %v1901 = vld [vmem:[%s1894 + $0x110] sm:$0xff]
    %v1902 = vld [vmem:[%s1894 + $0x118] sm:$0xff]
    %v1903 = vadd.f32 %v1886, %v1895
    %v1904 = vadd.f32 %v1887, %v1896
    %v1905 = vadd.f32 %v1888, %v1897
    %v1906 = vadd.f32 %v1889, %v1898
    %v1907 = vadd.f32 %v1890, %v1899
    %v1908 = vadd.f32 %v1891, %v1900
    %v1909 = vadd.f32 %v1892, %v1901
    %v1910 = vadd.f32 %v1893, %v1902
    %v1911 = vperm.slane %v247, 1
    %v1912 = vperm.slane %v250, 1
    %1915 = vrot.lane.b32.xlu0 %v1911, 64
    %v1916 = vpop.permute.xlu0 %1915
    %1917 = vrot.lane.b32.xlu0 %v1912, 64
    %v1918 = vpop.permute.xlu0 %1917
    %v1921 = vmul.f32 %v1903, %v1916
    %v1922 = vmul.f32 %v1904, %v1916
    %v1923 = vmul.f32 %v1905, %v1916
    %v1924 = vmul.f32 %v1906, %v1916
    %v1925 = vmul.f32 %v1907, %v1918
    %v1926 = vmul.f32 %v1908, %v1918
    %v1927 = vmul.f32 %v1909, %v1918
    %v1928 = vmul.f32 %v1910, %v1918
    %v1929 = vsel %vm108, %v1921, 0.0
    %1930 = vadd.xlane.f32.xlu0 %v1929
    %v1931 = vpop.xlane.xlu0 %1930
    %v1932 = vsel %vm108, %v1922, 0.0
    %1933 = vadd.xlane.f32.xlu0 %v1932
    %v1934 = vpop.xlane.xlu0 %1933
    %v1935 = vsel %vm108, %v1923, 0.0
    %1936 = vadd.xlane.f32.xlu0 %v1935
    %v1937 = vpop.xlane.xlu0 %1936
    %v1938 = vsel %vm108, %v1924, 0.0
    %1939 = vadd.xlane.f32.xlu0 %v1938
    %v1940 = vpop.xlane.xlu0 %1939
    %v1941 = vsel %vm108, %v1925, 0.0
    %1942 = vadd.xlane.f32.xlu0 %v1941
    %v1943 = vpop.xlane.xlu0 %1942
    %v1944 = vsel %vm108, %v1926, 0.0
    %1945 = vadd.xlane.f32.xlu0 %v1944
    %v1946 = vpop.xlane.xlu0 %1945
    %v1947 = vsel %vm108, %v1927, 0.0
    %1948 = vadd.xlane.f32.xlu0 %v1947
    %v1949 = vpop.xlane.xlu0 %1948
    %v1950 = vsel %vm108, %v1928, 0.0
    %1951 = vadd.xlane.f32.xlu0 %v1950
    %v1952 = vpop.xlane.xlu0 %1951
    %v1961 = vperm.slane %v1931, %v1851
    %v1962 = vperm.slane %v1934, %v1853
    %v1963 = vsel %vm1855, %v1962, %v1961
    %v1964 = vperm.slane %v1937, %v1857
    %v1965 = vsel %vm1859, %v1964, %v1963
    %v1966 = vperm.slane %v1940, %v1861
    %v1967 = vsel %vm1863, %v1966, %v1965
    %v1968 = vperm.slane %v1943, %v1851
    %v1969 = vperm.slane %v1946, %v1853
    %v1970 = vsel %vm1855, %v1969, %v1968
    %v1971 = vperm.slane %v1949, %v1857
    %v1972 = vsel %vm1859, %v1971, %v1970
    %v1973 = vperm.slane %v1952, %v1861
    %v1974 = vsel %vm1863, %v1973, %v1972
    %1977 = vst.msk [vmem:[#allocation5 + $0x1] sm:$0x1] %vm1874, %v1967
    %1978 = vst.msk [vmem:[#allocation5 + $0x9] sm:$0x1] %vm1874, %v1974
    %s1979 = scalar_lea.vmem [#allocation3], 64
    %v1980 = vld [vmem:[%s1979] sm:$0xff]
    %v1981 = vld [vmem:[%s1979 + $0x8] sm:$0xff]
    %v1982 = vld [vmem:[%s1979 + $0x10] sm:$0xff]
    %v1983 = vld [vmem:[%s1979 + $0x18] sm:$0xff]
    %v1984 = vld [vmem:[%s1979 + $0x100] sm:$0xff]
    %v1985 = vld [vmem:[%s1979 + $0x108] sm:$0xff]
    %v1986 = vld [vmem:[%s1979 + $0x110] sm:$0xff]
    %v1987 = vld [vmem:[%s1979 + $0x118] sm:$0xff]
    %v1988 = vmul.f32 %v1980, %v1903
    %v1989 = vmul.f32 %v1981, %v1904
    %v1990 = vmul.f32 %v1982, %v1905
    %v1991 = vmul.f32 %v1983, %v1906
    %v1992 = vmul.f32 %v1984, %v1907
    %v1993 = vmul.f32 %v1985, %v1908
    %v1994 = vmul.f32 %v1986, %v1909
    %v1995 = vmul.f32 %v1987, %v1910
    %s1996 = scalar_lea.vmem [#allocation4], 64
    %v1997 = vld [vmem:[%s1996] sm:$0xff]
    %v1998 = vld [vmem:[%s1996 + $0x8] sm:$0xff]
    %v1999 = vld [vmem:[%s1996 + $0x10] sm:$0xff]
    %v2000 = vld [vmem:[%s1996 + $0x18] sm:$0xff]
    %v2001 = vld [vmem:[%s1996 + $0x100] sm:$0xff]
    %v2002 = vld [vmem:[%s1996 + $0x108] sm:$0xff]
    %v2003 = vld [vmem:[%s1996 + $0x110] sm:$0xff]
    %v2004 = vld [vmem:[%s1996 + $0x118] sm:$0xff]
    %v2005 = vadd.f32 %v1988, %v1997
    %v2006 = vadd.f32 %v1989, %v1998
    %v2007 = vadd.f32 %v1990, %v1999
    %v2008 = vadd.f32 %v1991, %v2000
    %v2009 = vadd.f32 %v1992, %v2001
    %v2010 = vadd.f32 %v1993, %v2002
    %v2011 = vadd.f32 %v1994, %v2003
    %v2012 = vadd.f32 %v1995, %v2004
    %v2013 = vperm.slane %v247, 2
    %v2014 = vperm.slane %v250, 2
    %2017 = vrot.lane.b32.xlu0 %v2013, 64
    %v2018 = vpop.permute.xlu0 %2017
    %2019 = vrot.lane.b32.xlu0 %v2014, 64
    %v2020 = vpop.permute.xlu0 %2019
    %v2023 = vmul.f32 %v2005, %v2018
    %v2024 = vmul.f32 %v2006, %v2018
    %v2025 = vmul.f32 %v2007, %v2018
    %v2026 = vmul.f32 %v2008, %v2018
    %v2027 = vmul.f32 %v2009, %v2020
    %v2028 = vmul.f32 %v2010, %v2020
    %v2029 = vmul.f32 %v2011, %v2020
    %v2030 = vmul.f32 %v2012, %v2020
    %v2031 = vsel %vm108, %v2023, 0.0
    %2032 = vadd.xlane.f32.xlu0 %v2031
    %v2033 = vpop.xlane.xlu0 %2032
    %v2034 = vsel %vm108, %v2024, 0.0
    %2035 = vadd.xlane.f32.xlu0 %v2034
    %v2036 = vpop.xlane.xlu0 %2035
    %v2037 = vsel %vm108, %v2025, 0.0
    %2038 = vadd.xlane.f32.xlu0 %v2037
    %v2039 = vpop.xlane.xlu0 %2038
    %v2040 = vsel %vm108, %v2026, 0.0
    %2041 = vadd.xlane.f32.xlu0 %v2040
    %v2042 = vpop.xlane.xlu0 %2041
    %v2043 = vsel %vm108, %v2027, 0.0
    %2044 = vadd.xlane.f32.xlu0 %v2043
    %v2045 = vpop.xlane.xlu0 %2044
    %v2046 = vsel %vm108, %v2028, 0.0
    %2047 = vadd.xlane.f32.xlu0 %v2046
    %v2048 = vpop.xlane.xlu0 %2047
    %v2049 = vsel %vm108, %v2029, 0.0
    %2050 = vadd.xlane.f32.xlu0 %v2049
    %v2051 = vpop.xlane.xlu0 %2050
    %v2052 = vsel %vm108, %v2030, 0.0
    %2053 = vadd.xlane.f32.xlu0 %v2052
    %v2054 = vpop.xlane.xlu0 %2053
    %v2063 = vperm.slane %v2033, %v1851
    %v2064 = vperm.slane %v2036, %v1853
    %v2065 = vsel %vm1855, %v2064, %v2063
    %v2066 = vperm.slane %v2039, %v1857
    %v2067 = vsel %vm1859, %v2066, %v2065
    %v2068 = vperm.slane %v2042, %v1861
    %v2069 = vsel %vm1863, %v2068, %v2067
    %v2070 = vperm.slane %v2045, %v1851
    %v2071 = vperm.slane %v2048, %v1853
    %v2072 = vsel %vm1855, %v2071, %v2070
    %v2073 = vperm.slane %v2051, %v1857
    %v2074 = vsel %vm1859, %v2073, %v2072
    %v2075 = vperm.slane %v2054, %v1861
    %v2076 = vsel %vm1863, %v2075, %v2074
    %2079 = vst.msk [vmem:[#allocation5 + $0x2] sm:$0x1] %vm1874, %v2069
    %2080 = vst.msk [vmem:[#allocation5 + $0xa] sm:$0x1] %vm1874, %v2076
    %s2081 = scalar_lea.vmem [#allocation3], 96
    %v2082 = vld [vmem:[%s2081] sm:$0xff]
    %v2083 = vld [vmem:[%s2081 + $0x8] sm:$0xff]
    %v2084 = vld [vmem:[%s2081 + $0x10] sm:$0xff]
    %v2085 = vld [vmem:[%s2081 + $0x18] sm:$0xff]
    %v2086 = vld [vmem:[%s2081 + $0x100] sm:$0xff]
    %v2087 = vld [vmem:[%s2081 + $0x108] sm:$0xff]
    %v2088 = vld [vmem:[%s2081 + $0x110] sm:$0xff]
    %v2089 = vld [vmem:[%s2081 + $0x118] sm:$0xff]
    %v2090 = vmul.f32 %v2082, %v2005
    %v2091 = vmul.f32 %v2083, %v2006
    %v2092 = vmul.f32 %v2084, %v2007
    %v2093 = vmul.f32 %v2085, %v2008
    %v2094 = vmul.f32 %v2086, %v2009
    %v2095 = vmul.f32 %v2087, %v2010
    %v2096 = vmul.f32 %v2088, %v2011
    %v2097 = vmul.f32 %v2089, %v2012
    %s2098 = scalar_lea.vmem [#allocation4], 96
    %v2099 = vld [vmem:[%s2098] sm:$0xff]
    %v2100 = vld [vmem:[%s2098 + $0x8] sm:$0xff]
    %v2101 = vld [vmem:[%s2098 + $0x10] sm:$0xff]
    %v2102 = vld [vmem:[%s2098 + $0x18] sm:$0xff]
    %v2103 = vld [vmem:[%s2098 + $0x100] sm:$0xff]
    %v2104 = vld [vmem:[%s2098 + $0x108] sm:$0xff]
    %v2105 = vld [vmem:[%s2098 + $0x110] sm:$0xff]
    %v2106 = vld [vmem:[%s2098 + $0x118] sm:$0xff]
    %v2107 = vadd.f32 %v2090, %v2099
    %v2108 = vadd.f32 %v2091, %v2100
    %v2109 = vadd.f32 %v2092, %v2101
    %v2110 = vadd.f32 %v2093, %v2102
    %v2111 = vadd.f32 %v2094, %v2103
    %v2112 = vadd.f32 %v2095, %v2104
    %v2113 = vadd.f32 %v2096, %v2105
    %v2114 = vadd.f32 %v2097, %v2106
    %v2115 = vperm.slane %v247, 3
    %v2116 = vperm.slane %v250, 3
    %2119 = vrot.lane.b32.xlu0 %v2115, 64
    %v2120 = vpop.permute.xlu0 %2119
    %2121 = vrot.lane.b32.xlu0 %v2116, 64
    %v2122 = vpop.permute.xlu0 %2121
    %v2125 = vmul.f32 %v2107, %v2120
    %v2126 = vmul.f32 %v2108, %v2120
    %v2127 = vmul.f32 %v2109, %v2120
    %v2128 = vmul.f32 %v2110, %v2120
    %v2129 = vmul.f32 %v2111, %v2122
    %v2130 = vmul.f32 %v2112, %v2122
    %v2131 = vmul.f32 %v2113, %v2122
    %v2132 = vmul.f32 %v2114, %v2122
    %v2133 = vsel %vm108, %v2125, 0.0
    %2134 = vadd.xlane.f32.xlu0 %v2133
    %v2135 = vpop.xlane.xlu0 %2134
    %v2136 = vsel %vm108, %v2126, 0.0
    %2137 = vadd.xlane.f32.xlu0 %v2136
    %v2138 = vpop.xlane.xlu0 %2137
    %v2139 = vsel %vm108, %v2127, 0.0
    %2140 = vadd.xlane.f32.xlu0 %v2139
    %v2141 = vpop.xlane.xlu0 %2140
    %v2142 = vsel %vm108, %v2128, 0.0
    %2143 = vadd.xlane.f32.xlu0 %v2142
    %v2144 = vpop.xlane.xlu0 %2143
    %v2145 = vsel %vm108, %v2129, 0.0
    %2146 = vadd.xlane.f32.xlu0 %v2145
    %v2147 = vpop.xlane.xlu0 %2146
    %v2148 = vsel %vm108, %v2130, 0.0
    %2149 = vadd.xlane.f32.xlu0 %v2148
    %v2150 = vpop.xlane.xlu0 %2149
    %v2151 = vsel %vm108, %v2131, 0.0
    %2152 = vadd.xlane.f32.xlu0 %v2151
    %v2153 = vpop.xlane.xlu0 %2152
    %v2154 = vsel %vm108, %v2132, 0.0
    %2155 = vadd.xlane.f32.xlu0 %v2154
    %v2156 = vpop.xlane.xlu0 %2155
    %v2165 = vperm.slane %v2135, %v1851
    %v2166 = vperm.slane %v2138, %v1853
    %v2167 = vsel %vm1855, %v2166, %v2165
    %v2168 = vperm.slane %v2141, %v1857
    %v2169 = vsel %vm1859, %v2168, %v2167
    %v2170 = vperm.slane %v2144, %v1861
    %v2171 = vsel %vm1863, %v2170, %v2169
    %v2172 = vperm.slane %v2147, %v1851
    %v2173 = vperm.slane %v2150, %v1853
    %v2174 = vsel %vm1855, %v2173, %v2172
    %v2175 = vperm.slane %v2153, %v1857
    %v2176 = vsel %vm1859, %v2175, %v2174
    %v2177 = vperm.slane %v2156, %v1861
    %v2178 = vsel %vm1863, %v2177, %v2176
    %2181 = vst.msk [vmem:[#allocation5 + $0x3] sm:$0x1] %vm1874, %v2171
    %2182 = vst.msk [vmem:[#allocation5 + $0xb] sm:$0x1] %vm1874, %v2178
    %s2183 = scalar_lea.vmem [#allocation3], 128
    %v2184 = vld [vmem:[%s2183] sm:$0xff]
    %v2185 = vld [vmem:[%s2183 + $0x8] sm:$0xff]
    %v2186 = vld [vmem:[%s2183 + $0x10] sm:$0xff]
    %v2187 = vld [vmem:[%s2183 + $0x18] sm:$0xff]
    %v2188 = vld [vmem:[%s2183 + $0x100] sm:$0xff]
    %v2189 = vld [vmem:[%s2183 + $0x108] sm:$0xff]
    %v2190 = vld [vmem:[%s2183 + $0x110] sm:$0xff]
    %v2191 = vld [vmem:[%s2183 + $0x118] sm:$0xff]
    %v2192 = vmul.f32 %v2184, %v2107
    %v2193 = vmul.f32 %v2185, %v2108
    %v2194 = vmul.f32 %v2186, %v2109
    %v2195 = vmul.f32 %v2187, %v2110
    %v2196 = vmul.f32 %v2188, %v2111
    %v2197 = vmul.f32 %v2189, %v2112
    %v2198 = vmul.f32 %v2190, %v2113
    %v2199 = vmul.f32 %v2191, %v2114
    %s2200 = scalar_lea.vmem [#allocation4], 128
    %v2201 = vld [vmem:[%s2200] sm:$0xff]
    %v2202 = vld [vmem:[%s2200 + $0x8] sm:$0xff]
    %v2203 = vld [vmem:[%s2200 + $0x10] sm:$0xff]
    %v2204 = vld [vmem:[%s2200 + $0x18] sm:$0xff]
    %v2205 = vld [vmem:[%s2200 + $0x100] sm:$0xff]
    %v2206 = vld [vmem:[%s2200 + $0x108] sm:$0xff]
    %v2207 = vld [vmem:[%s2200 + $0x110] sm:$0xff]
    %v2208 = vld [vmem:[%s2200 + $0x118] sm:$0xff]
    %v2209 = vadd.f32 %v2192, %v2201
    %v2210 = vadd.f32 %v2193, %v2202
    %v2211 = vadd.f32 %v2194, %v2203
    %v2212 = vadd.f32 %v2195, %v2204
    %v2213 = vadd.f32 %v2196, %v2205
    %v2214 = vadd.f32 %v2197, %v2206
    %v2215 = vadd.f32 %v2198, %v2207
    %v2216 = vadd.f32 %v2199, %v2208
    %v2217 = vperm.slane %v247, 4
    %v2218 = vperm.slane %v250, 4
    %2221 = vrot.lane.b32.xlu0 %v2217, 64
    %v2222 = vpop.permute.xlu0 %2221
    %2223 = vrot.lane.b32.xlu0 %v2218, 64
    %v2224 = vpop.permute.xlu0 %2223
    %v2227 = vmul.f32 %v2209, %v2222
    %v2228 = vmul.f32 %v2210, %v2222
    %v2229 = vmul.f32 %v2211, %v2222
    %v2230 = vmul.f32 %v2212, %v2222
    %v2231 = vmul.f32 %v2213, %v2224
    %v2232 = vmul.f32 %v2214, %v2224
    %v2233 = vmul.f32 %v2215, %v2224
    %v2234 = vmul.f32 %v2216, %v2224
    %v2235 = vsel %vm108, %v2227, 0.0
    %2236 = vadd.xlane.f32.xlu0 %v2235
    %v2237 = vpop.xlane.xlu0 %2236
    %v2238 = vsel %vm108, %v2228, 0.0
    %2239 = vadd.xlane.f32.xlu0 %v2238
    %v2240 = vpop.xlane.xlu0 %2239
    %v2241 = vsel %vm108, %v2229, 0.0
    %2242 = vadd.xlane.f32.xlu0 %v2241
    %v2243 = vpop.xlane.xlu0 %2242
    %v2244 = vsel %vm108, %v2230, 0.0
    %2245 = vadd.xlane.f32.xlu0 %v2244
    %v2246 = vpop.xlane.xlu0 %2245
    %v2247 = vsel %vm108, %v2231, 0.0
    %2248 = vadd.xlane.f32.xlu0 %v2247
    %v2249 = vpop.xlane.xlu0 %2248
    %v2250 = vsel %vm108, %v2232, 0.0
    %2251 = vadd.xlane.f32.xlu0 %v2250
    %v2252 = vpop.xlane.xlu0 %2251
    %v2253 = vsel %vm108, %v2233, 0.0
    %2254 = vadd.xlane.f32.xlu0 %v2253
    %v2255 = vpop.xlane.xlu0 %2254
    %v2256 = vsel %vm108, %v2234, 0.0
    %2257 = vadd.xlane.f32.xlu0 %v2256
    %v2258 = vpop.xlane.xlu0 %2257
    %v2267 = vperm.slane %v2237, %v1851
    %v2268 = vperm.slane %v2240, %v1853
    %v2269 = vsel %vm1855, %v2268, %v2267
    %v2270 = vperm.slane %v2243, %v1857
    %v2271 = vsel %vm1859, %v2270, %v2269
    %v2272 = vperm.slane %v2246, %v1861
    %v2273 = vsel %vm1863, %v2272, %v2271
    %v2274 = vperm.slane %v2249, %v1851
    %v2275 = vperm.slane %v2252, %v1853
    %v2276 = vsel %vm1855, %v2275, %v2274
    %v2277 = vperm.slane %v2255, %v1857
    %v2278 = vsel %vm1859, %v2277, %v2276
    %v2279 = vperm.slane %v2258, %v1861
    %v2280 = vsel %vm1863, %v2279, %v2278
    %2283 = vst.msk [vmem:[#allocation5 + $0x4] sm:$0x1] %vm1874, %v2273
    %2284 = vst.msk [vmem:[#allocation5 + $0xc] sm:$0x1] %vm1874, %v2280
    %s2285 = scalar_lea.vmem [#allocation3], 160
    %v2286 = vld [vmem:[%s2285] sm:$0xff]
    %v2287 = vld [vmem:[%s2285 + $0x8] sm:$0xff]
    %v2288 = vld [vmem:[%s2285 + $0x10] sm:$0xff]
    %v2289 = vld [vmem:[%s2285 + $0x18] sm:$0xff]
    %v2290 = vld [vmem:[%s2285 + $0x100] sm:$0xff]
    %v2291 = vld [vmem:[%s2285 + $0x108] sm:$0xff]
    %v2292 = vld [vmem:[%s2285 + $0x110] sm:$0xff]
    %v2293 = vld [vmem:[%s2285 + $0x118] sm:$0xff]
    %v2294 = vmul.f32 %v2286, %v2209
    %v2295 = vmul.f32 %v2287, %v2210
    %v2296 = vmul.f32 %v2288, %v2211
    %v2297 = vmul.f32 %v2289, %v2212
    %v2298 = vmul.f32 %v2290, %v2213
    %v2299 = vmul.f32 %v2291, %v2214
    %v2300 = vmul.f32 %v2292, %v2215
    %v2301 = vmul.f32 %v2293, %v2216
    %s2302 = scalar_lea.vmem [#allocation4], 160
    %v2303 = vld [vmem:[%s2302] sm:$0xff]
    %v2304 = vld [vmem:[%s2302 + $0x8] sm:$0xff]
    %v2305 = vld [vmem:[%s2302 + $0x10] sm:$0xff]
    %v2306 = vld [vmem:[%s2302 + $0x18] sm:$0xff]
    %v2307 = vld [vmem:[%s2302 + $0x100] sm:$0xff]
    %v2308 = vld [vmem:[%s2302 + $0x108] sm:$0xff]
    %v2309 = vld [vmem:[%s2302 + $0x110] sm:$0xff]
    %v2310 = vld [vmem:[%s2302 + $0x118] sm:$0xff]
    %v2311 = vadd.f32 %v2294, %v2303
    %v2312 = vadd.f32 %v2295, %v2304
    %v2313 = vadd.f32 %v2296, %v2305
    %v2314 = vadd.f32 %v2297, %v2306
    %v2315 = vadd.f32 %v2298, %v2307
    %v2316 = vadd.f32 %v2299, %v2308
    %v2317 = vadd.f32 %v2300, %v2309
    %v2318 = vadd.f32 %v2301, %v2310
    %v2319 = vperm.slane %v247, 5
    %v2320 = vperm.slane %v250, 5
    %2323 = vrot.lane.b32.xlu0 %v2319, 64
    %v2324 = vpop.permute.xlu0 %2323
    %2325 = vrot.lane.b32.xlu0 %v2320, 64
    %v2326 = vpop.permute.xlu0 %2325
    %v2329 = vmul.f32 %v2311, %v2324
    %v2330 = vmul.f32 %v2312, %v2324
    %v2331 = vmul.f32 %v2313, %v2324
    %v2332 = vmul.f32 %v2314, %v2324
    %v2333 = vmul.f32 %v2315, %v2326
    %v2334 = vmul.f32 %v2316, %v2326
    %v2335 = vmul.f32 %v2317, %v2326
    %v2336 = vmul.f32 %v2318, %v2326
    %v2337 = vsel %vm108, %v2329, 0.0
    %2338 = vadd.xlane.f32.xlu0 %v2337
    %v2339 = vpop.xlane.xlu0 %2338
    %v2340 = vsel %vm108, %v2330, 0.0
    %2341 = vadd.xlane.f32.xlu0 %v2340
    %v2342 = vpop.xlane.xlu0 %2341
    %v2343 = vsel %vm108, %v2331, 0.0
    %2344 = vadd.xlane.f32.xlu0 %v2343
    %v2345 = vpop.xlane.xlu0 %2344
    %v2346 = vsel %vm108, %v2332, 0.0
    %2347 = vadd.xlane.f32.xlu0 %v2346
    %v2348 = vpop.xlane.xlu0 %2347
    %v2349 = vsel %vm108, %v2333, 0.0
    %2350 = vadd.xlane.f32.xlu0 %v2349
    %v2351 = vpop.xlane.xlu0 %2350
    %v2352 = vsel %vm108, %v2334, 0.0
    %2353 = vadd.xlane.f32.xlu0 %v2352
    %v2354 = vpop.xlane.xlu0 %2353
    %v2355 = vsel %vm108, %v2335, 0.0
    %2356 = vadd.xlane.f32.xlu0 %v2355
    %v2357 = vpop.xlane.xlu0 %2356
    %v2358 = vsel %vm108, %v2336, 0.0
    %2359 = vadd.xlane.f32.xlu0 %v2358
    %v2360 = vpop.xlane.xlu0 %2359
    %v2369 = vperm.slane %v2339, %v1851
    %v2370 = vperm.slane %v2342, %v1853
    %v2371 = vsel %vm1855, %v2370, %v2369
    %v2372 = vperm.slane %v2345, %v1857
    %v2373 = vsel %vm1859, %v2372, %v2371
    %v2374 = vperm.slane %v2348, %v1861
    %v2375 = vsel %vm1863, %v2374, %v2373
    %v2376 = vperm.slane %v2351, %v1851
    %v2377 = vperm.slane %v2354, %v1853
    %v2378 = vsel %vm1855, %v2377, %v2376
    %v2379 = vperm.slane %v2357, %v1857
    %v2380 = vsel %vm1859, %v2379, %v2378
    %v2381 = vperm.slane %v2360, %v1861
    %v2382 = vsel %vm1863, %v2381, %v2380
    %2385 = vst.msk [vmem:[#allocation5 + $0x5] sm:$0x1] %vm1874, %v2375
    %2386 = vst.msk [vmem:[#allocation5 + $0xd] sm:$0x1] %vm1874, %v2382
    %s2387 = scalar_lea.vmem [#allocation3], 192
    %v2388 = vld [vmem:[%s2387] sm:$0xff]
    %v2389 = vld [vmem:[%s2387 + $0x8] sm:$0xff]
    %v2390 = vld [vmem:[%s2387 + $0x10] sm:$0xff]
    %v2391 = vld [vmem:[%s2387 + $0x18] sm:$0xff]
    %v2392 = vld [vmem:[%s2387 + $0x100] sm:$0xff]
    %v2393 = vld [vmem:[%s2387 + $0x108] sm:$0xff]
    %v2394 = vld [vmem:[%s2387 + $0x110] sm:$0xff]
    %v2395 = vld [vmem:[%s2387 + $0x118] sm:$0xff]
    %v2396 = vmul.f32 %v2388, %v2311
    %v2397 = vmul.f32 %v2389, %v2312
    %v2398 = vmul.f32 %v2390, %v2313
    %v2399 = vmul.f32 %v2391, %v2314
    %v2400 = vmul.f32 %v2392, %v2315
    %v2401 = vmul.f32 %v2393, %v2316
    %v2402 = vmul.f32 %v2394, %v2317
    %v2403 = vmul.f32 %v2395, %v2318
    %s2404 = scalar_lea.vmem [#allocation4], 192
    %v2405 = vld [vmem:[%s2404] sm:$0xff]
    %v2406 = vld [vmem:[%s2404 + $0x8] sm:$0xff]
    %v2407 = vld [vmem:[%s2404 + $0x10] sm:$0xff]
    %v2408 = vld [vmem:[%s2404 + $0x18] sm:$0xff]
    %v2409 = vld [vmem:[%s2404 + $0x100] sm:$0xff]
    %v2410 = vld [vmem:[%s2404 + $0x108] sm:$0xff]
    %v2411 = vld [vmem:[%s2404 + $0x110] sm:$0xff]
    %v2412 = vld [vmem:[%s2404 + $0x118] sm:$0xff]
    %v2413 = vadd.f32 %v2396, %v2405
    %v2414 = vadd.f32 %v2397, %v2406
    %v2415 = vadd.f32 %v2398, %v2407
    %v2416 = vadd.f32 %v2399, %v2408
    %v2417 = vadd.f32 %v2400, %v2409
    %v2418 = vadd.f32 %v2401, %v2410
    %v2419 = vadd.f32 %v2402, %v2411
    %v2420 = vadd.f32 %v2403, %v2412
    %v2421 = vperm.slane %v247, 6
    %v2422 = vperm.slane %v250, 6
    %2425 = vrot.lane.b32.xlu0 %v2421, 64
    %v2426 = vpop.permute.xlu0 %2425
    %2427 = vrot.lane.b32.xlu0 %v2422, 64
    %v2428 = vpop.permute.xlu0 %2427
    %v2431 = vmul.f32 %v2413, %v2426
    %v2432 = vmul.f32 %v2414, %v2426
    %v2433 = vmul.f32 %v2415, %v2426
    %v2434 = vmul.f32 %v2416, %v2426
    %v2435 = vmul.f32 %v2417, %v2428
    %v2436 = vmul.f32 %v2418, %v2428
    %v2437 = vmul.f32 %v2419, %v2428
    %v2438 = vmul.f32 %v2420, %v2428
    %v2439 = vsel %vm108, %v2431, 0.0
    %2440 = vadd.xlane.f32.xlu0 %v2439
    %v2441 = vpop.xlane.xlu0 %2440
    %v2442 = vsel %vm108, %v2432, 0.0
    %2443 = vadd.xlane.f32.xlu0 %v2442
    %v2444 = vpop.xlane.xlu0 %2443
    %v2445 = vsel %vm108, %v2433, 0.0
    %2446 = vadd.xlane.f32.xlu0 %v2445
    %v2447 = vpop.xlane.xlu0 %2446
    %v2448 = vsel %vm108, %v2434, 0.0
    %2449 = vadd.xlane.f32.xlu0 %v2448
    %v2450 = vpop.xlane.xlu0 %2449
    %v2451 = vsel %vm108, %v2435, 0.0
    %2452 = vadd.xlane.f32.xlu0 %v2451
    %v2453 = vpop.xlane.xlu0 %2452
    %v2454 = vsel %vm108, %v2436, 0.0
    %2455 = vadd.xlane.f32.xlu0 %v2454
    %v2456 = vpop.xlane.xlu0 %2455
    %v2457 = vsel %vm108, %v2437, 0.0
    %2458 = vadd.xlane.f32.xlu0 %v2457
    %v2459 = vpop.xlane.xlu0 %2458
    %v2460 = vsel %vm108, %v2438, 0.0
    %2461 = vadd.xlane.f32.xlu0 %v2460
    %v2462 = vpop.xlane.xlu0 %2461
    %v2471 = vperm.slane %v2441, %v1851
    %v2472 = vperm.slane %v2444, %v1853
    %v2473 = vsel %vm1855, %v2472, %v2471
    %v2474 = vperm.slane %v2447, %v1857
    %v2475 = vsel %vm1859, %v2474, %v2473
    %v2476 = vperm.slane %v2450, %v1861
    %v2477 = vsel %vm1863, %v2476, %v2475
    %v2478 = vperm.slane %v2453, %v1851
    %v2479 = vperm.slane %v2456, %v1853
    %v2480 = vsel %vm1855, %v2479, %v2478
    %v2481 = vperm.slane %v2459, %v1857
    %v2482 = vsel %vm1859, %v2481, %v2480
    %v2483 = vperm.slane %v2462, %v1861
    %v2484 = vsel %vm1863, %v2483, %v2482
    %2487 = vst.msk [vmem:[#allocation5 + $0x6] sm:$0x1] %vm1874, %v2477
    %2488 = vst.msk [vmem:[#allocation5 + $0xe] sm:$0x1] %vm1874, %v2484
    %s2489 = scalar_lea.vmem [#allocation3], 224
    %v2490 = vld [vmem:[%s2489] sm:$0xff]
    %v2491 = vld [vmem:[%s2489 + $0x8] sm:$0xff]
    %v2492 = vld [vmem:[%s2489 + $0x10] sm:$0xff]
    %v2493 = vld [vmem:[%s2489 + $0x18] sm:$0xff]
    %v2494 = vld [vmem:[%s2489 + $0x100] sm:$0xff]
    %v2495 = vld [vmem:[%s2489 + $0x108] sm:$0xff]
    %v2496 = vld [vmem:[%s2489 + $0x110] sm:$0xff]
    %v2497 = vld [vmem:[%s2489 + $0x118] sm:$0xff]
    %v2498 = vmul.f32 %v2490, %v2413
    %v2499 = vmul.f32 %v2491, %v2414
    %v2500 = vmul.f32 %v2492, %v2415
    %v2501 = vmul.f32 %v2493, %v2416
    %v2502 = vmul.f32 %v2494, %v2417
    %v2503 = vmul.f32 %v2495, %v2418
    %v2504 = vmul.f32 %v2496, %v2419
    %v2505 = vmul.f32 %v2497, %v2420
    %s2506 = scalar_lea.vmem [#allocation4], 224
    %v2507 = vld [vmem:[%s2506] sm:$0xff]
    %v2508 = vld [vmem:[%s2506 + $0x8] sm:$0xff]
    %v2509 = vld [vmem:[%s2506 + $0x10] sm:$0xff]
    %v2510 = vld [vmem:[%s2506 + $0x18] sm:$0xff]
    %v2511 = vld [vmem:[%s2506 + $0x100] sm:$0xff]
    %v2512 = vld [vmem:[%s2506 + $0x108] sm:$0xff]
    %v2513 = vld [vmem:[%s2506 + $0x110] sm:$0xff]
    %v2514 = vld [vmem:[%s2506 + $0x118] sm:$0xff]
    %v2515 = vadd.f32 %v2498, %v2507
    %v2516 = vadd.f32 %v2499, %v2508
    %v2517 = vadd.f32 %v2500, %v2509
    %v2518 = vadd.f32 %v2501, %v2510
    %v2519 = vadd.f32 %v2502, %v2511
    %v2520 = vadd.f32 %v2503, %v2512
    %v2521 = vadd.f32 %v2504, %v2513
    %v2522 = vadd.f32 %v2505, %v2514
    %v2523 = vperm.slane %v247, 7
    %v2524 = vperm.slane %v250, 7
    %2527 = vrot.lane.b32.xlu0 %v2523, 64
    %v2528 = vpop.permute.xlu0 %2527
    %2529 = vrot.lane.b32.xlu0 %v2524, 64
    %v2530 = vpop.permute.xlu0 %2529
    %v2533 = vmul.f32 %v2515, %v2528
    %v2534 = vmul.f32 %v2516, %v2528
    %v2535 = vmul.f32 %v2517, %v2528
    %v2536 = vmul.f32 %v2518, %v2528
    %v2537 = vmul.f32 %v2519, %v2530
    %v2538 = vmul.f32 %v2520, %v2530
    %v2539 = vmul.f32 %v2521, %v2530
    %v2540 = vmul.f32 %v2522, %v2530
    %v2541 = vsel %vm108, %v2533, 0.0
    %2542 = vadd.xlane.f32.xlu0 %v2541
    %v2543 = vpop.xlane.xlu0 %2542
    %v2544 = vsel %vm108, %v2534, 0.0
    %2545 = vadd.xlane.f32.xlu0 %v2544
    %v2546 = vpop.xlane.xlu0 %2545
    %v2547 = vsel %vm108, %v2535, 0.0
    %2548 = vadd.xlane.f32.xlu0 %v2547
    %v2549 = vpop.xlane.xlu0 %2548
    %v2550 = vsel %vm108, %v2536, 0.0
    %2551 = vadd.xlane.f32.xlu0 %v2550
    %v2552 = vpop.xlane.xlu0 %2551
    %v2553 = vsel %vm108, %v2537, 0.0
    %2554 = vadd.xlane.f32.xlu0 %v2553
    %v2555 = vpop.xlane.xlu0 %2554
    %v2556 = vsel %vm108, %v2538, 0.0
    %2557 = vadd.xlane.f32.xlu0 %v2556
    %v2558 = vpop.xlane.xlu0 %2557
    %v2559 = vsel %vm108, %v2539, 0.0
    %2560 = vadd.xlane.f32.xlu0 %v2559
    %v2561 = vpop.xlane.xlu0 %2560
    %v2562 = vsel %vm108, %v2540, 0.0
    %2563 = vadd.xlane.f32.xlu0 %v2562
    %v2564 = vpop.xlane.xlu0 %2563
    %v2573 = vperm.slane %v2543, %v1851
    %v2574 = vperm.slane %v2546, %v1853
    %v2575 = vsel %vm1855, %v2574, %v2573
    %v2576 = vperm.slane %v2549, %v1857
    %v2577 = vsel %vm1859, %v2576, %v2575
    %v2578 = vperm.slane %v2552, %v1861
    %v2579 = vsel %vm1863, %v2578, %v2577
    %v2580 = vperm.slane %v2555, %v1851
    %v2581 = vperm.slane %v2558, %v1853
    %v2582 = vsel %vm1855, %v2581, %v2580
    %v2583 = vperm.slane %v2561, %v1857
    %v2584 = vsel %vm1859, %v2583, %v2582
    %v2585 = vperm.slane %v2564, %v1861
    %v2586 = vsel %vm1863, %v2585, %v2584
    %2589 = vst.msk [vmem:[#allocation5 + $0x7] sm:$0x1] %vm1874, %v2579
    %2590 = vst.msk [vmem:[#allocation5 + $0xf] sm:$0x1] %vm1874, %v2586
    %v2591 = vld [vmem:[#allocation6 + $0x46] sm:$0x1]
    %v2592 = vld [vmem:[#allocation5] sm:$0xff]
    %v2593 = vld [vmem:[#allocation5 + $0x8] sm:$0xff]
    %v2594 = vperm.slane %v2591, 0
    %v2595 = vmul.f32 %v2594, %v217
    %v2596 = vmul.f32 %v2594, %v218
    %v2597 = vadd.f32 %v2592, %v2595
    %v2598 = vadd.f32 %v2593, %v2596
    %v2599 = vxor.u32 %v106, 2147483648
    %v2600 = vxor.u32 %v107, 2147483648
    %v2601 = vmul.f32 %v2599, 1.442695
    %v2602 = vpow.pop %v2601
    %v2603 = vmul.f32 %v2600, 1.442695
    %v2604 = vpow.pop %v2603
    %v2605 = vadd.f32 %v2602, 1.0
    %v2606 = vadd.f32 %v2604, 1.0
    %v2607 = vrcp.pop %v2605
    %v2608 = vmul.f32 %v2605, %v2607
    %v2609 = vsub.f32 1.0, %v2608
    %v2610 = vmul.f32 %v2607, %v2609
    %v2611 = vadd.f32 %v2607, %v2610
    %vm2612 = vweird.f32 %v2605
    %vm2613 = vweird.f32 %v2607
    %vm2614 = vmor %vm2612, %vm2613
    %v2615 = vsel %vm2614, %v2607, %v2611
    %v2616 = vand.u32 2147483647, %v2605
    %vm2617 = vcmp.eq.f32.partialorder %v2616, 8.507059e+37
    %v2618 = vand.u32 %v2605, 2147483648
    %v2619 = vor.u32 1.1754944e-38, %v2618
    %v2620 = vsel %vm2617, %v2619, %v2615
    %v2621 = vmul.f32 1.0, %v2620
    %v2622 = vrcp.pop %v2606
    %v2623 = vmul.f32 %v2606, %v2622
    %v2624 = vsub.f32 1.0, %v2623
    %v2625 = vmul.f32 %v2622, %v2624
    %v2626 = vadd.f32 %v2622, %v2625
    %vm2627 = vweird.f32 %v2606
    %vm2628 = vweird.f32 %v2622
    %vm2629 = vmor %vm2627, %vm2628
    %v2630 = vsel %vm2629, %v2622, %v2626
    %v2631 = vand.u32 2147483647, %v2606
    %vm2632 = vcmp.eq.f32.partialorder %v2631, 8.507059e+37
    %v2633 = vand.u32 %v2606, 2147483648
    %v2634 = vor.u32 1.1754944e-38, %v2633
    %v2635 = vsel %vm2632, %v2634, %v2630
    %v2636 = vmul.f32 1.0, %v2635
    %v2637 = vmul.f32 %v106, %v2621
    %v2638 = vmul.f32 %v107, %v2636
    %2641 = vrot.lane.b32.xlu0 %v2637, 96
    %v2642 = vpop.permute.xlu0 %2641
    %2643 = vrot.lane.b32.xlu0 %v2638, 96
    %v2644 = vpop.permute.xlu0 %2643
    %v2647 = vmul.f32 %v2597, %v2642
    %v2648 = vmul.f32 %v2598, %v2644
    %v2649 = vld [vmem:[#allocation6 + $0x42] sm:$0x1]
    %v2650 = vperm.slane %v2649, 0
    %v2651 = vmul.f32 %v2647, %v2650
    %v2652 = vmul.f32 %v2648, %v2650
    %v2653 = vsel %vm108, %v2651, 0.0
    %2654 = vadd.xlane.f32.xlu0 %v2653
    %v2655 = vpop.xlane.xlu0 %2654
    %v2656 = vsel %vm108, %v2652, 0.0
    %2657 = vadd.xlane.f32.xlu0 %v2656
    %v2658 = vpop.xlane.xlu0 %2657
    %v2659 = vld [vmem:[#allocation6 + $0x43] sm:$0x1]
    %v2660 = vperm.slane %v2659, 0
    %v2661 = vmul.f32 %v2647, %v2660
    %v2662 = vmul.f32 %v2648, %v2660
    %v2663 = vsel %vm108, %v2661, 0.0
    %2664 = vadd.xlane.f32.xlu0 %v2663
    %v2665 = vpop.xlane.xlu0 %2664
    %v2666 = vsel %vm108, %v2662, 0.0
    %2667 = vadd.xlane.f32.xlu0 %v2666
    %v2668 = vpop.xlane.xlu0 %2667
    %vm2669 = vcmask 7168
    %v2670 = vsel %vm2669, %v2655, %v2665
    %v2671 = vsel %vm2669, %v2658, %v2668
    %v2672 = vadd.f32 %v27, %v2670
    %v2673 = vadd.f32 %v28, %v2671
    %s2674 = scalar_lea.vmem [#allocation6], 96
    %v2675 = vld [vmem:[%s2674 + $0x47] sm:$0x1]
    %v2676 = vmul.f32 %v2672, %v2672
    %v2677 = vmul.f32 %v2673, %v2673
    %v2678 = vsel %vm35, %v2676, 0.0
    %2679 = vadd.xlane.f32.xlu0 %v2678
    %v2680 = vpop.xlane.xlu0 %2679
    %v2681 = vsel %vm35, %v2677, 0.0
    %2682 = vadd.xlane.f32.xlu0 %v2681
    %v2683 = vpop.xlane.xlu0 %2682
    %v2684 = vmul.f32 %v2680, %v48
    %v2685 = vmul.f32 %v2683, %v48
    %v2686 = vadd.f32 %v2684, 1e-05
    %v2687 = vadd.f32 %v2685, 1e-05
    %v2688 = vrsqrt.pop %v2686
    %v2689 = vmul.f32 %v2688, %v2686
    %v2690 = vmul.f32 %v2689, %v2688
    %v2691 = vmul.f32 0.5, %v2690
    %v2692 = vsub.f32 1.5, %v2691
    %v2693 = vmul.f32 %v2688, %v2692
    %vm2694 = vweird.f32 %v2686
    %vm2695 = vweird.f32 %v2688
    %vm2696 = vmor %vm2694, %vm2695
    %v2697 = vsel %vm2696, %v2688, %v2693
    %v2698 = vrsqrt.pop %v2687
    %v2699 = vmul.f32 %v2698, %v2687
    %v2700 = vmul.f32 %v2699, %v2698
    %v2701 = vmul.f32 0.5, %v2700
    %v2702 = vsub.f32 1.5, %v2701
    %v2703 = vmul.f32 %v2698, %v2702
    %vm2704 = vweird.f32 %v2687
    %vm2705 = vweird.f32 %v2698
    %vm2706 = vmor %vm2704, %vm2705
    %v2707 = vsel %vm2706, %v2698, %v2703
    %v2708 = vmul.f32 %v2672, %v2697
    %v2709 = vmul.f32 %v2673, %v2707
    %v2710 = vperm.slane %v2675, 0
    %v2711 = vmul.f32 %v2708, %v2710
    %v2712 = vmul.f32 %v2709, %v2710
    %v2713 = vld [vmem:[%s2674 + $0x40] sm:$0x1]
    %2715 = vset.pattern.permute.xlu0 0
    %2716 = vperm.xlu0 %2715, %v2711
    %v2717 = vpop.permute.xlu0 %2716
    %2720 = vset.pattern.permute.xlu0 0
    %2721 = vperm.xlu0 %2720, %v2712
    %v2722 = vpop.permute.xlu0 %2721
    %v2724 = vperm.slane %v2713, 0
    %v2725 = vmul.f32 %v2717, %v2724
    %v2726 = vmul.f32 %v2722, %v2724
    %v2727 = vadd.f32 %v2725, 0.0
    %v2728 = vadd.f32 %v2726, 0.0
    %v2729 = vld [vmem:[%s2674 + $0x41] sm:$0x1]
    %2730 = vset.pattern.permute.xlu0 1
    %2731 = vperm.xlu0 %2730, %v2711
    %v2732 = vpop.permute.xlu0 %2731
    %2734 = vset.pattern.permute.xlu0 1
    %2735 = vperm.xlu0 %2734, %v2712
    %v2736 = vpop.permute.xlu0 %2735
    %v2738 = vperm.slane %v2729, 0
    %v2739 = vmul.f32 %v2732, %v2738
    %v2740 = vmul.f32 %v2736, %v2738
    %v2741 = vadd.f32 %v2727, %v2739
    %v2742 = vadd.f32 %v2728, %v2740
    %2743 = vst.msk [vmem:[#allocation2 + $0x7] sm:$0xff] %vm108, %v2741
    %2744 = vst.msk [vmem:[#allocation2 + $0x17] sm:$0xff] %vm108, %v2742
    %v2745 = vld [vmem:[%s2674 + $0x48] sm:$0x1]
    %v2746 = vld [vmem:[#allocation2] sm:$0xff]
    %v2747 = vld [vmem:[#allocation2 + $0x10] sm:$0xff]
    %v2748 = vperm.slane %v2745, 0
    %v2749 = vmul.f32 %v2748, %v2746
    %v2750 = vmul.f32 %v2748, %v2747
    %v2751 = vadd.f32 %v2749, 0.0
    %v2752 = vadd.f32 %v2750, 0.0
    %v2753 = vld [vmem:[%s2674 + $0x49] sm:$0x1]
    %v2754 = vld [vmem:[#allocation2 + $0x1] sm:$0xff]
    %v2755 = vld [vmem:[#allocation2 + $0x11] sm:$0xff]
    %v2756 = vperm.slane %v2753, 0
    %v2757 = vmul.f32 %v2756, %v2754
    %v2758 = vmul.f32 %v2756, %v2755
    %v2759 = vadd.f32 %v2751, %v2757
    %v2760 = vadd.f32 %v2752, %v2758
    %v2761 = vld [vmem:[%s2674 + $0x4a] sm:$0x1]
    %v2762 = vld [vmem:[#allocation2 + $0x2] sm:$0xff]
    %v2763 = vld [vmem:[#allocation2 + $0x12] sm:$0xff]
    %v2764 = vperm.slane %v2761, 0
    %v2765 = vmul.f32 %v2764, %v2762
    %v2766 = vmul.f32 %v2764, %v2763
    %v2767 = vadd.f32 %v2759, %v2765
    %v2768 = vadd.f32 %v2760, %v2766
    %v2769 = vld [vmem:[%s2674 + $0x4b] sm:$0x1]
    %v2770 = vld [vmem:[#allocation2 + $0x3] sm:$0xff]
    %v2771 = vld [vmem:[#allocation2 + $0x13] sm:$0xff]
    %v2772 = vperm.slane %v2769, 0
    %v2773 = vmul.f32 %v2772, %v2770
    %v2774 = vmul.f32 %v2772, %v2771
    %v2775 = vadd.f32 %v2767, %v2773
    %v2776 = vadd.f32 %v2768, %v2774
    %v2777 = vld [vmem:[%s2674 + $0x4c] sm:$0x1]
    %v2778 = vld [vmem:[#allocation2 + $0x4] sm:$0xff]
    %v2779 = vld [vmem:[#allocation2 + $0x14] sm:$0xff]
    %v2780 = vperm.slane %v2777, 0
    %v2781 = vmul.f32 %v2780, %v2778
    %v2782 = vmul.f32 %v2780, %v2779
    %v2783 = vadd.f32 %v2775, %v2781
    %v2784 = vadd.f32 %v2776, %v2782
    %v2785 = vld [vmem:[%s2674 + $0x4d] sm:$0x1]
    %v2786 = vld [vmem:[#allocation2 + $0x5] sm:$0xff]
    %v2787 = vld [vmem:[#allocation2 + $0x15] sm:$0xff]
    %v2788 = vperm.slane %v2785, 0
    %v2789 = vmul.f32 %v2788, %v2786
    %v2790 = vmul.f32 %v2788, %v2787
    %v2791 = vadd.f32 %v2783, %v2789
    %v2792 = vadd.f32 %v2784, %v2790
    %v2793 = vld [vmem:[%s2674 + $0x4e] sm:$0x1]
    %v2794 = vld [vmem:[#allocation2 + $0x6] sm:$0xff]
    %v2795 = vld [vmem:[#allocation2 + $0x16] sm:$0xff]
    %v2796 = vperm.slane %v2793, 0
    %v2797 = vmul.f32 %v2796, %v2794
    %v2798 = vmul.f32 %v2796, %v2795
    %v2799 = vadd.f32 %v2791, %v2797
    %v2800 = vadd.f32 %v2792, %v2798
    %v2801 = vld [vmem:[%s2674 + $0x4f] sm:$0x1]
    %v2802 = vld [vmem:[#allocation2 + $0x7] sm:$0xff]
    %v2803 = vld [vmem:[#allocation2 + $0x17] sm:$0xff]
    %v2804 = vperm.slane %v2801, 0
    %v2805 = vmul.f32 %v2804, %v2802
    %v2806 = vmul.f32 %v2804, %v2803
    %v2807 = vadd.f32 %v2799, %v2805
    %v2808 = vadd.f32 %v2800, %v2806
    %v2809 = vld [vmem:[%s2674 + $0x44] sm:$0x1]
    %v2810 = vperm.slane %v2809, 0
    %v2811 = vadd.f32 %v2807, %v2810
    %v2812 = vadd.f32 %v2808, %v2810
    %v2813 = vxor.u32 %v2811, 2147483648
    %v2814 = vxor.u32 %v2812, 2147483648
    %v2815 = vmul.f32 %v2813, 1.442695
    %v2816 = vpow.pop %v2815
    %v2817 = vmul.f32 %v2814, 1.442695
    %v2818 = vpow.pop %v2817
    %v2819 = vadd.f32 %v2816, 1.0
    %v2820 = vadd.f32 %v2818, 1.0
    %v2821 = vrcp.pop %v2819
    %v2822 = vmul.f32 %v2819, %v2821
    %v2823 = vsub.f32 1.0, %v2822
    %v2824 = vmul.f32 %v2821, %v2823
    %v2825 = vadd.f32 %v2821, %v2824
    %vm2826 = vweird.f32 %v2819
    %vm2827 = vweird.f32 %v2821
    %vm2828 = vmor %vm2826, %vm2827
    %v2829 = vsel %vm2828, %v2821, %v2825
    %v2830 = vand.u32 2147483647, %v2819
    %vm2831 = vcmp.eq.f32.partialorder %v2830, 8.507059e+37
    %v2832 = vand.u32 %v2819, 2147483648
    %v2833 = vor.u32 1.1754944e-38, %v2832
    %v2834 = vsel %vm2831, %v2833, %v2829
    %v2835 = vmul.f32 1.0, %v2834
    %v2836 = vrcp.pop %v2820
    %v2837 = vmul.f32 %v2820, %v2836
    %v2838 = vsub.f32 1.0, %v2837
    %v2839 = vmul.f32 %v2836, %v2838
    %v2840 = vadd.f32 %v2836, %v2839
    %vm2841 = vweird.f32 %v2820
    %vm2842 = vweird.f32 %v2836
    %vm2843 = vmor %vm2841, %vm2842
    %v2844 = vsel %vm2843, %v2836, %v2840
    %v2845 = vand.u32 2147483647, %v2820
    %vm2846 = vcmp.eq.f32.partialorder %v2845, 8.507059e+37
    %v2847 = vand.u32 %v2820, 2147483648
    %v2848 = vor.u32 1.1754944e-38, %v2847
    %v2849 = vsel %vm2846, %v2848, %v2844
    %v2850 = vmul.f32 1.0, %v2849
    %v2851 = vmul.f32 %v2811, %v2835
    %v2852 = vmul.f32 %v2812, %v2850
    %v2853 = vld [vmem:[%s2674] sm:$0xff]
    %v2854 = vld [vmem:[%s2674 + $0x8] sm:$0xff]
    %v2855 = vld [vmem:[%s2674 + $0x10] sm:$0xff]
    %v2856 = vld [vmem:[%s2674 + $0x18] sm:$0xff]
    %v2858 = vsel %vm108, %v2851, 0
    %v2861 = vsel %vm108, %v2852, 0
    %2863 = vmatpush.msra.mxu0 0.0
    %2864 = vmatpush.msra.mxu0 0.0
    %2865 = vmatpush.msra.mxu0 0.0
    %2866 = vmatpush.msra.mxu0 0.0
    %2867 = vmatpush.msra.mxu0 0.0
    %2868 = vmatpush.msra.mxu0 0.0
    %2869 = vmatpush.msra.mxu0 0.0
    %2870 = vmatpush.msra.mxu0 0.0
    %2871 = vmatpush.msra.mxu0 0.0
    %2872 = vmatpush.msra.mxu0 0.0
    %2873 = vmatpush.msra.mxu0 0.0
    %2874 = vmatpush.msra.mxu0 0.0
    %2875 = vmatpush.msra.mxu0 %v2856
    %2876 = vmatpush.msra.mxu0 %v2855
    %2877 = vmatpush.msra.mxu0 %v2854
    %2878 = vmatpush.msra.mxu0 %v2853
    %2879 = vmatmul.f32.gmra.mxu0 %v2858
    %v2880 = vpop.f32.mrf.mxu0
    %v2881 = vadd.f32 0.0, %v2880
    %2882 = vmatmul.f32.gmra.mxu0 %v2861
    %v2883 = vpop.f32.mrf.mxu0
    %v2884 = vadd.f32 0.0, %v2883
    %2885 = vdwg.mxu0
    %v2886 = vld [vmem:[%s2674 + $0x45] sm:$0x1]
    %v2887 = vperm.slane %v2886, 0
    %v2888 = vadd.f32 %v2881, %v2887
    %v2889 = vadd.f32 %v2884, %v2887
    %v2890 = vmax.f32 %v2888, 0.0
    %v2891 = vmax.f32 %v2889, 0.0
    %v2892 = vand.u32 2147483647, %v2888
    %v2893 = vand.u32 2147483647, %v2889
    %v2894 = vsub.f32 0.0, %v2892
    %v2895 = vsub.f32 0.0, %v2893
    %v2896 = vmul.f32 %v2894, 1.442695
    %v2897 = vpow.pop %v2896
    %v2898 = vmul.f32 %v2895, 1.442695
    %v2899 = vpow.pop %v2898
    %v2900 = vadd.f32 %v2897, 1.0
    %v2901 = vadd.f32 %v2899, 1.0
    %v2902 = vlog2.pop %v2900
    %v2903 = vmul.f32 %v2902, 0.6931472
    %v2904 = vlog2.pop %v2901
    %v2905 = vmul.f32 %v2904, 0.6931472
    %v2906 = vadd.f32 %v2890, %v2903
    %v2907 = vadd.f32 %v2891, %v2905
    %v2908 = vld [vmem:[%s2674 + $0x20] sm:$0xff]
    %v2909 = vld [vmem:[%s2674 + $0x28] sm:$0xff]
    %v2910 = vld [vmem:[%s2674 + $0x30] sm:$0xff]
    %v2911 = vld [vmem:[%s2674 + $0x38] sm:$0xff]
    %v2912 = vperm.slane %v2906, 0
    %v2913 = vlaneseq
    %v2914 = vshrl.u32 %v2913, 7
    %2916 = vset.pattern.permute.xlu0 %v2914
    %2917 = vperm.xlu0 %2916, %v2912
    %v2918 = vpop.permute.xlu0 %2917
    %v2919 = vlaneseq
    %v2920 = vshrl.u32 %v2919, 7
    %v2921 = vadd.s32 %v2920, 8
    %2922 = vset.pattern.permute.xlu0 %v2921
    %2923 = vperm.xlu0 %2922, %v2912
    %v2924 = vpop.permute.xlu0 %2923
    %v2925 = vlaneseq
    %v2926 = vshrl.u32 %v2925, 7
    %v2927 = vadd.s32 %v2926, 16
    %2928 = vset.pattern.permute.xlu0 %v2927
    %2929 = vperm.xlu0 %2928, %v2912
    %v2930 = vpop.permute.xlu0 %2929
    %v2931 = vlaneseq
    %v2932 = vshrl.u32 %v2931, 7
    %v2933 = vadd.s32 %v2932, 24
    %2934 = vset.pattern.permute.xlu0 %v2933
    %2935 = vperm.xlu0 %2934, %v2912
    %v2936 = vpop.permute.xlu0 %2935
    %v2937 = vperm.slane %v2906, 1
    %v2938 = vlaneseq
    %v2939 = vshrl.u32 %v2938, 7
    %2941 = vset.pattern.permute.xlu0 %v2939
    %2942 = vperm.xlu0 %2941, %v2937
    %v2943 = vpop.permute.xlu0 %2942
    %v2944 = vlaneseq
    %v2945 = vshrl.u32 %v2944, 7
    %v2946 = vadd.s32 %v2945, 8
    %2947 = vset.pattern.permute.xlu0 %v2946
    %2948 = vperm.xlu0 %2947, %v2937
    %v2949 = vpop.permute.xlu0 %2948
    %v2950 = vlaneseq
    %v2951 = vshrl.u32 %v2950, 7
    %v2952 = vadd.s32 %v2951, 16
    %2953 = vset.pattern.permute.xlu0 %v2952
    %2954 = vperm.xlu0 %2953, %v2937
    %v2955 = vpop.permute.xlu0 %2954
    %v2956 = vlaneseq
    %v2957 = vshrl.u32 %v2956, 7
    %v2958 = vadd.s32 %v2957, 24
    %2959 = vset.pattern.permute.xlu0 %v2958
    %2960 = vperm.xlu0 %2959, %v2937
    %v2961 = vpop.permute.xlu0 %2960
    %v2962 = vperm.slane %v2906, 2
    %v2963 = vlaneseq
    %v2964 = vshrl.u32 %v2963, 7
    %2966 = vset.pattern.permute.xlu0 %v2964
    %2967 = vperm.xlu0 %2966, %v2962
    %v2968 = vpop.permute.xlu0 %2967
    %v2969 = vlaneseq
    %v2970 = vshrl.u32 %v2969, 7
    %v2971 = vadd.s32 %v2970, 8
    %2972 = vset.pattern.permute.xlu0 %v2971
    %2973 = vperm.xlu0 %2972, %v2962
    %v2974 = vpop.permute.xlu0 %2973
    %v2975 = vlaneseq
    %v2976 = vshrl.u32 %v2975, 7
    %v2977 = vadd.s32 %v2976, 16
    %2978 = vset.pattern.permute.xlu0 %v2977
    %2979 = vperm.xlu0 %2978, %v2962
    %v2980 = vpop.permute.xlu0 %2979
    %v2981 = vlaneseq
    %v2982 = vshrl.u32 %v2981, 7
    %v2983 = vadd.s32 %v2982, 24
    %2984 = vset.pattern.permute.xlu0 %v2983
    %2985 = vperm.xlu0 %2984, %v2962
    %v2986 = vpop.permute.xlu0 %2985
    %v2987 = vperm.slane %v2906, 3
    %v2988 = vlaneseq
    %v2989 = vshrl.u32 %v2988, 7
    %2991 = vset.pattern.permute.xlu0 %v2989
    %2992 = vperm.xlu0 %2991, %v2987
    %v2993 = vpop.permute.xlu0 %2992
    %v2994 = vlaneseq
    %v2995 = vshrl.u32 %v2994, 7
    %v2996 = vadd.s32 %v2995, 8
    %2997 = vset.pattern.permute.xlu0 %v2996
    %2998 = vperm.xlu0 %2997, %v2987
    %v2999 = vpop.permute.xlu0 %2998
    %v3000 = vlaneseq
    %v3001 = vshrl.u32 %v3000, 7
    %v3002 = vadd.s32 %v3001, 16
    %3003 = vset.pattern.permute.xlu0 %v3002
    %3004 = vperm.xlu0 %3003, %v2987
    %v3005 = vpop.permute.xlu0 %3004
    %v3006 = vlaneseq
    %v3007 = vshrl.u32 %v3006, 7
    %v3008 = vadd.s32 %v3007, 24
    %3009 = vset.pattern.permute.xlu0 %v3008
    %3010 = vperm.xlu0 %3009, %v2987
    %v3011 = vpop.permute.xlu0 %3010
    %v3012 = vperm.slane %v2906, 4
    %v3013 = vlaneseq
    %v3014 = vshrl.u32 %v3013, 7
    %3016 = vset.pattern.permute.xlu0 %v3014
    %3017 = vperm.xlu0 %3016, %v3012
    %v3018 = vpop.permute.xlu0 %3017
    %v3019 = vlaneseq
    %v3020 = vshrl.u32 %v3019, 7
    %v3021 = vadd.s32 %v3020, 8
    %3022 = vset.pattern.permute.xlu0 %v3021
    %3023 = vperm.xlu0 %3022, %v3012
    %v3024 = vpop.permute.xlu0 %3023
    %v3025 = vlaneseq
    %v3026 = vshrl.u32 %v3025, 7
    %v3027 = vadd.s32 %v3026, 16
    %3028 = vset.pattern.permute.xlu0 %v3027
    %3029 = vperm.xlu0 %3028, %v3012
    %v3030 = vpop.permute.xlu0 %3029
    %v3031 = vlaneseq
    %v3032 = vshrl.u32 %v3031, 7
    %v3033 = vadd.s32 %v3032, 24
    %3034 = vset.pattern.permute.xlu0 %v3033
    %3035 = vperm.xlu0 %3034, %v3012
    %v3036 = vpop.permute.xlu0 %3035
    %v3037 = vperm.slane %v2906, 5
    %v3038 = vlaneseq
    %v3039 = vshrl.u32 %v3038, 7
    %3041 = vset.pattern.permute.xlu0 %v3039
    %3042 = vperm.xlu0 %3041, %v3037
    %v3043 = vpop.permute.xlu0 %3042
    %v3044 = vlaneseq
    %v3045 = vshrl.u32 %v3044, 7
    %v3046 = vadd.s32 %v3045, 8
    %3047 = vset.pattern.permute.xlu0 %v3046
    %3048 = vperm.xlu0 %3047, %v3037
    %v3049 = vpop.permute.xlu0 %3048
    %v3050 = vlaneseq
    %v3051 = vshrl.u32 %v3050, 7
    %v3052 = vadd.s32 %v3051, 16
    %3053 = vset.pattern.permute.xlu0 %v3052
    %3054 = vperm.xlu0 %3053, %v3037
    %v3055 = vpop.permute.xlu0 %3054
    %v3056 = vlaneseq
    %v3057 = vshrl.u32 %v3056, 7
    %v3058 = vadd.s32 %v3057, 24
    %3059 = vset.pattern.permute.xlu0 %v3058
    %3060 = vperm.xlu0 %3059, %v3037
    %v3061 = vpop.permute.xlu0 %3060
    %v3062 = vperm.slane %v2906, 6
    %v3063 = vlaneseq
    %v3064 = vshrl.u32 %v3063, 7
    %3066 = vset.pattern.permute.xlu0 %v3064
    %3067 = vperm.xlu0 %3066, %v3062
    %v3068 = vpop.permute.xlu0 %3067
    %v3069 = vlaneseq
    %v3070 = vshrl.u32 %v3069, 7
    %v3071 = vadd.s32 %v3070, 8
    %3072 = vset.pattern.permute.xlu0 %v3071
    %3073 = vperm.xlu0 %3072, %v3062
    %v3074 = vpop.permute.xlu0 %3073
    %v3075 = vlaneseq
    %v3076 = vshrl.u32 %v3075, 7
    %v3077 = vadd.s32 %v3076, 16
    %3078 = vset.pattern.permute.xlu0 %v3077
    %3079 = vperm.xlu0 %3078, %v3062
    %v3080 = vpop.permute.xlu0 %3079
    %v3081 = vlaneseq
    %v3082 = vshrl.u32 %v3081, 7
    %v3083 = vadd.s32 %v3082, 24
    %3084 = vset.pattern.permute.xlu0 %v3083
    %3085 = vperm.xlu0 %3084, %v3062
    %v3086 = vpop.permute.xlu0 %3085
    %v3087 = vperm.slane %v2906, 7
    %v3088 = vlaneseq
    %v3089 = vshrl.u32 %v3088, 7
    %3091 = vset.pattern.permute.xlu0 %v3089
    %3092 = vperm.xlu0 %3091, %v3087
    %v3093 = vpop.permute.xlu0 %3092
    %v3094 = vlaneseq
    %v3095 = vshrl.u32 %v3094, 7
    %v3096 = vadd.s32 %v3095, 8
    %3097 = vset.pattern.permute.xlu0 %v3096
    %3098 = vperm.xlu0 %3097, %v3087
    %v3099 = vpop.permute.xlu0 %3098
    %v3100 = vlaneseq
    %v3101 = vshrl.u32 %v3100, 7
    %v3102 = vadd.s32 %v3101, 16
    %3103 = vset.pattern.permute.xlu0 %v3102
    %3104 = vperm.xlu0 %3103, %v3087
    %v3105 = vpop.permute.xlu0 %3104
    %v3106 = vlaneseq
    %v3107 = vshrl.u32 %v3106, 7
    %v3108 = vadd.s32 %v3107, 24
    %3109 = vset.pattern.permute.xlu0 %v3108
    %3110 = vperm.xlu0 %3109, %v3087
    %v3111 = vpop.permute.xlu0 %3110
    %v3112 = vperm.slane %v2907, 0
    %v3113 = vlaneseq
    %v3114 = vshrl.u32 %v3113, 7
    %3116 = vset.pattern.permute.xlu0 %v3114
    %3117 = vperm.xlu0 %3116, %v3112
    %v3118 = vpop.permute.xlu0 %3117
    %v3119 = vlaneseq
    %v3120 = vshrl.u32 %v3119, 7
    %v3121 = vadd.s32 %v3120, 8
    %3122 = vset.pattern.permute.xlu0 %v3121
    %3123 = vperm.xlu0 %3122, %v3112
    %v3124 = vpop.permute.xlu0 %3123
    %v3125 = vlaneseq
    %v3126 = vshrl.u32 %v3125, 7
    %v3127 = vadd.s32 %v3126, 16
    %3128 = vset.pattern.permute.xlu0 %v3127
    %3129 = vperm.xlu0 %3128, %v3112
    %v3130 = vpop.permute.xlu0 %3129
    %v3131 = vlaneseq
    %v3132 = vshrl.u32 %v3131, 7
    %v3133 = vadd.s32 %v3132, 24
    %3134 = vset.pattern.permute.xlu0 %v3133
    %3135 = vperm.xlu0 %3134, %v3112
    %v3136 = vpop.permute.xlu0 %3135
    %v3137 = vperm.slane %v2907, 1
    %v3138 = vlaneseq
    %v3139 = vshrl.u32 %v3138, 7
    %3141 = vset.pattern.permute.xlu0 %v3139
    %3142 = vperm.xlu0 %3141, %v3137
    %v3143 = vpop.permute.xlu0 %3142
    %v3144 = vlaneseq
    %v3145 = vshrl.u32 %v3144, 7
    %v3146 = vadd.s32 %v3145, 8
    %3147 = vset.pattern.permute.xlu0 %v3146
    %3148 = vperm.xlu0 %3147, %v3137
    %v3149 = vpop.permute.xlu0 %3148
    %v3150 = vlaneseq
    %v3151 = vshrl.u32 %v3150, 7
    %v3152 = vadd.s32 %v3151, 16
    %3153 = vset.pattern.permute.xlu0 %v3152
    %3154 = vperm.xlu0 %3153, %v3137
    %v3155 = vpop.permute.xlu0 %3154
    %v3156 = vlaneseq
    %v3157 = vshrl.u32 %v3156, 7
    %v3158 = vadd.s32 %v3157, 24
    %3159 = vset.pattern.permute.xlu0 %v3158
    %3160 = vperm.xlu0 %3159, %v3137
    %v3161 = vpop.permute.xlu0 %3160
    %v3162 = vperm.slane %v2907, 2
    %v3163 = vlaneseq
    %v3164 = vshrl.u32 %v3163, 7
    %3166 = vset.pattern.permute.xlu0 %v3164
    %3167 = vperm.xlu0 %3166, %v3162
    %v3168 = vpop.permute.xlu0 %3167
    %v3169 = vlaneseq
    %v3170 = vshrl.u32 %v3169, 7
    %v3171 = vadd.s32 %v3170, 8
    %3172 = vset.pattern.permute.xlu0 %v3171
    %3173 = vperm.xlu0 %3172, %v3162
    %v3174 = vpop.permute.xlu0 %3173
    %v3175 = vlaneseq
    %v3176 = vshrl.u32 %v3175, 7
    %v3177 = vadd.s32 %v3176, 16
    %3178 = vset.pattern.permute.xlu0 %v3177
    %3179 = vperm.xlu0 %3178, %v3162
    %v3180 = vpop.permute.xlu0 %3179
    %v3181 = vlaneseq
    %v3182 = vshrl.u32 %v3181, 7
    %v3183 = vadd.s32 %v3182, 24
    %3184 = vset.pattern.permute.xlu0 %v3183
    %3185 = vperm.xlu0 %3184, %v3162
    %v3186 = vpop.permute.xlu0 %3185
    %v3187 = vperm.slane %v2907, 3
    %v3188 = vlaneseq
    %v3189 = vshrl.u32 %v3188, 7
    %3191 = vset.pattern.permute.xlu0 %v3189
    %3192 = vperm.xlu0 %3191, %v3187
    %v3193 = vpop.permute.xlu0 %3192
    %v3194 = vlaneseq
    %v3195 = vshrl.u32 %v3194, 7
    %v3196 = vadd.s32 %v3195, 8
    %3197 = vset.pattern.permute.xlu0 %v3196
    %3198 = vperm.xlu0 %3197, %v3187
    %v3199 = vpop.permute.xlu0 %3198
    %v3200 = vlaneseq
    %v3201 = vshrl.u32 %v3200, 7
    %v3202 = vadd.s32 %v3201, 16
    %3203 = vset.pattern.permute.xlu0 %v3202
    %3204 = vperm.xlu0 %3203, %v3187
    %v3205 = vpop.permute.xlu0 %3204
    %v3206 = vlaneseq
    %v3207 = vshrl.u32 %v3206, 7
    %v3208 = vadd.s32 %v3207, 24
    %3209 = vset.pattern.permute.xlu0 %v3208
    %3210 = vperm.xlu0 %3209, %v3187
    %v3211 = vpop.permute.xlu0 %3210
    %v3212 = vperm.slane %v2907, 4
    %v3213 = vlaneseq
    %v3214 = vshrl.u32 %v3213, 7
    %3216 = vset.pattern.permute.xlu0 %v3214
    %3217 = vperm.xlu0 %3216, %v3212
    %v3218 = vpop.permute.xlu0 %3217
    %v3219 = vlaneseq
    %v3220 = vshrl.u32 %v3219, 7
    %v3221 = vadd.s32 %v3220, 8
    %3222 = vset.pattern.permute.xlu0 %v3221
    %3223 = vperm.xlu0 %3222, %v3212
    %v3224 = vpop.permute.xlu0 %3223
    %v3225 = vlaneseq
    %v3226 = vshrl.u32 %v3225, 7
    %v3227 = vadd.s32 %v3226, 16
    %3228 = vset.pattern.permute.xlu0 %v3227
    %3229 = vperm.xlu0 %3228, %v3212
    %v3230 = vpop.permute.xlu0 %3229
    %v3231 = vlaneseq
    %v3232 = vshrl.u32 %v3231, 7
    %v3233 = vadd.s32 %v3232, 24
    %3234 = vset.pattern.permute.xlu0 %v3233
    %3235 = vperm.xlu0 %3234, %v3212
    %v3236 = vpop.permute.xlu0 %3235
    %v3237 = vperm.slane %v2907, 5
    %v3238 = vlaneseq
    %v3239 = vshrl.u32 %v3238, 7
    %3241 = vset.pattern.permute.xlu0 %v3239
    %3242 = vperm.xlu0 %3241, %v3237
    %v3243 = vpop.permute.xlu0 %3242
    %v3244 = vlaneseq
    %v3245 = vshrl.u32 %v3244, 7
    %v3246 = vadd.s32 %v3245, 8
    %3247 = vset.pattern.permute.xlu0 %v3246
    %3248 = vperm.xlu0 %3247, %v3237
    %v3249 = vpop.permute.xlu0 %3248
    %v3250 = vlaneseq
    %v3251 = vshrl.u32 %v3250, 7
    %v3252 = vadd.s32 %v3251, 16
    %3253 = vset.pattern.permute.xlu0 %v3252
    %3254 = vperm.xlu0 %3253, %v3237
    %v3255 = vpop.permute.xlu0 %3254
    %v3256 = vlaneseq
    %v3257 = vshrl.u32 %v3256, 7
    %v3258 = vadd.s32 %v3257, 24
    %3259 = vset.pattern.permute.xlu0 %v3258
    %3260 = vperm.xlu0 %3259, %v3237
    %v3261 = vpop.permute.xlu0 %3260
    %v3262 = vperm.slane %v2907, 6
    %v3263 = vlaneseq
    %v3264 = vshrl.u32 %v3263, 7
    %3266 = vset.pattern.permute.xlu0 %v3264
    %3267 = vperm.xlu0 %3266, %v3262
    %v3268 = vpop.permute.xlu0 %3267
    %v3269 = vlaneseq
    %v3270 = vshrl.u32 %v3269, 7
    %v3271 = vadd.s32 %v3270, 8
    %3272 = vset.pattern.permute.xlu0 %v3271
    %3273 = vperm.xlu0 %3272, %v3262
    %v3274 = vpop.permute.xlu0 %3273
    %v3275 = vlaneseq
    %v3276 = vshrl.u32 %v3275, 7
    %v3277 = vadd.s32 %v3276, 16
    %3278 = vset.pattern.permute.xlu0 %v3277
    %3279 = vperm.xlu0 %3278, %v3262
    %v3280 = vpop.permute.xlu0 %3279
    %v3281 = vlaneseq
    %v3282 = vshrl.u32 %v3281, 7
    %v3283 = vadd.s32 %v3282, 24
    %3284 = vset.pattern.permute.xlu0 %v3283
    %3285 = vperm.xlu0 %3284, %v3262
    %v3286 = vpop.permute.xlu0 %3285
    %v3287 = vperm.slane %v2907, 7
    %v3288 = vlaneseq
    %v3289 = vshrl.u32 %v3288, 7
    %3291 = vset.pattern.permute.xlu0 %v3289
    %3292 = vperm.xlu0 %3291, %v3287
    %v3293 = vpop.permute.xlu0 %3292
    %v3294 = vlaneseq
    %v3295 = vshrl.u32 %v3294, 7
    %v3296 = vadd.s32 %v3295, 8
    %3297 = vset.pattern.permute.xlu0 %v3296
    %3298 = vperm.xlu0 %3297, %v3287
    %v3299 = vpop.permute.xlu0 %3298
    %v3300 = vlaneseq
    %v3301 = vshrl.u32 %v3300, 7
    %v3302 = vadd.s32 %v3301, 16
    %3303 = vset.pattern.permute.xlu0 %v3302
    %3304 = vperm.xlu0 %3303, %v3287
    %v3305 = vpop.permute.xlu0 %3304
    %v3306 = vlaneseq
    %v3307 = vshrl.u32 %v3306, 7
    %v3308 = vadd.s32 %v3307, 24
    %3309 = vset.pattern.permute.xlu0 %v3308
    %3310 = vperm.xlu0 %3309, %v3287
    %v3311 = vpop.permute.xlu0 %3310
    %v3312 = vmul.f32 %v2918, %v2908
    %v3313 = vmul.f32 %v2924, %v2909
    %v3314 = vmul.f32 %v2930, %v2910
    %v3315 = vmul.f32 %v2936, %v2911
    %v3316 = vmul.f32 %v2943, %v2908
    %v3317 = vmul.f32 %v2949, %v2909
    %v3318 = vmul.f32 %v2955, %v2910
    %v3319 = vmul.f32 %v2961, %v2911
    %v3320 = vmul.f32 %v2968, %v2908
    %v3321 = vmul.f32 %v2974, %v2909
    %v3322 = vmul.f32 %v2980, %v2910
    %v3323 = vmul.f32 %v2986, %v2911
    %v3324 = vmul.f32 %v2993, %v2908
    %v3325 = vmul.f32 %v2999, %v2909
    %v3326 = vmul.f32 %v3005, %v2910
    %v3327 = vmul.f32 %v3011, %v2911
    %v3328 = vmul.f32 %v3018, %v2908
    %v3329 = vmul.f32 %v3024, %v2909
    %v3330 = vmul.f32 %v3030, %v2910
    %v3331 = vmul.f32 %v3036, %v2911
    %v3332 = vmul.f32 %v3043, %v2908
    %v3333 = vmul.f32 %v3049, %v2909
    %v3334 = vmul.f32 %v3055, %v2910
    %v3335 = vmul.f32 %v3061, %v2911
    %v3336 = vmul.f32 %v3068, %v2908
    %v3337 = vmul.f32 %v3074, %v2909
    %v3338 = vmul.f32 %v3080, %v2910
    %v3339 = vmul.f32 %v3086, %v2911
    %v3340 = vmul.f32 %v3093, %v2908
    %v3341 = vmul.f32 %v3099, %v2909
    %v3342 = vmul.f32 %v3105, %v2910
    %v3343 = vmul.f32 %v3111, %v2911
    %v3344 = vmul.f32 %v3118, %v2908
    %v3345 = vmul.f32 %v3124, %v2909
    %v3346 = vmul.f32 %v3130, %v2910
    %v3347 = vmul.f32 %v3136, %v2911
    %v3348 = vmul.f32 %v3143, %v2908
    %v3349 = vmul.f32 %v3149, %v2909
    %v3350 = vmul.f32 %v3155, %v2910
    %v3351 = vmul.f32 %v3161, %v2911
    %v3352 = vmul.f32 %v3168, %v2908
    %v3353 = vmul.f32 %v3174, %v2909
    %v3354 = vmul.f32 %v3180, %v2910
    %v3355 = vmul.f32 %v3186, %v2911
    %v3356 = vmul.f32 %v3193, %v2908
    %v3357 = vmul.f32 %v3199, %v2909
    %v3358 = vmul.f32 %v3205, %v2910
    %v3359 = vmul.f32 %v3211, %v2911
    %v3360 = vmul.f32 %v3218, %v2908
    %v3361 = vmul.f32 %v3224, %v2909
    %v3362 = vmul.f32 %v3230, %v2910
    %v3363 = vmul.f32 %v3236, %v2911
    %v3364 = vmul.f32 %v3243, %v2908
    %v3365 = vmul.f32 %v3249, %v2909
    %v3366 = vmul.f32 %v3255, %v2910
    %v3367 = vmul.f32 %v3261, %v2911
    %v3368 = vmul.f32 %v3268, %v2908
    %v3369 = vmul.f32 %v3274, %v2909
    %v3370 = vmul.f32 %v3280, %v2910
    %v3371 = vmul.f32 %v3286, %v2911
    %v3372 = vmul.f32 %v3293, %v2908
    %v3373 = vmul.f32 %v3299, %v2909
    %v3374 = vmul.f32 %v3305, %v2910
    %v3375 = vmul.f32 %v3311, %v2911
    %v3376 = vmul.f32 %v3312, 1.442695
    %v3377 = vpow.pop %v3376
    %v3378 = vmul.f32 %v3313, 1.442695
    %v3379 = vpow.pop %v3378
    %v3380 = vmul.f32 %v3314, 1.442695
    %v3381 = vpow.pop %v3380
    %v3382 = vmul.f32 %v3315, 1.442695
    %v3383 = vpow.pop %v3382
    %v3384 = vmul.f32 %v3316, 1.442695
    %v3385 = vpow.pop %v3384
    %v3386 = vmul.f32 %v3317, 1.442695
    %v3387 = vpow.pop %v3386
    %v3388 = vmul.f32 %v3318, 1.442695
    %v3389 = vpow.pop %v3388
    %v3390 = vmul.f32 %v3319, 1.442695
    %v3391 = vpow.pop %v3390
    %v3392 = vmul.f32 %v3320, 1.442695
    %v3393 = vpow.pop %v3392
    %v3394 = vmul.f32 %v3321, 1.442695
    %v3395 = vpow.pop %v3394
    %v3396 = vmul.f32 %v3322, 1.442695
    %v3397 = vpow.pop %v3396
    %v3398 = vmul.f32 %v3323, 1.442695
    %v3399 = vpow.pop %v3398
    %v3400 = vmul.f32 %v3324, 1.442695
    %v3401 = vpow.pop %v3400
    %v3402 = vmul.f32 %v3325, 1.442695
    %v3403 = vpow.pop %v3402
    %v3404 = vmul.f32 %v3326, 1.442695
    %v3405 = vpow.pop %v3404
    %v3406 = vmul.f32 %v3327, 1.442695
    %v3407 = vpow.pop %v3406
    %v3408 = vmul.f32 %v3328, 1.442695
    %v3409 = vpow.pop %v3408
    %v3410 = vmul.f32 %v3329, 1.442695
    %v3411 = vpow.pop %v3410
    %v3412 = vmul.f32 %v3330, 1.442695
    %v3413 = vpow.pop %v3412
    %v3414 = vmul.f32 %v3331, 1.442695
    %v3415 = vpow.pop %v3414
    %v3416 = vmul.f32 %v3332, 1.442695
    %v3417 = vpow.pop %v3416
    %v3418 = vmul.f32 %v3333, 1.442695
    %v3419 = vpow.pop %v3418
    %v3420 = vmul.f32 %v3334, 1.442695
    %v3421 = vpow.pop %v3420
    %v3422 = vmul.f32 %v3335, 1.442695
    %v3423 = vpow.pop %v3422
    %v3424 = vmul.f32 %v3336, 1.442695
    %v3425 = vpow.pop %v3424
    %v3426 = vmul.f32 %v3337, 1.442695
    %v3427 = vpow.pop %v3426
    %v3428 = vmul.f32 %v3338, 1.442695
    %v3429 = vpow.pop %v3428
    %v3430 = vmul.f32 %v3339, 1.442695
    %v3431 = vpow.pop %v3430
    %v3432 = vmul.f32 %v3340, 1.442695
    %v3433 = vpow.pop %v3432
    %v3434 = vmul.f32 %v3341, 1.442695
    %v3435 = vpow.pop %v3434
    %v3436 = vmul.f32 %v3342, 1.442695
    %v3437 = vpow.pop %v3436
    %v3438 = vmul.f32 %v3343, 1.442695
    %v3439 = vpow.pop %v3438
    %v3440 = vmul.f32 %v3344, 1.442695
    %v3441 = vpow.pop %v3440
    %v3442 = vmul.f32 %v3345, 1.442695
    %v3443 = vpow.pop %v3442
    %v3444 = vmul.f32 %v3346, 1.442695
    %v3445 = vpow.pop %v3444
    %v3446 = vmul.f32 %v3347, 1.442695
    %v3447 = vpow.pop %v3446
    %v3448 = vmul.f32 %v3348, 1.442695
    %v3449 = vpow.pop %v3448
    %v3450 = vmul.f32 %v3349, 1.442695
    %v3451 = vpow.pop %v3450
    %v3452 = vmul.f32 %v3350, 1.442695
    %v3453 = vpow.pop %v3452
    %v3454 = vmul.f32 %v3351, 1.442695
    %v3455 = vpow.pop %v3454
    %v3456 = vmul.f32 %v3352, 1.442695
    %v3457 = vpow.pop %v3456
    %v3458 = vmul.f32 %v3353, 1.442695
    %v3459 = vpow.pop %v3458
    %v3460 = vmul.f32 %v3354, 1.442695
    %v3461 = vpow.pop %v3460
    %v3462 = vmul.f32 %v3355, 1.442695
    %v3463 = vpow.pop %v3462
    %v3464 = vmul.f32 %v3356, 1.442695
    %v3465 = vpow.pop %v3464
    %v3466 = vmul.f32 %v3357, 1.442695
    %v3467 = vpow.pop %v3466
    %v3468 = vmul.f32 %v3358, 1.442695
    %v3469 = vpow.pop %v3468
    %v3470 = vmul.f32 %v3359, 1.442695
    %v3471 = vpow.pop %v3470
    %v3472 = vmul.f32 %v3360, 1.442695
    %v3473 = vpow.pop %v3472
    %v3474 = vmul.f32 %v3361, 1.442695
    %v3475 = vpow.pop %v3474
    %v3476 = vmul.f32 %v3362, 1.442695
    %v3477 = vpow.pop %v3476
    %v3478 = vmul.f32 %v3363, 1.442695
    %v3479 = vpow.pop %v3478
    %v3480 = vmul.f32 %v3364, 1.442695
    %v3481 = vpow.pop %v3480
    %v3482 = vmul.f32 %v3365, 1.442695
    %v3483 = vpow.pop %v3482
    %v3484 = vmul.f32 %v3366, 1.442695
    %v3485 = vpow.pop %v3484
    %v3486 = vmul.f32 %v3367, 1.442695
    %v3487 = vpow.pop %v3486
    %v3488 = vmul.f32 %v3368, 1.442695
    %v3489 = vpow.pop %v3488
    %v3490 = vmul.f32 %v3369, 1.442695
    %v3491 = vpow.pop %v3490
    %v3492 = vmul.f32 %v3370, 1.442695
    %v3493 = vpow.pop %v3492
    %v3494 = vmul.f32 %v3371, 1.442695
    %v3495 = vpow.pop %v3494
    %v3496 = vmul.f32 %v3372, 1.442695
    %v3497 = vpow.pop %v3496
    %v3498 = vmul.f32 %v3373, 1.442695
    %v3499 = vpow.pop %v3498
    %v3500 = vmul.f32 %v3374, 1.442695
    %v3501 = vpow.pop %v3500
    %v3502 = vmul.f32 %v3375, 1.442695
    %v3503 = vpow.pop %v3502
    %3504 = vst.msk [vmem:[#allocation3] sm:$0xff] %vm108, %v3377
    %3505 = vst.msk [vmem:[#allocation3 + $0x8] sm:$0xff] %vm108, %v3379
    %3506 = vst.msk [vmem:[#allocation3 + $0x10] sm:$0xff] %vm108, %v3381
    %3507 = vst.msk [vmem:[#allocation3 + $0x18] sm:$0xff] %vm108, %v3383
    %3508 = vst.msk [vmem:[#allocation3 + $0x20] sm:$0xff] %vm108, %v3385
    %3509 = vst.msk [vmem:[#allocation3 + $0x28] sm:$0xff] %vm108, %v3387
    %3510 = vst.msk [vmem:[#allocation3 + $0x30] sm:$0xff] %vm108, %v3389
    %3511 = vst.msk [vmem:[#allocation3 + $0x38] sm:$0xff] %vm108, %v3391
    %3512 = vst.msk [vmem:[#allocation3 + $0x40] sm:$0xff] %vm108, %v3393
    %3513 = vst.msk [vmem:[#allocation3 + $0x48] sm:$0xff] %vm108, %v3395
    %3514 = vst.msk [vmem:[#allocation3 + $0x50] sm:$0xff] %vm108, %v3397
    %3515 = vst.msk [vmem:[#allocation3 + $0x58] sm:$0xff] %vm108, %v3399
    %3516 = vst.msk [vmem:[#allocation3 + $0x60] sm:$0xff] %vm108, %v3401
    %3517 = vst.msk [vmem:[#allocation3 + $0x68] sm:$0xff] %vm108, %v3403
    %3518 = vst.msk [vmem:[#allocation3 + $0x70] sm:$0xff] %vm108, %v3405
    %3519 = vst.msk [vmem:[#allocation3 + $0x78] sm:$0xff] %vm108, %v3407
    %3520 = vst.msk [vmem:[#allocation3 + $0x80] sm:$0xff] %vm108, %v3409
    %3521 = vst.msk [vmem:[#allocation3 + $0x88] sm:$0xff] %vm108, %v3411
    %3522 = vst.msk [vmem:[#allocation3 + $0x90] sm:$0xff] %vm108, %v3413
    %3523 = vst.msk [vmem:[#allocation3 + $0x98] sm:$0xff] %vm108, %v3415
    %3524 = vst.msk [vmem:[#allocation3 + $0xa0] sm:$0xff] %vm108, %v3417
    %3525 = vst.msk [vmem:[#allocation3 + $0xa8] sm:$0xff] %vm108, %v3419
    %3526 = vst.msk [vmem:[#allocation3 + $0xb0] sm:$0xff] %vm108, %v3421
    %3527 = vst.msk [vmem:[#allocation3 + $0xb8] sm:$0xff] %vm108, %v3423
    %3528 = vst.msk [vmem:[#allocation3 + $0xc0] sm:$0xff] %vm108, %v3425
    %3529 = vst.msk [vmem:[#allocation3 + $0xc8] sm:$0xff] %vm108, %v3427
    %3530 = vst.msk [vmem:[#allocation3 + $0xd0] sm:$0xff] %vm108, %v3429
    %3531 = vst.msk [vmem:[#allocation3 + $0xd8] sm:$0xff] %vm108, %v3431
    %3532 = vst.msk [vmem:[#allocation3 + $0xe0] sm:$0xff] %vm108, %v3433
    %3533 = vst.msk [vmem:[#allocation3 + $0xe8] sm:$0xff] %vm108, %v3435
    %3534 = vst.msk [vmem:[#allocation3 + $0xf0] sm:$0xff] %vm108, %v3437
    %3535 = vst.msk [vmem:[#allocation3 + $0xf8] sm:$0xff] %vm108, %v3439
    %3536 = vst.msk [vmem:[#allocation3 + $0x100] sm:$0xff] %vm108, %v3441
    %3537 = vst.msk [vmem:[#allocation3 + $0x108] sm:$0xff] %vm108, %v3443
    %3538 = vst.msk [vmem:[#allocation3 + $0x110] sm:$0xff] %vm108, %v3445
    %3539 = vst.msk [vmem:[#allocation3 + $0x118] sm:$0xff] %vm108, %v3447
    %3540 = vst.msk [vmem:[#allocation3 + $0x120] sm:$0xff] %vm108, %v3449
    %3541 = vst.msk [vmem:[#allocation3 + $0x128] sm:$0xff] %vm108, %v3451
    %3542 = vst.msk [vmem:[#allocation3 + $0x130] sm:$0xff] %vm108, %v3453
    %3543 = vst.msk [vmem:[#allocation3 + $0x138] sm:$0xff] %vm108, %v3455
    %3544 = vst.msk [vmem:[#allocation3 + $0x140] sm:$0xff] %vm108, %v3457
    %3545 = vst.msk [vmem:[#allocation3 + $0x148] sm:$0xff] %vm108, %v3459
    %3546 = vst.msk [vmem:[#allocation3 + $0x150] sm:$0xff] %vm108, %v3461
    %3547 = vst.msk [vmem:[#allocation3 + $0x158] sm:$0xff] %vm108, %v3463
    %3548 = vst.msk [vmem:[#allocation3 + $0x160] sm:$0xff] %vm108, %v3465
    %3549 = vst.msk [vmem:[#allocation3 + $0x168] sm:$0xff] %vm108, %v3467
    %3550 = vst.msk [vmem:[#allocation3 + $0x170] sm:$0xff] %vm108, %v3469
    %3551 = vst.msk [vmem:[#allocation3 + $0x178] sm:$0xff] %vm108, %v3471
    %3552 = vst.msk [vmem:[#allocation3 + $0x180] sm:$0xff] %vm108, %v3473
    %3553 = vst.msk [vmem:[#allocation3 + $0x188] sm:$0xff] %vm108, %v3475
    %3554 = vst.msk [vmem:[#allocation3 + $0x190] sm:$0xff] %vm108, %v3477
    %3555 = vst.msk [vmem:[#allocation3 + $0x198] sm:$0xff] %vm108, %v3479
    %3556 = vst.msk [vmem:[#allocation3 + $0x1a0] sm:$0xff] %vm108, %v3481
    %3557 = vst.msk [vmem:[#allocation3 + $0x1a8] sm:$0xff] %vm108, %v3483
    %3558 = vst.msk [vmem:[#allocation3 + $0x1b0] sm:$0xff] %vm108, %v3485
    %3559 = vst.msk [vmem:[#allocation3 + $0x1b8] sm:$0xff] %vm108, %v3487
    %3560 = vst.msk [vmem:[#allocation3 + $0x1c0] sm:$0xff] %vm108, %v3489
    %3561 = vst.msk [vmem:[#allocation3 + $0x1c8] sm:$0xff] %vm108, %v3491
    %3562 = vst.msk [vmem:[#allocation3 + $0x1d0] sm:$0xff] %vm108, %v3493
    %3563 = vst.msk [vmem:[#allocation3 + $0x1d8] sm:$0xff] %vm108, %v3495
    %3564 = vst.msk [vmem:[#allocation3 + $0x1e0] sm:$0xff] %vm108, %v3497
    %3565 = vst.msk [vmem:[#allocation3 + $0x1e8] sm:$0xff] %vm108, %v3499
    %3566 = vst.msk [vmem:[#allocation3 + $0x1f0] sm:$0xff] %vm108, %v3501
    %3567 = vst.msk [vmem:[#allocation3 + $0x1f8] sm:$0xff] %vm108, %v3503
    %v3568 = vmul.f32 %v2906, %v2851
    %v3569 = vmul.f32 %v2907, %v2852
    %v3570 = vperm.slane %v3568, 0
    %v3571 = vlaneseq
    %v3572 = vshrl.u32 %v3571, 7
    %3574 = vset.pattern.permute.xlu0 %v3572
    %3575 = vperm.xlu0 %3574, %v3570
    %v3576 = vpop.permute.xlu0 %3575
    %v3577 = vlaneseq
    %v3578 = vshrl.u32 %v3577, 7
    %v3579 = vadd.s32 %v3578, 8
    %3580 = vset.pattern.permute.xlu0 %v3579
    %3581 = vperm.xlu0 %3580, %v3570
    %v3582 = vpop.permute.xlu0 %3581
    %v3583 = vlaneseq
    %v3584 = vshrl.u32 %v3583, 7
    %v3585 = vadd.s32 %v3584, 16
    %3586 = vset.pattern.permute.xlu0 %v3585
    %3587 = vperm.xlu0 %3586, %v3570
    %v3588 = vpop.permute.xlu0 %3587
    %v3589 = vlaneseq
    %v3590 = vshrl.u32 %v3589, 7
    %v3591 = vadd.s32 %v3590, 24
    %3592 = vset.pattern.permute.xlu0 %v3591
    %3593 = vperm.xlu0 %3592, %v3570
    %v3594 = vpop.permute.xlu0 %3593
    %v3595 = vperm.slane %v3568, 1
    %v3596 = vlaneseq
    %v3597 = vshrl.u32 %v3596, 7
    %3599 = vset.pattern.permute.xlu0 %v3597
    %3600 = vperm.xlu0 %3599, %v3595
    %v3601 = vpop.permute.xlu0 %3600
    %v3602 = vlaneseq
    %v3603 = vshrl.u32 %v3602, 7
    %v3604 = vadd.s32 %v3603, 8
    %3605 = vset.pattern.permute.xlu0 %v3604
    %3606 = vperm.xlu0 %3605, %v3595
    %v3607 = vpop.permute.xlu0 %3606
    %v3608 = vlaneseq
    %v3609 = vshrl.u32 %v3608, 7
    %v3610 = vadd.s32 %v3609, 16
    %3611 = vset.pattern.permute.xlu0 %v3610
    %3612 = vperm.xlu0 %3611, %v3595
    %v3613 = vpop.permute.xlu0 %3612
    %v3614 = vlaneseq
    %v3615 = vshrl.u32 %v3614, 7
    %v3616 = vadd.s32 %v3615, 24
    %3617 = vset.pattern.permute.xlu0 %v3616
    %3618 = vperm.xlu0 %3617, %v3595
    %v3619 = vpop.permute.xlu0 %3618
    %v3620 = vperm.slane %v3568, 2
    %v3621 = vlaneseq
    %v3622 = vshrl.u32 %v3621, 7
    %3624 = vset.pattern.permute.xlu0 %v3622
    %3625 = vperm.xlu0 %3624, %v3620
    %v3626 = vpop.permute.xlu0 %3625
    %v3627 = vlaneseq
    %v3628 = vshrl.u32 %v3627, 7
    %v3629 = vadd.s32 %v3628, 8
    %3630 = vset.pattern.permute.xlu0 %v3629
    %3631 = vperm.xlu0 %3630, %v3620
    %v3632 = vpop.permute.xlu0 %3631
    %v3633 = vlaneseq
    %v3634 = vshrl.u32 %v3633, 7
    %v3635 = vadd.s32 %v3634, 16
    %3636 = vset.pattern.permute.xlu0 %v3635
    %3637 = vperm.xlu0 %3636, %v3620
    %v3638 = vpop.permute.xlu0 %3637
    %v3639 = vlaneseq
    %v3640 = vshrl.u32 %v3639, 7
    %v3641 = vadd.s32 %v3640, 24
    %3642 = vset.pattern.permute.xlu0 %v3641
    %3643 = vperm.xlu0 %3642, %v3620
    %v3644 = vpop.permute.xlu0 %3643
    %v3645 = vperm.slane %v3568, 3
    %v3646 = vlaneseq
    %v3647 = vshrl.u32 %v3646, 7
    %3649 = vset.pattern.permute.xlu0 %v3647
    %3650 = vperm.xlu0 %3649, %v3645
    %v3651 = vpop.permute.xlu0 %3650
    %v3652 = vlaneseq
    %v3653 = vshrl.u32 %v3652, 7
    %v3654 = vadd.s32 %v3653, 8
    %3655 = vset.pattern.permute.xlu0 %v3654
    %3656 = vperm.xlu0 %3655, %v3645
    %v3657 = vpop.permute.xlu0 %3656
    %v3658 = vlaneseq
    %v3659 = vshrl.u32 %v3658, 7
    %v3660 = vadd.s32 %v3659, 16
    %3661 = vset.pattern.permute.xlu0 %v3660
    %3662 = vperm.xlu0 %3661, %v3645
    %v3663 = vpop.permute.xlu0 %3662
    %v3664 = vlaneseq
    %v3665 = vshrl.u32 %v3664, 7
    %v3666 = vadd.s32 %v3665, 24
    %3667 = vset.pattern.permute.xlu0 %v3666
    %3668 = vperm.xlu0 %3667, %v3645
    %v3669 = vpop.permute.xlu0 %3668
    %v3670 = vperm.slane %v3568, 4
    %v3671 = vlaneseq
    %v3672 = vshrl.u32 %v3671, 7
    %3674 = vset.pattern.permute.xlu0 %v3672
    %3675 = vperm.xlu0 %3674, %v3670
    %v3676 = vpop.permute.xlu0 %3675
    %v3677 = vlaneseq
    %v3678 = vshrl.u32 %v3677, 7
    %v3679 = vadd.s32 %v3678, 8
    %3680 = vset.pattern.permute.xlu0 %v3679
    %3681 = vperm.xlu0 %3680, %v3670
    %v3682 = vpop.permute.xlu0 %3681
    %v3683 = vlaneseq
    %v3684 = vshrl.u32 %v3683, 7
    %v3685 = vadd.s32 %v3684, 16
    %3686 = vset.pattern.permute.xlu0 %v3685
    %3687 = vperm.xlu0 %3686, %v3670
    %v3688 = vpop.permute.xlu0 %3687
    %v3689 = vlaneseq
    %v3690 = vshrl.u32 %v3689, 7
    %v3691 = vadd.s32 %v3690, 24
    %3692 = vset.pattern.permute.xlu0 %v3691
    %3693 = vperm.xlu0 %3692, %v3670
    %v3694 = vpop.permute.xlu0 %3693
    %v3695 = vperm.slane %v3568, 5
    %v3696 = vlaneseq
    %v3697 = vshrl.u32 %v3696, 7
    %3699 = vset.pattern.permute.xlu0 %v3697
    %3700 = vperm.xlu0 %3699, %v3695
    %v3701 = vpop.permute.xlu0 %3700
    %v3702 = vlaneseq
    %v3703 = vshrl.u32 %v3702, 7
    %v3704 = vadd.s32 %v3703, 8
    %3705 = vset.pattern.permute.xlu0 %v3704
    %3706 = vperm.xlu0 %3705, %v3695
    %v3707 = vpop.permute.xlu0 %3706
    %v3708 = vlaneseq
    %v3709 = vshrl.u32 %v3708, 7
    %v3710 = vadd.s32 %v3709, 16
    %3711 = vset.pattern.permute.xlu0 %v3710
    %3712 = vperm.xlu0 %3711, %v3695
    %v3713 = vpop.permute.xlu0 %3712
    %v3714 = vlaneseq
    %v3715 = vshrl.u32 %v3714, 7
    %v3716 = vadd.s32 %v3715, 24
    %3717 = vset.pattern.permute.xlu0 %v3716
    %3718 = vperm.xlu0 %3717, %v3695
    %v3719 = vpop.permute.xlu0 %3718
    %v3720 = vperm.slane %v3568, 6
    %v3721 = vlaneseq
    %v3722 = vshrl.u32 %v3721, 7
    %3724 = vset.pattern.permute.xlu0 %v3722
    %3725 = vperm.xlu0 %3724, %v3720
    %v3726 = vpop.permute.xlu0 %3725
    %v3727 = vlaneseq
    %v3728 = vshrl.u32 %v3727, 7
    %v3729 = vadd.s32 %v3728, 8
    %3730 = vset.pattern.permute.xlu0 %v3729
    %3731 = vperm.xlu0 %3730, %v3720
    %v3732 = vpop.permute.xlu0 %3731
    %v3733 = vlaneseq
    %v3734 = vshrl.u32 %v3733, 7
    %v3735 = vadd.s32 %v3734, 16
    %3736 = vset.pattern.permute.xlu0 %v3735
    %3737 = vperm.xlu0 %3736, %v3720
    %v3738 = vpop.permute.xlu0 %3737
    %v3739 = vlaneseq
    %v3740 = vshrl.u32 %v3739, 7
    %v3741 = vadd.s32 %v3740, 24
    %3742 = vset.pattern.permute.xlu0 %v3741
    %3743 = vperm.xlu0 %3742, %v3720
    %v3744 = vpop.permute.xlu0 %3743
    %v3745 = vperm.slane %v3568, 7
    %v3746 = vlaneseq
    %v3747 = vshrl.u32 %v3746, 7
    %3749 = vset.pattern.permute.xlu0 %v3747
    %3750 = vperm.xlu0 %3749, %v3745
    %v3751 = vpop.permute.xlu0 %3750
    %v3752 = vlaneseq
    %v3753 = vshrl.u32 %v3752, 7
    %v3754 = vadd.s32 %v3753, 8
    %3755 = vset.pattern.permute.xlu0 %v3754
    %3756 = vperm.xlu0 %3755, %v3745
    %v3757 = vpop.permute.xlu0 %3756
    %v3758 = vlaneseq
    %v3759 = vshrl.u32 %v3758, 7
    %v3760 = vadd.s32 %v3759, 16
    %3761 = vset.pattern.permute.xlu0 %v3760
    %3762 = vperm.xlu0 %3761, %v3745
    %v3763 = vpop.permute.xlu0 %3762
    %v3764 = vlaneseq
    %v3765 = vshrl.u32 %v3764, 7
    %v3766 = vadd.s32 %v3765, 24
    %3767 = vset.pattern.permute.xlu0 %v3766
    %3768 = vperm.xlu0 %3767, %v3745
    %v3769 = vpop.permute.xlu0 %3768
    %v3770 = vperm.slane %v3569, 0
    %v3771 = vlaneseq
    %v3772 = vshrl.u32 %v3771, 7
    %3774 = vset.pattern.permute.xlu0 %v3772
    %3775 = vperm.xlu0 %3774, %v3770
    %v3776 = vpop.permute.xlu0 %3775
    %v3777 = vlaneseq
    %v3778 = vshrl.u32 %v3777, 7
    %v3779 = vadd.s32 %v3778, 8
    %3780 = vset.pattern.permute.xlu0 %v3779
    %3781 = vperm.xlu0 %3780, %v3770
    %v3782 = vpop.permute.xlu0 %3781
    %v3783 = vlaneseq
    %v3784 = vshrl.u32 %v3783, 7
    %v3785 = vadd.s32 %v3784, 16
    %3786 = vset.pattern.permute.xlu0 %v3785
    %3787 = vperm.xlu0 %3786, %v3770
    %v3788 = vpop.permute.xlu0 %3787
    %v3789 = vlaneseq
    %v3790 = vshrl.u32 %v3789, 7
    %v3791 = vadd.s32 %v3790, 24
    %3792 = vset.pattern.permute.xlu0 %v3791
    %3793 = vperm.xlu0 %3792, %v3770
    %v3794 = vpop.permute.xlu0 %3793
    %v3795 = vperm.slane %v3569, 1
    %v3796 = vlaneseq
    %v3797 = vshrl.u32 %v3796, 7
    %3799 = vset.pattern.permute.xlu0 %v3797
    %3800 = vperm.xlu0 %3799, %v3795
    %v3801 = vpop.permute.xlu0 %3800
    %v3802 = vlaneseq
    %v3803 = vshrl.u32 %v3802, 7
    %v3804 = vadd.s32 %v3803, 8
    %3805 = vset.pattern.permute.xlu0 %v3804
    %3806 = vperm.xlu0 %3805, %v3795
    %v3807 = vpop.permute.xlu0 %3806
    %v3808 = vlaneseq
    %v3809 = vshrl.u32 %v3808, 7
    %v3810 = vadd.s32 %v3809, 16
    %3811 = vset.pattern.permute.xlu0 %v3810
    %3812 = vperm.xlu0 %3811, %v3795
    %v3813 = vpop.permute.xlu0 %3812
    %v3814 = vlaneseq
    %v3815 = vshrl.u32 %v3814, 7
    %v3816 = vadd.s32 %v3815, 24
    %3817 = vset.pattern.permute.xlu0 %v3816
    %3818 = vperm.xlu0 %3817, %v3795
    %v3819 = vpop.permute.xlu0 %3818
    %v3820 = vperm.slane %v3569, 2
    %v3821 = vlaneseq
    %v3822 = vshrl.u32 %v3821, 7
    %3824 = vset.pattern.permute.xlu0 %v3822
    %3825 = vperm.xlu0 %3824, %v3820
    %v3826 = vpop.permute.xlu0 %3825
    %v3827 = vlaneseq
    %v3828 = vshrl.u32 %v3827, 7
    %v3829 = vadd.s32 %v3828, 8
    %3830 = vset.pattern.permute.xlu0 %v3829
    %3831 = vperm.xlu0 %3830, %v3820
    %v3832 = vpop.permute.xlu0 %3831
    %v3833 = vlaneseq
    %v3834 = vshrl.u32 %v3833, 7
    %v3835 = vadd.s32 %v3834, 16
    %3836 = vset.pattern.permute.xlu0 %v3835
    %3837 = vperm.xlu0 %3836, %v3820
    %v3838 = vpop.permute.xlu0 %3837
    %v3839 = vlaneseq
    %v3840 = vshrl.u32 %v3839, 7
    %v3841 = vadd.s32 %v3840, 24
    %3842 = vset.pattern.permute.xlu0 %v3841
    %3843 = vperm.xlu0 %3842, %v3820
    %v3844 = vpop.permute.xlu0 %3843
    %v3845 = vperm.slane %v3569, 3
    %v3846 = vlaneseq
    %v3847 = vshrl.u32 %v3846, 7
    %3849 = vset.pattern.permute.xlu0 %v3847
    %3850 = vperm.xlu0 %3849, %v3845
    %v3851 = vpop.permute.xlu0 %3850
    %v3852 = vlaneseq
    %v3853 = vshrl.u32 %v3852, 7
    %v3854 = vadd.s32 %v3853, 8
    %3855 = vset.pattern.permute.xlu0 %v3854
    %3856 = vperm.xlu0 %3855, %v3845
    %v3857 = vpop.permute.xlu0 %3856
    %v3858 = vlaneseq
    %v3859 = vshrl.u32 %v3858, 7
    %v3860 = vadd.s32 %v3859, 16
    %3861 = vset.pattern.permute.xlu0 %v3860
    %3862 = vperm.xlu0 %3861, %v3845
    %v3863 = vpop.permute.xlu0 %3862
    %v3864 = vlaneseq
    %v3865 = vshrl.u32 %v3864, 7
    %v3866 = vadd.s32 %v3865, 24
    %3867 = vset.pattern.permute.xlu0 %v3866
    %3868 = vperm.xlu0 %3867, %v3845
    %v3869 = vpop.permute.xlu0 %3868
    %v3870 = vperm.slane %v3569, 4
    %v3871 = vlaneseq
    %v3872 = vshrl.u32 %v3871, 7
    %3874 = vset.pattern.permute.xlu0 %v3872
    %3875 = vperm.xlu0 %3874, %v3870
    %v3876 = vpop.permute.xlu0 %3875
    %v3877 = vlaneseq
    %v3878 = vshrl.u32 %v3877, 7
    %v3879 = vadd.s32 %v3878, 8
    %3880 = vset.pattern.permute.xlu0 %v3879
    %3881 = vperm.xlu0 %3880, %v3870
    %v3882 = vpop.permute.xlu0 %3881
    %v3883 = vlaneseq
    %v3884 = vshrl.u32 %v3883, 7
    %v3885 = vadd.s32 %v3884, 16
    %3886 = vset.pattern.permute.xlu0 %v3885
    %3887 = vperm.xlu0 %3886, %v3870
    %v3888 = vpop.permute.xlu0 %3887
    %v3889 = vlaneseq
    %v3890 = vshrl.u32 %v3889, 7
    %v3891 = vadd.s32 %v3890, 24
    %3892 = vset.pattern.permute.xlu0 %v3891
    %3893 = vperm.xlu0 %3892, %v3870
    %v3894 = vpop.permute.xlu0 %3893
    %v3895 = vperm.slane %v3569, 5
    %v3896 = vlaneseq
    %v3897 = vshrl.u32 %v3896, 7
    %3899 = vset.pattern.permute.xlu0 %v3897
    %3900 = vperm.xlu0 %3899, %v3895
    %v3901 = vpop.permute.xlu0 %3900
    %v3902 = vlaneseq
    %v3903 = vshrl.u32 %v3902, 7
    %v3904 = vadd.s32 %v3903, 8
    %3905 = vset.pattern.permute.xlu0 %v3904
    %3906 = vperm.xlu0 %3905, %v3895
    %v3907 = vpop.permute.xlu0 %3906
    %v3908 = vlaneseq
    %v3909 = vshrl.u32 %v3908, 7
    %v3910 = vadd.s32 %v3909, 16
    %3911 = vset.pattern.permute.xlu0 %v3910
    %3912 = vperm.xlu0 %3911, %v3895
    %v3913 = vpop.permute.xlu0 %3912
    %v3914 = vlaneseq
    %v3915 = vshrl.u32 %v3914, 7
    %v3916 = vadd.s32 %v3915, 24
    %3917 = vset.pattern.permute.xlu0 %v3916
    %3918 = vperm.xlu0 %3917, %v3895
    %v3919 = vpop.permute.xlu0 %3918
    %v3920 = vperm.slane %v3569, 6
    %v3921 = vlaneseq
    %v3922 = vshrl.u32 %v3921, 7
    %3924 = vset.pattern.permute.xlu0 %v3922
    %3925 = vperm.xlu0 %3924, %v3920
    %v3926 = vpop.permute.xlu0 %3925
    %v3927 = vlaneseq
    %v3928 = vshrl.u32 %v3927, 7
    %v3929 = vadd.s32 %v3928, 8
    %3930 = vset.pattern.permute.xlu0 %v3929
    %3931 = vperm.xlu0 %3930, %v3920
    %v3932 = vpop.permute.xlu0 %3931
    %v3933 = vlaneseq
    %v3934 = vshrl.u32 %v3933, 7
    %v3935 = vadd.s32 %v3934, 16
    %3936 = vset.pattern.permute.xlu0 %v3935
    %3937 = vperm.xlu0 %3936, %v3920
    %v3938 = vpop.permute.xlu0 %3937
    %v3939 = vlaneseq
    %v3940 = vshrl.u32 %v3939, 7
    %v3941 = vadd.s32 %v3940, 24
    %3942 = vset.pattern.permute.xlu0 %v3941
    %3943 = vperm.xlu0 %3942, %v3920
    %v3944 = vpop.permute.xlu0 %3943
    %v3945 = vperm.slane %v3569, 7
    %v3946 = vlaneseq
    %v3947 = vshrl.u32 %v3946, 7
    %3949 = vset.pattern.permute.xlu0 %v3947
    %3950 = vperm.xlu0 %3949, %v3945
    %v3951 = vpop.permute.xlu0 %3950
    %v3952 = vlaneseq
    %v3953 = vshrl.u32 %v3952, 7
    %v3954 = vadd.s32 %v3953, 8
    %3955 = vset.pattern.permute.xlu0 %v3954
    %3956 = vperm.xlu0 %3955, %v3945
    %v3957 = vpop.permute.xlu0 %3956
    %v3958 = vlaneseq
    %v3959 = vshrl.u32 %v3958, 7
    %v3960 = vadd.s32 %v3959, 16
    %3961 = vset.pattern.permute.xlu0 %v3960
    %3962 = vperm.xlu0 %3961, %v3945
    %v3963 = vpop.permute.xlu0 %3962
    %v3964 = vlaneseq
    %v3965 = vshrl.u32 %v3964, 7
    %v3966 = vadd.s32 %v3965, 24
    %3967 = vset.pattern.permute.xlu0 %v3966
    %3968 = vperm.xlu0 %3967, %v3945
    %v3969 = vpop.permute.xlu0 %3968
    %v3972 = vrot.slane %v2881, 1
    %v3973 = vrot.slane %v2881, 2
    %v3974 = vrot.slane %v2881, 3
    %v3975 = vrot.slane %v2881, 4
    %v3976 = vrot.slane %v2881, 5
    %v3977 = vrot.slane %v2881, 6
    %v3978 = vrot.slane %v2881, 7
    %v3979 = vrot.slane %v2884, 1
    %v3980 = vrot.slane %v2884, 2
    %v3981 = vrot.slane %v2884, 3
    %v3982 = vrot.slane %v2884, 4
    %v3983 = vrot.slane %v2884, 5
    %v3984 = vrot.slane %v2884, 6
    %v3985 = vrot.slane %v2884, 7
    %v3986 = vperm.slane %v2881, 0
    %v3987 = vperm.slane %v3972, 0
    %v3988 = vperm.slane %v3973, 0
    %v3989 = vperm.slane %v3974, 0
    %v3990 = vperm.slane %v3975, 0
    %v3991 = vperm.slane %v3976, 0
    %v3992 = vperm.slane %v3977, 0
    %v3993 = vperm.slane %v3978, 0
    %v3994 = vperm.slane %v2884, 0
    %v3995 = vperm.slane %v3979, 0
    %v3996 = vperm.slane %v3980, 0
    %v3997 = vperm.slane %v3981, 0
    %v3998 = vperm.slane %v3982, 0
    %v3999 = vperm.slane %v3983, 0
    %v4000 = vperm.slane %v3984, 0
    %v4001 = vperm.slane %v3985, 0
    %v4018 = vmul.f32 %v3576, %v3986
    %v4019 = vmul.f32 %v3582, %v3986
    %v4020 = vmul.f32 %v3588, %v3986
    %v4021 = vmul.f32 %v3594, %v3986
    %v4022 = vmul.f32 %v3601, %v3987
    %v4023 = vmul.f32 %v3607, %v3987
    %v4024 = vmul.f32 %v3613, %v3987
    %v4025 = vmul.f32 %v3619, %v3987
    %v4026 = vmul.f32 %v3626, %v3988
    %v4027 = vmul.f32 %v3632, %v3988
    %v4028 = vmul.f32 %v3638, %v3988
    %v4029 = vmul.f32 %v3644, %v3988
    %v4030 = vmul.f32 %v3651, %v3989
    %v4031 = vmul.f32 %v3657, %v3989
    %v4032 = vmul.f32 %v3663, %v3989
    %v4033 = vmul.f32 %v3669, %v3989
    %v4034 = vmul.f32 %v3676, %v3990
    %v4035 = vmul.f32 %v3682, %v3990
    %v4036 = vmul.f32 %v3688, %v3990
    %v4037 = vmul.f32 %v3694, %v3990
    %v4038 = vmul.f32 %v3701, %v3991
    %v4039 = vmul.f32 %v3707, %v3991
    %v4040 = vmul.f32 %v3713, %v3991
    %v4041 = vmul.f32 %v3719, %v3991
    %v4042 = vmul.f32 %v3726, %v3992
    %v4043 = vmul.f32 %v3732, %v3992
    %v4044 = vmul.f32 %v3738, %v3992
    %v4045 = vmul.f32 %v3744, %v3992
    %v4046 = vmul.f32 %v3751, %v3993
    %v4047 = vmul.f32 %v3757, %v3993
    %v4048 = vmul.f32 %v3763, %v3993
    %v4049 = vmul.f32 %v3769, %v3993
    %v4050 = vmul.f32 %v3776, %v3994
    %v4051 = vmul.f32 %v3782, %v3994
    %v4052 = vmul.f32 %v3788, %v3994
    %v4053 = vmul.f32 %v3794, %v3994
    %v4054 = vmul.f32 %v3801, %v3995
    %v4055 = vmul.f32 %v3807, %v3995
    %v4056 = vmul.f32 %v3813, %v3995
    %v4057 = vmul.f32 %v3819, %v3995
    %v4058 = vmul.f32 %v3826, %v3996
    %v4059 = vmul.f32 %v3832, %v3996
    %v4060 = vmul.f32 %v3838, %v3996
    %v4061 = vmul.f32 %v3844, %v3996
    %v4062 = vmul.f32 %v3851, %v3997
    %v4063 = vmul.f32 %v3857, %v3997
    %v4064 = vmul.f32 %v3863, %v3997
    %v4065 = vmul.f32 %v3869, %v3997
    %v4066 = vmul.f32 %v3876, %v3998
    %v4067 = vmul.f32 %v3882, %v3998
    %v4068 = vmul.f32 %v3888, %v3998
    %v4069 = vmul.f32 %v3894, %v3998
    %v4070 = vmul.f32 %v3901, %v3999
    %v4071 = vmul.f32 %v3907, %v3999
    %v4072 = vmul.f32 %v3913, %v3999
    %v4073 = vmul.f32 %v3919, %v3999
    %v4074 = vmul.f32 %v3926, %v4000
    %v4075 = vmul.f32 %v3932, %v4000
    %v4076 = vmul.f32 %v3938, %v4000
    %v4077 = vmul.f32 %v3944, %v4000
    %v4078 = vmul.f32 %v3951, %v4001
    %v4079 = vmul.f32 %v3957, %v4001
    %v4080 = vmul.f32 %v3963, %v4001
    %v4081 = vmul.f32 %v3969, %v4001
    %4146 = vrot.lane.b32.xlu0 %v4018, 96
    %v4147 = vpop.permute.xlu0 %4146
    %4148 = vrot.lane.b32.xlu0 %v4019, 96
    %v4149 = vpop.permute.xlu0 %4148
    %4150 = vrot.lane.b32.xlu0 %v4020, 96
    %v4151 = vpop.permute.xlu0 %4150
    %4152 = vrot.lane.b32.xlu0 %v4021, 96
    %v4153 = vpop.permute.xlu0 %4152
    %4154 = vrot.lane.b32.xlu0 %v4022, 96
    %v4155 = vpop.permute.xlu0 %4154
    %4156 = vrot.lane.b32.xlu0 %v4023, 96
    %v4157 = vpop.permute.xlu0 %4156
    %4158 = vrot.lane.b32.xlu0 %v4024, 96
    %v4159 = vpop.permute.xlu0 %4158
    %4160 = vrot.lane.b32.xlu0 %v4025, 96
    %v4161 = vpop.permute.xlu0 %4160
    %4162 = vrot.lane.b32.xlu0 %v4026, 96
    %v4163 = vpop.permute.xlu0 %4162
    %4164 = vrot.lane.b32.xlu0 %v4027, 96
    %v4165 = vpop.permute.xlu0 %4164
    %4166 = vrot.lane.b32.xlu0 %v4028, 96
    %v4167 = vpop.permute.xlu0 %4166
    %4168 = vrot.lane.b32.xlu0 %v4029, 96
    %v4169 = vpop.permute.xlu0 %4168
    %4170 = vrot.lane.b32.xlu0 %v4030, 96
    %v4171 = vpop.permute.xlu0 %4170
    %4172 = vrot.lane.b32.xlu0 %v4031, 96
    %v4173 = vpop.permute.xlu0 %4172
    %4174 = vrot.lane.b32.xlu0 %v4032, 96
    %v4175 = vpop.permute.xlu0 %4174
    %4176 = vrot.lane.b32.xlu0 %v4033, 96
    %v4177 = vpop.permute.xlu0 %4176
    %4178 = vrot.lane.b32.xlu0 %v4034, 96
    %v4179 = vpop.permute.xlu0 %4178
    %4180 = vrot.lane.b32.xlu0 %v4035, 96
    %v4181 = vpop.permute.xlu0 %4180
    %4182 = vrot.lane.b32.xlu0 %v4036, 96
    %v4183 = vpop.permute.xlu0 %4182
    %4184 = vrot.lane.b32.xlu0 %v4037, 96
    %v4185 = vpop.permute.xlu0 %4184
    %4186 = vrot.lane.b32.xlu0 %v4038, 96
    %v4187 = vpop.permute.xlu0 %4186
    %4188 = vrot.lane.b32.xlu0 %v4039, 96
    %v4189 = vpop.permute.xlu0 %4188
    %4190 = vrot.lane.b32.xlu0 %v4040, 96
    %v4191 = vpop.permute.xlu0 %4190
    %4192 = vrot.lane.b32.xlu0 %v4041, 96
    %v4193 = vpop.permute.xlu0 %4192
    %4194 = vrot.lane.b32.xlu0 %v4042, 96
    %v4195 = vpop.permute.xlu0 %4194
    %4196 = vrot.lane.b32.xlu0 %v4043, 96
    %v4197 = vpop.permute.xlu0 %4196
    %4198 = vrot.lane.b32.xlu0 %v4044, 96
    %v4199 = vpop.permute.xlu0 %4198
    %4200 = vrot.lane.b32.xlu0 %v4045, 96
    %v4201 = vpop.permute.xlu0 %4200
    %4202 = vrot.lane.b32.xlu0 %v4046, 96
    %v4203 = vpop.permute.xlu0 %4202
    %4204 = vrot.lane.b32.xlu0 %v4047, 96
    %v4205 = vpop.permute.xlu0 %4204
    %4206 = vrot.lane.b32.xlu0 %v4048, 96
    %v4207 = vpop.permute.xlu0 %4206
    %4208 = vrot.lane.b32.xlu0 %v4049, 96
    %v4209 = vpop.permute.xlu0 %4208
    %4210 = vrot.lane.b32.xlu0 %v4050, 96
    %v4211 = vpop.permute.xlu0 %4210
    %4212 = vrot.lane.b32.xlu0 %v4051, 96
    %v4213 = vpop.permute.xlu0 %4212
    %4214 = vrot.lane.b32.xlu0 %v4052, 96
    %v4215 = vpop.permute.xlu0 %4214
    %4216 = vrot.lane.b32.xlu0 %v4053, 96
    %v4217 = vpop.permute.xlu0 %4216
    %4218 = vrot.lane.b32.xlu0 %v4054, 96
    %v4219 = vpop.permute.xlu0 %4218
    %4220 = vrot.lane.b32.xlu0 %v4055, 96
    %v4221 = vpop.permute.xlu0 %4220
    %4222 = vrot.lane.b32.xlu0 %v4056, 96
    %v4223 = vpop.permute.xlu0 %4222
    %4224 = vrot.lane.b32.xlu0 %v4057, 96
    %v4225 = vpop.permute.xlu0 %4224
    %4226 = vrot.lane.b32.xlu0 %v4058, 96
    %v4227 = vpop.permute.xlu0 %4226
    %4228 = vrot.lane.b32.xlu0 %v4059, 96
    %v4229 = vpop.permute.xlu0 %4228
    %4230 = vrot.lane.b32.xlu0 %v4060, 96
    %v4231 = vpop.permute.xlu0 %4230
    %4232 = vrot.lane.b32.xlu0 %v4061, 96
    %v4233 = vpop.permute.xlu0 %4232
    %4234 = vrot.lane.b32.xlu0 %v4062, 96
    %v4235 = vpop.permute.xlu0 %4234
    %4236 = vrot.lane.b32.xlu0 %v4063, 96
    %v4237 = vpop.permute.xlu0 %4236
    %4238 = vrot.lane.b32.xlu0 %v4064, 96
    %v4239 = vpop.permute.xlu0 %4238
    %4240 = vrot.lane.b32.xlu0 %v4065, 96
    %v4241 = vpop.permute.xlu0 %4240
    %4242 = vrot.lane.b32.xlu0 %v4066, 96
    %v4243 = vpop.permute.xlu0 %4242
    %4244 = vrot.lane.b32.xlu0 %v4067, 96
    %v4245 = vpop.permute.xlu0 %4244
    %4246 = vrot.lane.b32.xlu0 %v4068, 96
    %v4247 = vpop.permute.xlu0 %4246
    %4248 = vrot.lane.b32.xlu0 %v4069, 96
    %v4249 = vpop.permute.xlu0 %4248
    %4250 = vrot.lane.b32.xlu0 %v4070, 96
    %v4251 = vpop.permute.xlu0 %4250
    %4252 = vrot.lane.b32.xlu0 %v4071, 96
    %v4253 = vpop.permute.xlu0 %4252
    %4254 = vrot.lane.b32.xlu0 %v4072, 96
    %v4255 = vpop.permute.xlu0 %4254
    %4256 = vrot.lane.b32.xlu0 %v4073, 96
    %v4257 = vpop.permute.xlu0 %4256
    %4258 = vrot.lane.b32.xlu0 %v4074, 96
    %v4259 = vpop.permute.xlu0 %4258
    %4260 = vrot.lane.b32.xlu0 %v4075, 96
    %v4261 = vpop.permute.xlu0 %4260
    %4262 = vrot.lane.b32.xlu0 %v4076, 96
    %v4263 = vpop.permute.xlu0 %4262
    %4264 = vrot.lane.b32.xlu0 %v4077, 96
    %v4265 = vpop.permute.xlu0 %4264
    %4266 = vrot.lane.b32.xlu0 %v4078, 96
    %v4267 = vpop.permute.xlu0 %4266
    %4268 = vrot.lane.b32.xlu0 %v4079, 96
    %v4269 = vpop.permute.xlu0 %4268
    %4270 = vrot.lane.b32.xlu0 %v4080, 96
    %v4271 = vpop.permute.xlu0 %4270
    %4272 = vrot.lane.b32.xlu0 %v4081, 96
    %v4273 = vpop.permute.xlu0 %4272
    %4338 = vst.msk [vmem:[#allocation4] sm:$0xff] %vm108, %v4147
    %4339 = vst.msk [vmem:[#allocation4 + $0x8] sm:$0xff] %vm108, %v4149
    %4340 = vst.msk [vmem:[#allocation4 + $0x10] sm:$0xff] %vm108, %v4151
    %4341 = vst.msk [vmem:[#allocation4 + $0x18] sm:$0xff] %vm108, %v4153
    %4342 = vst.msk [vmem:[#allocation4 + $0x20] sm:$0xff] %vm108, %v4155
    %4343 = vst.msk [vmem:[#allocation4 + $0x28] sm:$0xff] %vm108, %v4157
    %4344 = vst.msk [vmem:[#allocation4 + $0x30] sm:$0xff] %vm108, %v4159
    %4345 = vst.msk [vmem:[#allocation4 + $0x38] sm:$0xff] %vm108, %v4161
    %4346 = vst.msk [vmem:[#allocation4 + $0x40] sm:$0xff] %vm108, %v4163
    %4347 = vst.msk [vmem:[#allocation4 + $0x48] sm:$0xff] %vm108, %v4165
    %4348 = vst.msk [vmem:[#allocation4 + $0x50] sm:$0xff] %vm108, %v4167
    %4349 = vst.msk [vmem:[#allocation4 + $0x58] sm:$0xff] %vm108, %v4169
    %4350 = vst.msk [vmem:[#allocation4 + $0x60] sm:$0xff] %vm108, %v4171
    %4351 = vst.msk [vmem:[#allocation4 + $0x68] sm:$0xff] %vm108, %v4173
    %4352 = vst.msk [vmem:[#allocation4 + $0x70] sm:$0xff] %vm108, %v4175
    %4353 = vst.msk [vmem:[#allocation4 + $0x78] sm:$0xff] %vm108, %v4177
    %4354 = vst.msk [vmem:[#allocation4 + $0x80] sm:$0xff] %vm108, %v4179
    %4355 = vst.msk [vmem:[#allocation4 + $0x88] sm:$0xff] %vm108, %v4181
    %4356 = vst.msk [vmem:[#allocation4 + $0x90] sm:$0xff] %vm108, %v4183
    %4357 = vst.msk [vmem:[#allocation4 + $0x98] sm:$0xff] %vm108, %v4185
    %4358 = vst.msk [vmem:[#allocation4 + $0xa0] sm:$0xff] %vm108, %v4187
    %4359 = vst.msk [vmem:[#allocation4 + $0xa8] sm:$0xff] %vm108, %v4189
    %4360 = vst.msk [vmem:[#allocation4 + $0xb0] sm:$0xff] %vm108, %v4191
    %4361 = vst.msk [vmem:[#allocation4 + $0xb8] sm:$0xff] %vm108, %v4193
    %4362 = vst.msk [vmem:[#allocation4 + $0xc0] sm:$0xff] %vm108, %v4195
    %4363 = vst.msk [vmem:[#allocation4 + $0xc8] sm:$0xff] %vm108, %v4197
    %4364 = vst.msk [vmem:[#allocation4 + $0xd0] sm:$0xff] %vm108, %v4199
    %4365 = vst.msk [vmem:[#allocation4 + $0xd8] sm:$0xff] %vm108, %v4201
    %4366 = vst.msk [vmem:[#allocation4 + $0xe0] sm:$0xff] %vm108, %v4203
    %4367 = vst.msk [vmem:[#allocation4 + $0xe8] sm:$0xff] %vm108, %v4205
    %4368 = vst.msk [vmem:[#allocation4 + $0xf0] sm:$0xff] %vm108, %v4207
    %4369 = vst.msk [vmem:[#allocation4 + $0xf8] sm:$0xff] %vm108, %v4209
    %4370 = vst.msk [vmem:[#allocation4 + $0x100] sm:$0xff] %vm108, %v4211
    %4371 = vst.msk [vmem:[#allocation4 + $0x108] sm:$0xff] %vm108, %v4213
    %4372 = vst.msk [vmem:[#allocation4 + $0x110] sm:$0xff] %vm108, %v4215
    %4373 = vst.msk [vmem:[#allocation4 + $0x118] sm:$0xff] %vm108, %v4217
    %4374 = vst.msk [vmem:[#allocation4 + $0x120] sm:$0xff] %vm108, %v4219
    %4375 = vst.msk [vmem:[#allocation4 + $0x128] sm:$0xff] %vm108, %v4221
    %4376 = vst.msk [vmem:[#allocation4 + $0x130] sm:$0xff] %vm108, %v4223
    %4377 = vst.msk [vmem:[#allocation4 + $0x138] sm:$0xff] %vm108, %v4225
    %4378 = vst.msk [vmem:[#allocation4 + $0x140] sm:$0xff] %vm108, %v4227
    %4379 = vst.msk [vmem:[#allocation4 + $0x148] sm:$0xff] %vm108, %v4229
    %4380 = vst.msk [vmem:[#allocation4 + $0x150] sm:$0xff] %vm108, %v4231
    %4381 = vst.msk [vmem:[#allocation4 + $0x158] sm:$0xff] %vm108, %v4233
    %4382 = vst.msk [vmem:[#allocation4 + $0x160] sm:$0xff] %vm108, %v4235
    %4383 = vst.msk [vmem:[#allocation4 + $0x168] sm:$0xff] %vm108, %v4237
    %4384 = vst.msk [vmem:[#allocation4 + $0x170] sm:$0xff] %vm108, %v4239
    %4385 = vst.msk [vmem:[#allocation4 + $0x178] sm:$0xff] %vm108, %v4241
    %4386 = vst.msk [vmem:[#allocation4 + $0x180] sm:$0xff] %vm108, %v4243
    %4387 = vst.msk [vmem:[#allocation4 + $0x188] sm:$0xff] %vm108, %v4245
    %4388 = vst.msk [vmem:[#allocation4 + $0x190] sm:$0xff] %vm108, %v4247
    %4389 = vst.msk [vmem:[#allocation4 + $0x198] sm:$0xff] %vm108, %v4249
    %4390 = vst.msk [vmem:[#allocation4 + $0x1a0] sm:$0xff] %vm108, %v4251
    %4391 = vst.msk [vmem:[#allocation4 + $0x1a8] sm:$0xff] %vm108, %v4253
    %4392 = vst.msk [vmem:[#allocation4 + $0x1b0] sm:$0xff] %vm108, %v4255
    %4393 = vst.msk [vmem:[#allocation4 + $0x1b8] sm:$0xff] %vm108, %v4257
    %4394 = vst.msk [vmem:[#allocation4 + $0x1c0] sm:$0xff] %vm108, %v4259
    %4395 = vst.msk [vmem:[#allocation4 + $0x1c8] sm:$0xff] %vm108, %v4261
    %4396 = vst.msk [vmem:[#allocation4 + $0x1d0] sm:$0xff] %vm108, %v4263
    %4397 = vst.msk [vmem:[#allocation4 + $0x1d8] sm:$0xff] %vm108, %v4265
    %4398 = vst.msk [vmem:[#allocation4 + $0x1e0] sm:$0xff] %vm108, %v4267
    %4399 = vst.msk [vmem:[#allocation4 + $0x1e8] sm:$0xff] %vm108, %v4269
    %4400 = vst.msk [vmem:[#allocation4 + $0x1f0] sm:$0xff] %vm108, %v4271
    %4401 = vst.msk [vmem:[#allocation4 + $0x1f8] sm:$0xff] %vm108, %v4273
    %v4402 = vld [vmem:[#allocation3] sm:$0xff]
    %v4403 = vld [vmem:[#allocation3 + $0x8] sm:$0xff]
    %v4404 = vld [vmem:[#allocation3 + $0x10] sm:$0xff]
    %v4405 = vld [vmem:[#allocation3 + $0x18] sm:$0xff]
    %v4406 = vld [vmem:[#allocation3 + $0x100] sm:$0xff]
    %v4407 = vld [vmem:[#allocation3 + $0x108] sm:$0xff]
    %v4408 = vld [vmem:[#allocation3 + $0x110] sm:$0xff]
    %v4409 = vld [vmem:[#allocation3 + $0x118] sm:$0xff]
    %v4410 = vmul.f32 %v4402, 0.0
    %v4411 = vmul.f32 %v4403, 0.0
    %v4412 = vmul.f32 %v4404, 0.0
    %v4413 = vmul.f32 %v4405, 0.0
    %v4414 = vmul.f32 %v4406, 0.0
    %v4415 = vmul.f32 %v4407, 0.0
    %v4416 = vmul.f32 %v4408, 0.0
    %v4417 = vmul.f32 %v4409, 0.0
    %v4418 = vld [vmem:[#allocation4] sm:$0xff]
    %v4419 = vld [vmem:[#allocation4 + $0x8] sm:$0xff]
    %v4420 = vld [vmem:[#allocation4 + $0x10] sm:$0xff]
    %v4421 = vld [vmem:[#allocation4 + $0x18] sm:$0xff]
    %v4422 = vld [vmem:[#allocation4 + $0x100] sm:$0xff]
    %v4423 = vld [vmem:[#allocation4 + $0x108] sm:$0xff]
    %v4424 = vld [vmem:[#allocation4 + $0x110] sm:$0xff]
    %v4425 = vld [vmem:[#allocation4 + $0x118] sm:$0xff]
    %v4426 = vadd.f32 %v4410, %v4418
    %v4427 = vadd.f32 %v4411, %v4419
    %v4428 = vadd.f32 %v4412, %v4420
    %v4429 = vadd.f32 %v4413, %v4421
    %v4430 = vadd.f32 %v4414, %v4422
    %v4431 = vadd.f32 %v4415, %v4423
    %v4432 = vadd.f32 %v4416, %v4424
    %v4433 = vadd.f32 %v4417, %v4425
    %v4434 = vperm.slane %v2881, 0
    %v4435 = vperm.slane %v2884, 0
    %4438 = vrot.lane.b32.xlu0 %v4434, 64
    %v4439 = vpop.permute.xlu0 %4438
    %4440 = vrot.lane.b32.xlu0 %v4435, 64
    %v4441 = vpop.permute.xlu0 %4440
    %v4444 = vmul.f32 %v4426, %v4439
    %v4445 = vmul.f32 %v4427, %v4439
    %v4446 = vmul.f32 %v4428, %v4439
    %v4447 = vmul.f32 %v4429, %v4439
    %v4448 = vmul.f32 %v4430, %v4441
    %v4449 = vmul.f32 %v4431, %v4441
    %v4450 = vmul.f32 %v4432, %v4441
    %v4451 = vmul.f32 %v4433, %v4441
    %v4452 = vsel %vm108, %v4444, 0.0
    %4453 = vadd.xlane.f32.xlu0 %v4452
    %v4454 = vpop.xlane.xlu0 %4453
    %v4455 = vsel %vm108, %v4445, 0.0
    %4456 = vadd.xlane.f32.xlu0 %v4455
    %v4457 = vpop.xlane.xlu0 %4456
    %v4458 = vsel %vm108, %v4446, 0.0
    %4459 = vadd.xlane.f32.xlu0 %v4458
    %v4460 = vpop.xlane.xlu0 %4459
    %v4461 = vsel %vm108, %v4447, 0.0
    %4462 = vadd.xlane.f32.xlu0 %v4461
    %v4463 = vpop.xlane.xlu0 %4462
    %v4464 = vsel %vm108, %v4448, 0.0
    %4465 = vadd.xlane.f32.xlu0 %v4464
    %v4466 = vpop.xlane.xlu0 %4465
    %v4467 = vsel %vm108, %v4449, 0.0
    %4468 = vadd.xlane.f32.xlu0 %v4467
    %v4469 = vpop.xlane.xlu0 %4468
    %v4470 = vsel %vm108, %v4450, 0.0
    %4471 = vadd.xlane.f32.xlu0 %v4470
    %v4472 = vpop.xlane.xlu0 %4471
    %v4473 = vsel %vm108, %v4451, 0.0
    %4474 = vadd.xlane.f32.xlu0 %v4473
    %v4475 = vpop.xlane.xlu0 %4474
    %v4484 = vperm.slane %v4454, %v1851
    %v4485 = vperm.slane %v4457, %v1853
    %v4486 = vsel %vm1855, %v4485, %v4484
    %v4487 = vperm.slane %v4460, %v1857
    %v4488 = vsel %vm1859, %v4487, %v4486
    %v4489 = vperm.slane %v4463, %v1861
    %v4490 = vsel %vm1863, %v4489, %v4488
    %v4491 = vperm.slane %v4466, %v1851
    %v4492 = vperm.slane %v4469, %v1853
    %v4493 = vsel %vm1855, %v4492, %v4491
    %v4494 = vperm.slane %v4472, %v1857
    %v4495 = vsel %vm1859, %v4494, %v4493
    %v4496 = vperm.slane %v4475, %v1861
    %v4497 = vsel %vm1863, %v4496, %v4495
    %4500 = vst.msk [vmem:[#allocation5] sm:$0x1] %vm1874, %v4490
    %4501 = vst.msk [vmem:[#allocation5 + $0x8] sm:$0x1] %vm1874, %v4497
    %v4502 = vld [vmem:[%s1877] sm:$0xff]
    %v4503 = vld [vmem:[%s1877 + $0x8] sm:$0xff]
    %v4504 = vld [vmem:[%s1877 + $0x10] sm:$0xff]
    %v4505 = vld [vmem:[%s1877 + $0x18] sm:$0xff]
    %v4506 = vld [vmem:[%s1877 + $0x100] sm:$0xff]
    %v4507 = vld [vmem:[%s1877 + $0x108] sm:$0xff]
    %v4508 = vld [vmem:[%s1877 + $0x110] sm:$0xff]
    %v4509 = vld [vmem:[%s1877 + $0x118] sm:$0xff]
    %v4510 = vmul.f32 %v4502, %v4426
    %v4511 = vmul.f32 %v4503, %v4427
    %v4512 = vmul.f32 %v4504, %v4428
    %v4513 = vmul.f32 %v4505, %v4429
    %v4514 = vmul.f32 %v4506, %v4430
    %v4515 = vmul.f32 %v4507, %v4431
    %v4516 = vmul.f32 %v4508, %v4432
    %v4517 = vmul.f32 %v4509, %v4433
    %v4518 = vld [vmem:[%s1894] sm:$0xff]
    %v4519 = vld [vmem:[%s1894 + $0x8] sm:$0xff]
    %v4520 = vld [vmem:[%s1894 + $0x10] sm:$0xff]
    %v4521 = vld [vmem:[%s1894 + $0x18] sm:$0xff]
    %v4522 = vld [vmem:[%s1894 + $0x100] sm:$0xff]
    %v4523 = vld [vmem:[%s1894 + $0x108] sm:$0xff]
    %v4524 = vld [vmem:[%s1894 + $0x110] sm:$0xff]
    %v4525 = vld [vmem:[%s1894 + $0x118] sm:$0xff]
    %v4526 = vadd.f32 %v4510, %v4518
    %v4527 = vadd.f32 %v4511, %v4519
    %v4528 = vadd.f32 %v4512, %v4520
    %v4529 = vadd.f32 %v4513, %v4521
    %v4530 = vadd.f32 %v4514, %v4522
    %v4531 = vadd.f32 %v4515, %v4523
    %v4532 = vadd.f32 %v4516, %v4524
    %v4533 = vadd.f32 %v4517, %v4525
    %v4534 = vperm.slane %v2881, 1
    %v4535 = vperm.slane %v2884, 1
    %4538 = vrot.lane.b32.xlu0 %v4534, 64
    %v4539 = vpop.permute.xlu0 %4538
    %4540 = vrot.lane.b32.xlu0 %v4535, 64
    %v4541 = vpop.permute.xlu0 %4540
    %v4544 = vmul.f32 %v4526, %v4539
    %v4545 = vmul.f32 %v4527, %v4539
    %v4546 = vmul.f32 %v4528, %v4539
    %v4547 = vmul.f32 %v4529, %v4539
    %v4548 = vmul.f32 %v4530, %v4541
    %v4549 = vmul.f32 %v4531, %v4541
    %v4550 = vmul.f32 %v4532, %v4541
    %v4551 = vmul.f32 %v4533, %v4541
    %v4552 = vsel %vm108, %v4544, 0.0
    %4553 = vadd.xlane.f32.xlu0 %v4552
    %v4554 = vpop.xlane.xlu0 %4553
    %v4555 = vsel %vm108, %v4545, 0.0
    %4556 = vadd.xlane.f32.xlu0 %v4555
    %v4557 = vpop.xlane.xlu0 %4556
    %v4558 = vsel %vm108, %v4546, 0.0
    %4559 = vadd.xlane.f32.xlu0 %v4558
    %v4560 = vpop.xlane.xlu0 %4559
    %v4561 = vsel %vm108, %v4547, 0.0
    %4562 = vadd.xlane.f32.xlu0 %v4561
    %v4563 = vpop.xlane.xlu0 %4562
    %v4564 = vsel %vm108, %v4548, 0.0
    %4565 = vadd.xlane.f32.xlu0 %v4564
    %v4566 = vpop.xlane.xlu0 %4565
    %v4567 = vsel %vm108, %v4549, 0.0
    %4568 = vadd.xlane.f32.xlu0 %v4567
    %v4569 = vpop.xlane.xlu0 %4568
    %v4570 = vsel %vm108, %v4550, 0.0
    %4571 = vadd.xlane.f32.xlu0 %v4570
    %v4572 = vpop.xlane.xlu0 %4571
    %v4573 = vsel %vm108, %v4551, 0.0
    %4574 = vadd.xlane.f32.xlu0 %v4573
    %v4575 = vpop.xlane.xlu0 %4574
    %v4584 = vperm.slane %v4554, %v1851
    %v4585 = vperm.slane %v4557, %v1853
    %v4586 = vsel %vm1855, %v4585, %v4584
    %v4587 = vperm.slane %v4560, %v1857
    %v4588 = vsel %vm1859, %v4587, %v4586
    %v4589 = vperm.slane %v4563, %v1861
    %v4590 = vsel %vm1863, %v4589, %v4588
    %v4591 = vperm.slane %v4566, %v1851
    %v4592 = vperm.slane %v4569, %v1853
    %v4593 = vsel %vm1855, %v4592, %v4591
    %v4594 = vperm.slane %v4572, %v1857
    %v4595 = vsel %vm1859, %v4594, %v4593
    %v4596 = vperm.slane %v4575, %v1861
    %v4597 = vsel %vm1863, %v4596, %v4595
    %4600 = vst.msk [vmem:[#allocation5 + $0x1] sm:$0x1] %vm1874, %v4590
    %4601 = vst.msk [vmem:[#allocation5 + $0x9] sm:$0x1] %vm1874, %v4597
    %v4602 = vld [vmem:[%s1979] sm:$0xff]
    %v4603 = vld [vmem:[%s1979 + $0x8] sm:$0xff]
    %v4604 = vld [vmem:[%s1979 + $0x10] sm:$0xff]
    %v4605 = vld [vmem:[%s1979 + $0x18] sm:$0xff]
    %v4606 = vld [vmem:[%s1979 + $0x100] sm:$0xff]
    %v4607 = vld [vmem:[%s1979 + $0x108] sm:$0xff]
    %v4608 = vld [vmem:[%s1979 + $0x110] sm:$0xff]
    %v4609 = vld [vmem:[%s1979 + $0x118] sm:$0xff]
    %v4610 = vmul.f32 %v4602, %v4526
    %v4611 = vmul.f32 %v4603, %v4527
    %v4612 = vmul.f32 %v4604, %v4528
    %v4613 = vmul.f32 %v4605, %v4529
    %v4614 = vmul.f32 %v4606, %v4530
    %v4615 = vmul.f32 %v4607, %v4531
    %v4616 = vmul.f32 %v4608, %v4532
    %v4617 = vmul.f32 %v4609, %v4533
    %v4618 = vld [vmem:[%s1996] sm:$0xff]
    %v4619 = vld [vmem:[%s1996 + $0x8] sm:$0xff]
    %v4620 = vld [vmem:[%s1996 + $0x10] sm:$0xff]
    %v4621 = vld [vmem:[%s1996 + $0x18] sm:$0xff]
    %v4622 = vld [vmem:[%s1996 + $0x100] sm:$0xff]
    %v4623 = vld [vmem:[%s1996 + $0x108] sm:$0xff]
    %v4624 = vld [vmem:[%s1996 + $0x110] sm:$0xff]
    %v4625 = vld [vmem:[%s1996 + $0x118] sm:$0xff]
    %v4626 = vadd.f32 %v4610, %v4618
    %v4627 = vadd.f32 %v4611, %v4619
    %v4628 = vadd.f32 %v4612, %v4620
    %v4629 = vadd.f32 %v4613, %v4621
    %v4630 = vadd.f32 %v4614, %v4622
    %v4631 = vadd.f32 %v4615, %v4623
    %v4632 = vadd.f32 %v4616, %v4624
    %v4633 = vadd.f32 %v4617, %v4625
    %v4634 = vperm.slane %v2881, 2
    %v4635 = vperm.slane %v2884, 2
    %4638 = vrot.lane.b32.xlu0 %v4634, 64
    %v4639 = vpop.permute.xlu0 %4638
    %4640 = vrot.lane.b32.xlu0 %v4635, 64
    %v4641 = vpop.permute.xlu0 %4640
    %v4644 = vmul.f32 %v4626, %v4639
    %v4645 = vmul.f32 %v4627, %v4639
    %v4646 = vmul.f32 %v4628, %v4639
    %v4647 = vmul.f32 %v4629, %v4639
    %v4648 = vmul.f32 %v4630, %v4641
    %v4649 = vmul.f32 %v4631, %v4641
    %v4650 = vmul.f32 %v4632, %v4641
    %v4651 = vmul.f32 %v4633, %v4641
    %v4652 = vsel %vm108, %v4644, 0.0
    %4653 = vadd.xlane.f32.xlu0 %v4652
    %v4654 = vpop.xlane.xlu0 %4653
    %v4655 = vsel %vm108, %v4645, 0.0
    %4656 = vadd.xlane.f32.xlu0 %v4655
    %v4657 = vpop.xlane.xlu0 %4656
    %v4658 = vsel %vm108, %v4646, 0.0
    %4659 = vadd.xlane.f32.xlu0 %v4658
    %v4660 = vpop.xlane.xlu0 %4659
    %v4661 = vsel %vm108, %v4647, 0.0
    %4662 = vadd.xlane.f32.xlu0 %v4661
    %v4663 = vpop.xlane.xlu0 %4662
    %v4664 = vsel %vm108, %v4648, 0.0
    %4665 = vadd.xlane.f32.xlu0 %v4664
    %v4666 = vpop.xlane.xlu0 %4665
    %v4667 = vsel %vm108, %v4649, 0.0
    %4668 = vadd.xlane.f32.xlu0 %v4667
    %v4669 = vpop.xlane.xlu0 %4668
    %v4670 = vsel %vm108, %v4650, 0.0
    %4671 = vadd.xlane.f32.xlu0 %v4670
    %v4672 = vpop.xlane.xlu0 %4671
    %v4673 = vsel %vm108, %v4651, 0.0
    %4674 = vadd.xlane.f32.xlu0 %v4673
    %v4675 = vpop.xlane.xlu0 %4674
    %v4684 = vperm.slane %v4654, %v1851
    %v4685 = vperm.slane %v4657, %v1853
    %v4686 = vsel %vm1855, %v4685, %v4684
    %v4687 = vperm.slane %v4660, %v1857
    %v4688 = vsel %vm1859, %v4687, %v4686
    %v4689 = vperm.slane %v4663, %v1861
    %v4690 = vsel %vm1863, %v4689, %v4688
    %v4691 = vperm.slane %v4666, %v1851
    %v4692 = vperm.slane %v4669, %v1853
    %v4693 = vsel %vm1855, %v4692, %v4691
    %v4694 = vperm.slane %v4672, %v1857
    %v4695 = vsel %vm1859, %v4694, %v4693
    %v4696 = vperm.slane %v4675, %v1861
    %v4697 = vsel %vm1863, %v4696, %v4695
    %4700 = vst.msk [vmem:[#allocation5 + $0x2] sm:$0x1] %vm1874, %v4690
    %4701 = vst.msk [vmem:[#allocation5 + $0xa] sm:$0x1] %vm1874, %v4697
    %v4702 = vld [vmem:[%s2081] sm:$0xff]
    %v4703 = vld [vmem:[%s2081 + $0x8] sm:$0xff]
    %v4704 = vld [vmem:[%s2081 + $0x10] sm:$0xff]
    %v4705 = vld [vmem:[%s2081 + $0x18] sm:$0xff]
    %v4706 = vld [vmem:[%s2081 + $0x100] sm:$0xff]
    %v4707 = vld [vmem:[%s2081 + $0x108] sm:$0xff]
    %v4708 = vld [vmem:[%s2081 + $0x110] sm:$0xff]
    %v4709 = vld [vmem:[%s2081 + $0x118] sm:$0xff]
    %v4710 = vmul.f32 %v4702, %v4626
    %v4711 = vmul.f32 %v4703, %v4627
    %v4712 = vmul.f32 %v4704, %v4628
    %v4713 = vmul.f32 %v4705, %v4629
    %v4714 = vmul.f32 %v4706, %v4630
    %v4715 = vmul.f32 %v4707, %v4631
    %v4716 = vmul.f32 %v4708, %v4632
    %v4717 = vmul.f32 %v4709, %v4633
    %v4718 = vld [vmem:[%s2098] sm:$0xff]
    %v4719 = vld [vmem:[%s2098 + $0x8] sm:$0xff]
    %v4720 = vld [vmem:[%s2098 + $0x10] sm:$0xff]
    %v4721 = vld [vmem:[%s2098 + $0x18] sm:$0xff]
    %v4722 = vld [vmem:[%s2098 + $0x100] sm:$0xff]
    %v4723 = vld [vmem:[%s2098 + $0x108] sm:$0xff]
    %v4724 = vld [vmem:[%s2098 + $0x110] sm:$0xff]
    %v4725 = vld [vmem:[%s2098 + $0x118] sm:$0xff]
    %v4726 = vadd.f32 %v4710, %v4718
    %v4727 = vadd.f32 %v4711, %v4719
    %v4728 = vadd.f32 %v4712, %v4720
    %v4729 = vadd.f32 %v4713, %v4721
    %v4730 = vadd.f32 %v4714, %v4722
    %v4731 = vadd.f32 %v4715, %v4723
    %v4732 = vadd.f32 %v4716, %v4724
    %v4733 = vadd.f32 %v4717, %v4725
    %v4734 = vperm.slane %v2881, 3
    %v4735 = vperm.slane %v2884, 3
    %4738 = vrot.lane.b32.xlu0 %v4734, 64
    %v4739 = vpop.permute.xlu0 %4738
    %4740 = vrot.lane.b32.xlu0 %v4735, 64
    %v4741 = vpop.permute.xlu0 %4740
    %v4744 = vmul.f32 %v4726, %v4739
    %v4745 = vmul.f32 %v4727, %v4739
    %v4746 = vmul.f32 %v4728, %v4739
    %v4747 = vmul.f32 %v4729, %v4739
    %v4748 = vmul.f32 %v4730, %v4741
    %v4749 = vmul.f32 %v4731, %v4741
    %v4750 = vmul.f32 %v4732, %v4741
    %v4751 = vmul.f32 %v4733, %v4741
    %v4752 = vsel %vm108, %v4744, 0.0
    %4753 = vadd.xlane.f32.xlu0 %v4752
    %v4754 = vpop.xlane.xlu0 %4753
    %v4755 = vsel %vm108, %v4745, 0.0
    %4756 = vadd.xlane.f32.xlu0 %v4755
    %v4757 = vpop.xlane.xlu0 %4756
    %v4758 = vsel %vm108, %v4746, 0.0
    %4759 = vadd.xlane.f32.xlu0 %v4758
    %v4760 = vpop.xlane.xlu0 %4759
    %v4761 = vsel %vm108, %v4747, 0.0
    %4762 = vadd.xlane.f32.xlu0 %v4761
    %v4763 = vpop.xlane.xlu0 %4762
    %v4764 = vsel %vm108, %v4748, 0.0
    %4765 = vadd.xlane.f32.xlu0 %v4764
    %v4766 = vpop.xlane.xlu0 %4765
    %v4767 = vsel %vm108, %v4749, 0.0
    %4768 = vadd.xlane.f32.xlu0 %v4767
    %v4769 = vpop.xlane.xlu0 %4768
    %v4770 = vsel %vm108, %v4750, 0.0
    %4771 = vadd.xlane.f32.xlu0 %v4770
    %v4772 = vpop.xlane.xlu0 %4771
    %v4773 = vsel %vm108, %v4751, 0.0
    %4774 = vadd.xlane.f32.xlu0 %v4773
    %v4775 = vpop.xlane.xlu0 %4774
    %v4784 = vperm.slane %v4754, %v1851
    %v4785 = vperm.slane %v4757, %v1853
    %v4786 = vsel %vm1855, %v4785, %v4784
    %v4787 = vperm.slane %v4760, %v1857
    %v4788 = vsel %vm1859, %v4787, %v4786
    %v4789 = vperm.slane %v4763, %v1861
    %v4790 = vsel %vm1863, %v4789, %v4788
    %v4791 = vperm.slane %v4766, %v1851
    %v4792 = vperm.slane %v4769, %v1853
    %v4793 = vsel %vm1855, %v4792, %v4791
    %v4794 = vperm.slane %v4772, %v1857
    %v4795 = vsel %vm1859, %v4794, %v4793
    %v4796 = vperm.slane %v4775, %v1861
    %v4797 = vsel %vm1863, %v4796, %v4795
    %4800 = vst.msk [vmem:[#allocation5 + $0x3] sm:$0x1] %vm1874, %v4790
    %4801 = vst.msk [vmem:[#allocation5 + $0xb] sm:$0x1] %vm1874, %v4797
    %v4802 = vld [vmem:[%s2183] sm:$0xff]
    %v4803 = vld [vmem:[%s2183 + $0x8] sm:$0xff]
    %v4804 = vld [vmem:[%s2183 + $0x10] sm:$0xff]
    %v4805 = vld [vmem:[%s2183 + $0x18] sm:$0xff]
    %v4806 = vld [vmem:[%s2183 + $0x100] sm:$0xff]
    %v4807 = vld [vmem:[%s2183 + $0x108] sm:$0xff]
    %v4808 = vld [vmem:[%s2183 + $0x110] sm:$0xff]
    %v4809 = vld [vmem:[%s2183 + $0x118] sm:$0xff]
    %v4810 = vmul.f32 %v4802, %v4726
    %v4811 = vmul.f32 %v4803, %v4727
    %v4812 = vmul.f32 %v4804, %v4728
    %v4813 = vmul.f32 %v4805, %v4729
    %v4814 = vmul.f32 %v4806, %v4730
    %v4815 = vmul.f32 %v4807, %v4731
    %v4816 = vmul.f32 %v4808, %v4732
    %v4817 = vmul.f32 %v4809, %v4733
    %v4818 = vld [vmem:[%s2200] sm:$0xff]
    %v4819 = vld [vmem:[%s2200 + $0x8] sm:$0xff]
    %v4820 = vld [vmem:[%s2200 + $0x10] sm:$0xff]
    %v4821 = vld [vmem:[%s2200 + $0x18] sm:$0xff]
    %v4822 = vld [vmem:[%s2200 + $0x100] sm:$0xff]
    %v4823 = vld [vmem:[%s2200 + $0x108] sm:$0xff]
    %v4824 = vld [vmem:[%s2200 + $0x110] sm:$0xff]
    %v4825 = vld [vmem:[%s2200 + $0x118] sm:$0xff]
    %v4826 = vadd.f32 %v4810, %v4818
    %v4827 = vadd.f32 %v4811, %v4819
    %v4828 = vadd.f32 %v4812, %v4820
    %v4829 = vadd.f32 %v4813, %v4821
    %v4830 = vadd.f32 %v4814, %v4822
    %v4831 = vadd.f32 %v4815, %v4823
    %v4832 = vadd.f32 %v4816, %v4824
    %v4833 = vadd.f32 %v4817, %v4825
    %v4834 = vperm.slane %v2881, 4
    %v4835 = vperm.slane %v2884, 4
    %4838 = vrot.lane.b32.xlu0 %v4834, 64
    %v4839 = vpop.permute.xlu0 %4838
    %4840 = vrot.lane.b32.xlu0 %v4835, 64
    %v4841 = vpop.permute.xlu0 %4840
    %v4844 = vmul.f32 %v4826, %v4839
    %v4845 = vmul.f32 %v4827, %v4839
    %v4846 = vmul.f32 %v4828, %v4839
    %v4847 = vmul.f32 %v4829, %v4839
    %v4848 = vmul.f32 %v4830, %v4841
    %v4849 = vmul.f32 %v4831, %v4841
    %v4850 = vmul.f32 %v4832, %v4841
    %v4851 = vmul.f32 %v4833, %v4841
    %v4852 = vsel %vm108, %v4844, 0.0
    %4853 = vadd.xlane.f32.xlu0 %v4852
    %v4854 = vpop.xlane.xlu0 %4853
    %v4855 = vsel %vm108, %v4845, 0.0
    %4856 = vadd.xlane.f32.xlu0 %v4855
    %v4857 = vpop.xlane.xlu0 %4856
    %v4858 = vsel %vm108, %v4846, 0.0
    %4859 = vadd.xlane.f32.xlu0 %v4858
    %v4860 = vpop.xlane.xlu0 %4859
    %v4861 = vsel %vm108, %v4847, 0.0
    %4862 = vadd.xlane.f32.xlu0 %v4861
    %v4863 = vpop.xlane.xlu0 %4862
    %v4864 = vsel %vm108, %v4848, 0.0
    %4865 = vadd.xlane.f32.xlu0 %v4864
    %v4866 = vpop.xlane.xlu0 %4865
    %v4867 = vsel %vm108, %v4849, 0.0
    %4868 = vadd.xlane.f32.xlu0 %v4867
    %v4869 = vpop.xlane.xlu0 %4868
    %v4870 = vsel %vm108, %v4850, 0.0
    %4871 = vadd.xlane.f32.xlu0 %v4870
    %v4872 = vpop.xlane.xlu0 %4871
    %v4873 = vsel %vm108, %v4851, 0.0
    %4874 = vadd.xlane.f32.xlu0 %v4873
    %v4875 = vpop.xlane.xlu0 %4874
    %v4884 = vperm.slane %v4854, %v1851
    %v4885 = vperm.slane %v4857, %v1853
    %v4886 = vsel %vm1855, %v4885, %v4884
    %v4887 = vperm.slane %v4860, %v1857
    %v4888 = vsel %vm1859, %v4887, %v4886
    %v4889 = vperm.slane %v4863, %v1861
    %v4890 = vsel %vm1863, %v4889, %v4888
    %v4891 = vperm.slane %v4866, %v1851
    %v4892 = vperm.slane %v4869, %v1853
    %v4893 = vsel %vm1855, %v4892, %v4891
    %v4894 = vperm.slane %v4872, %v1857
    %v4895 = vsel %vm1859, %v4894, %v4893
    %v4896 = vperm.slane %v4875, %v1861
    %v4897 = vsel %vm1863, %v4896, %v4895
    %4900 = vst.msk [vmem:[#allocation5 + $0x4] sm:$0x1] %vm1874, %v4890
    %4901 = vst.msk [vmem:[#allocation5 + $0xc] sm:$0x1] %vm1874, %v4897
    %v4902 = vld [vmem:[%s2285] sm:$0xff]
    %v4903 = vld [vmem:[%s2285 + $0x8] sm:$0xff]
    %v4904 = vld [vmem:[%s2285 + $0x10] sm:$0xff]
    %v4905 = vld [vmem:[%s2285 + $0x18] sm:$0xff]
    %v4906 = vld [vmem:[%s2285 + $0x100] sm:$0xff]
    %v4907 = vld [vmem:[%s2285 + $0x108] sm:$0xff]
    %v4908 = vld [vmem:[%s2285 + $0x110] sm:$0xff]
    %v4909 = vld [vmem:[%s2285 + $0x118] sm:$0xff]
    %v4910 = vmul.f32 %v4902, %v4826
    %v4911 = vmul.f32 %v4903, %v4827
    %v4912 = vmul.f32 %v4904, %v4828
    %v4913 = vmul.f32 %v4905, %v4829
    %v4914 = vmul.f32 %v4906, %v4830
    %v4915 = vmul.f32 %v4907, %v4831
    %v4916 = vmul.f32 %v4908, %v4832
    %v4917 = vmul.f32 %v4909, %v4833
    %v4918 = vld [vmem:[%s2302] sm:$0xff]
    %v4919 = vld [vmem:[%s2302 + $0x8] sm:$0xff]
    %v4920 = vld [vmem:[%s2302 + $0x10] sm:$0xff]
    %v4921 = vld [vmem:[%s2302 + $0x18] sm:$0xff]
    %v4922 = vld [vmem:[%s2302 + $0x100] sm:$0xff]
    %v4923 = vld [vmem:[%s2302 + $0x108] sm:$0xff]
    %v4924 = vld [vmem:[%s2302 + $0x110] sm:$0xff]
    %v4925 = vld [vmem:[%s2302 + $0x118] sm:$0xff]
    %v4926 = vadd.f32 %v4910, %v4918
    %v4927 = vadd.f32 %v4911, %v4919
    %v4928 = vadd.f32 %v4912, %v4920
    %v4929 = vadd.f32 %v4913, %v4921
    %v4930 = vadd.f32 %v4914, %v4922
    %v4931 = vadd.f32 %v4915, %v4923
    %v4932 = vadd.f32 %v4916, %v4924
    %v4933 = vadd.f32 %v4917, %v4925
    %v4934 = vperm.slane %v2881, 5
    %v4935 = vperm.slane %v2884, 5
    %4938 = vrot.lane.b32.xlu0 %v4934, 64
    %v4939 = vpop.permute.xlu0 %4938
    %4940 = vrot.lane.b32.xlu0 %v4935, 64
    %v4941 = vpop.permute.xlu0 %4940
    %v4944 = vmul.f32 %v4926, %v4939
    %v4945 = vmul.f32 %v4927, %v4939
    %v4946 = vmul.f32 %v4928, %v4939
    %v4947 = vmul.f32 %v4929, %v4939
    %v4948 = vmul.f32 %v4930, %v4941
    %v4949 = vmul.f32 %v4931, %v4941
    %v4950 = vmul.f32 %v4932, %v4941
    %v4951 = vmul.f32 %v4933, %v4941
    %v4952 = vsel %vm108, %v4944, 0.0
    %4953 = vadd.xlane.f32.xlu0 %v4952
    %v4954 = vpop.xlane.xlu0 %4953
    %v4955 = vsel %vm108, %v4945, 0.0
    %4956 = vadd.xlane.f32.xlu0 %v4955
    %v4957 = vpop.xlane.xlu0 %4956
    %v4958 = vsel %vm108, %v4946, 0.0
    %4959 = vadd.xlane.f32.xlu0 %v4958
    %v4960 = vpop.xlane.xlu0 %4959
    %v4961 = vsel %vm108, %v4947, 0.0
    %4962 = vadd.xlane.f32.xlu0 %v4961
    %v4963 = vpop.xlane.xlu0 %4962
    %v4964 = vsel %vm108, %v4948, 0.0
    %4965 = vadd.xlane.f32.xlu0 %v4964
    %v4966 = vpop.xlane.xlu0 %4965
    %v4967 = vsel %vm108, %v4949, 0.0
    %4968 = vadd.xlane.f32.xlu0 %v4967
    %v4969 = vpop.xlane.xlu0 %4968
    %v4970 = vsel %vm108, %v4950, 0.0
    %4971 = vadd.xlane.f32.xlu0 %v4970
    %v4972 = vpop.xlane.xlu0 %4971
    %v4973 = vsel %vm108, %v4951, 0.0
    %4974 = vadd.xlane.f32.xlu0 %v4973
    %v4975 = vpop.xlane.xlu0 %4974
    %v4984 = vperm.slane %v4954, %v1851
    %v4985 = vperm.slane %v4957, %v1853
    %v4986 = vsel %vm1855, %v4985, %v4984
    %v4987 = vperm.slane %v4960, %v1857
    %v4988 = vsel %vm1859, %v4987, %v4986
    %v4989 = vperm.slane %v4963, %v1861
    %v4990 = vsel %vm1863, %v4989, %v4988
    %v4991 = vperm.slane %v4966, %v1851
    %v4992 = vperm.slane %v4969, %v1853
    %v4993 = vsel %vm1855, %v4992, %v4991
    %v4994 = vperm.slane %v4972, %v1857
    %v4995 = vsel %vm1859, %v4994, %v4993
    %v4996 = vperm.slane %v4975, %v1861
    %v4997 = vsel %vm1863, %v4996, %v4995
    %5000 = vst.msk [vmem:[#allocation5 + $0x5] sm:$0x1] %vm1874, %v4990
    %5001 = vst.msk [vmem:[#allocation5 + $0xd] sm:$0x1] %vm1874, %v4997
    %v5002 = vld [vmem:[%s2387] sm:$0xff]
    %v5003 = vld [vmem:[%s2387 + $0x8] sm:$0xff]
    %v5004 = vld [vmem:[%s2387 + $0x10] sm:$0xff]
    %v5005 = vld [vmem:[%s2387 + $0x18] sm:$0xff]
    %v5006 = vld [vmem:[%s2387 + $0x100] sm:$0xff]
    %v5007 = vld [vmem:[%s2387 + $0x108] sm:$0xff]
    %v5008 = vld [vmem:[%s2387 + $0x110] sm:$0xff]
    %v5009 = vld [vmem:[%s2387 + $0x118] sm:$0xff]
    %v5010 = vmul.f32 %v5002, %v4926
    %v5011 = vmul.f32 %v5003, %v4927
    %v5012 = vmul.f32 %v5004, %v4928
    %v5013 = vmul.f32 %v5005, %v4929
    %v5014 = vmul.f32 %v5006, %v4930
    %v5015 = vmul.f32 %v5007, %v4931
    %v5016 = vmul.f32 %v5008, %v4932
    %v5017 = vmul.f32 %v5009, %v4933
    %v5018 = vld [vmem:[%s2404] sm:$0xff]
    %v5019 = vld [vmem:[%s2404 + $0x8] sm:$0xff]
    %v5020 = vld [vmem:[%s2404 + $0x10] sm:$0xff]
    %v5021 = vld [vmem:[%s2404 + $0x18] sm:$0xff]
    %v5022 = vld [vmem:[%s2404 + $0x100] sm:$0xff]
    %v5023 = vld [vmem:[%s2404 + $0x108] sm:$0xff]
    %v5024 = vld [vmem:[%s2404 + $0x110] sm:$0xff]
    %v5025 = vld [vmem:[%s2404 + $0x118] sm:$0xff]
    %v5026 = vadd.f32 %v5010, %v5018
    %v5027 = vadd.f32 %v5011, %v5019
    %v5028 = vadd.f32 %v5012, %v5020
    %v5029 = vadd.f32 %v5013, %v5021
    %v5030 = vadd.f32 %v5014, %v5022
    %v5031 = vadd.f32 %v5015, %v5023
    %v5032 = vadd.f32 %v5016, %v5024
    %v5033 = vadd.f32 %v5017, %v5025
    %v5034 = vperm.slane %v2881, 6
    %v5035 = vperm.slane %v2884, 6
    %5038 = vrot.lane.b32.xlu0 %v5034, 64
    %v5039 = vpop.permute.xlu0 %5038
    %5040 = vrot.lane.b32.xlu0 %v5035, 64
    %v5041 = vpop.permute.xlu0 %5040
    %v5044 = vmul.f32 %v5026, %v5039
    %v5045 = vmul.f32 %v5027, %v5039
    %v5046 = vmul.f32 %v5028, %v5039
    %v5047 = vmul.f32 %v5029, %v5039
    %v5048 = vmul.f32 %v5030, %v5041
    %v5049 = vmul.f32 %v5031, %v5041
    %v5050 = vmul.f32 %v5032, %v5041
    %v5051 = vmul.f32 %v5033, %v5041
    %v5052 = vsel %vm108, %v5044, 0.0
    %5053 = vadd.xlane.f32.xlu0 %v5052
    %v5054 = vpop.xlane.xlu0 %5053
    %v5055 = vsel %vm108, %v5045, 0.0
    %5056 = vadd.xlane.f32.xlu0 %v5055
    %v5057 = vpop.xlane.xlu0 %5056
    %v5058 = vsel %vm108, %v5046, 0.0
    %5059 = vadd.xlane.f32.xlu0 %v5058
    %v5060 = vpop.xlane.xlu0 %5059
    %v5061 = vsel %vm108, %v5047, 0.0
    %5062 = vadd.xlane.f32.xlu0 %v5061
    %v5063 = vpop.xlane.xlu0 %5062
    %v5064 = vsel %vm108, %v5048, 0.0
    %5065 = vadd.xlane.f32.xlu0 %v5064
    %v5066 = vpop.xlane.xlu0 %5065
    %v5067 = vsel %vm108, %v5049, 0.0
    %5068 = vadd.xlane.f32.xlu0 %v5067
    %v5069 = vpop.xlane.xlu0 %5068
    %v5070 = vsel %vm108, %v5050, 0.0
    %5071 = vadd.xlane.f32.xlu0 %v5070
    %v5072 = vpop.xlane.xlu0 %5071
    %v5073 = vsel %vm108, %v5051, 0.0
    %5074 = vadd.xlane.f32.xlu0 %v5073
    %v5075 = vpop.xlane.xlu0 %5074
    %v5084 = vperm.slane %v5054, %v1851
    %v5085 = vperm.slane %v5057, %v1853
    %v5086 = vsel %vm1855, %v5085, %v5084
    %v5087 = vperm.slane %v5060, %v1857
    %v5088 = vsel %vm1859, %v5087, %v5086
    %v5089 = vperm.slane %v5063, %v1861
    %v5090 = vsel %vm1863, %v5089, %v5088
    %v5091 = vperm.slane %v5066, %v1851
    %v5092 = vperm.slane %v5069, %v1853
    %v5093 = vsel %vm1855, %v5092, %v5091
    %v5094 = vperm.slane %v5072, %v1857
    %v5095 = vsel %vm1859, %v5094, %v5093
    %v5096 = vperm.slane %v5075, %v1861
    %v5097 = vsel %vm1863, %v5096, %v5095
    %5100 = vst.msk [vmem:[#allocation5 + $0x6] sm:$0x1] %vm1874, %v5090
    %5101 = vst.msk [vmem:[#allocation5 + $0xe] sm:$0x1] %vm1874, %v5097
    %v5102 = vld [vmem:[%s2489] sm:$0xff]
    %v5103 = vld [vmem:[%s2489 + $0x8] sm:$0xff]
    %v5104 = vld [vmem:[%s2489 + $0x10] sm:$0xff]
    %v5105 = vld [vmem:[%s2489 + $0x18] sm:$0xff]
    %v5106 = vld [vmem:[%s2489 + $0x100] sm:$0xff]
    %v5107 = vld [vmem:[%s2489 + $0x108] sm:$0xff]
    %v5108 = vld [vmem:[%s2489 + $0x110] sm:$0xff]
    %v5109 = vld [vmem:[%s2489 + $0x118] sm:$0xff]
    %v5110 = vmul.f32 %v5102, %v5026
    %v5111 = vmul.f32 %v5103, %v5027
    %v5112 = vmul.f32 %v5104, %v5028
    %v5113 = vmul.f32 %v5105, %v5029
    %v5114 = vmul.f32 %v5106, %v5030
    %v5115 = vmul.f32 %v5107, %v5031
    %v5116 = vmul.f32 %v5108, %v5032
    %v5117 = vmul.f32 %v5109, %v5033
    %v5118 = vld [vmem:[%s2506] sm:$0xff]
    %v5119 = vld [vmem:[%s2506 + $0x8] sm:$0xff]
    %v5120 = vld [vmem:[%s2506 + $0x10] sm:$0xff]
    %v5121 = vld [vmem:[%s2506 + $0x18] sm:$0xff]
    %v5122 = vld [vmem:[%s2506 + $0x100] sm:$0xff]
    %v5123 = vld [vmem:[%s2506 + $0x108] sm:$0xff]
    %v5124 = vld [vmem:[%s2506 + $0x110] sm:$0xff]
    %v5125 = vld [vmem:[%s2506 + $0x118] sm:$0xff]
    %v5126 = vadd.f32 %v5110, %v5118
    %v5127 = vadd.f32 %v5111, %v5119
    %v5128 = vadd.f32 %v5112, %v5120
    %v5129 = vadd.f32 %v5113, %v5121
    %v5130 = vadd.f32 %v5114, %v5122
    %v5131 = vadd.f32 %v5115, %v5123
    %v5132 = vadd.f32 %v5116, %v5124
    %v5133 = vadd.f32 %v5117, %v5125
    %v5134 = vperm.slane %v2881, 7
    %v5135 = vperm.slane %v2884, 7
    %5138 = vrot.lane.b32.xlu0 %v5134, 64
    %v5139 = vpop.permute.xlu0 %5138
    %5140 = vrot.lane.b32.xlu0 %v5135, 64
    %v5141 = vpop.permute.xlu0 %5140
    %v5144 = vmul.f32 %v5126, %v5139
    %v5145 = vmul.f32 %v5127, %v5139
    %v5146 = vmul.f32 %v5128, %v5139
    %v5147 = vmul.f32 %v5129, %v5139
    %v5148 = vmul.f32 %v5130, %v5141
    %v5149 = vmul.f32 %v5131, %v5141
    %v5150 = vmul.f32 %v5132, %v5141
    %v5151 = vmul.f32 %v5133, %v5141
    %v5152 = vsel %vm108, %v5144, 0.0
    %5153 = vadd.xlane.f32.xlu0 %v5152
    %v5154 = vpop.xlane.xlu0 %5153
    %v5155 = vsel %vm108, %v5145, 0.0
    %5156 = vadd.xlane.f32.xlu0 %v5155
    %v5157 = vpop.xlane.xlu0 %5156
    %v5158 = vsel %vm108, %v5146, 0.0
    %5159 = vadd.xlane.f32.xlu0 %v5158
    %v5160 = vpop.xlane.xlu0 %5159
    %v5161 = vsel %vm108, %v5147, 0.0
    %5162 = vadd.xlane.f32.xlu0 %v5161
    %v5163 = vpop.xlane.xlu0 %5162
    %v5164 = vsel %vm108, %v5148, 0.0
    %5165 = vadd.xlane.f32.xlu0 %v5164
    %v5166 = vpop.xlane.xlu0 %5165
    %v5167 = vsel %vm108, %v5149, 0.0
    %5168 = vadd.xlane.f32.xlu0 %v5167
    %v5169 = vpop.xlane.xlu0 %5168
    %v5170 = vsel %vm108, %v5150, 0.0
    %5171 = vadd.xlane.f32.xlu0 %v5170
    %v5172 = vpop.xlane.xlu0 %5171
    %v5173 = vsel %vm108, %v5151, 0.0
    %5174 = vadd.xlane.f32.xlu0 %v5173
    %v5175 = vpop.xlane.xlu0 %5174
    %v5184 = vperm.slane %v5154, %v1851
    %v5185 = vperm.slane %v5157, %v1853
    %v5186 = vsel %vm1855, %v5185, %v5184
    %v5187 = vperm.slane %v5160, %v1857
    %v5188 = vsel %vm1859, %v5187, %v5186
    %v5189 = vperm.slane %v5163, %v1861
    %v5190 = vsel %vm1863, %v5189, %v5188
    %v5191 = vperm.slane %v5166, %v1851
    %v5192 = vperm.slane %v5169, %v1853
    %v5193 = vsel %vm1855, %v5192, %v5191
    %v5194 = vperm.slane %v5172, %v1857
    %v5195 = vsel %vm1859, %v5194, %v5193
    %v5196 = vperm.slane %v5175, %v1861
    %v5197 = vsel %vm1863, %v5196, %v5195
    %5200 = vst.msk [vmem:[#allocation5 + $0x7] sm:$0x1] %vm1874, %v5190
    %5201 = vst.msk [vmem:[#allocation5 + $0xf] sm:$0x1] %vm1874, %v5197
    %v5202 = vld [vmem:[%s2674 + $0x46] sm:$0x1]
    %v5203 = vld [vmem:[#allocation5] sm:$0xff]
    %v5204 = vld [vmem:[#allocation5 + $0x8] sm:$0xff]
    %v5205 = vperm.slane %v5202, 0
    %v5206 = vmul.f32 %v5205, %v2851
    %v5207 = vmul.f32 %v5205, %v2852
    %v5208 = vadd.f32 %v5203, %v5206
    %v5209 = vadd.f32 %v5204, %v5207
    %v5210 = vxor.u32 %v2741, 2147483648
    %v5211 = vxor.u32 %v2742, 2147483648
    %v5212 = vmul.f32 %v5210, 1.442695
    %v5213 = vpow.pop %v5212
    %v5214 = vmul.f32 %v5211, 1.442695
    %v5215 = vpow.pop %v5214
    %v5216 = vadd.f32 %v5213, 1.0
    %v5217 = vadd.f32 %v5215, 1.0
    %v5218 = vrcp.pop %v5216
    %v5219 = vmul.f32 %v5216, %v5218
    %v5220 = vsub.f32 1.0, %v5219
    %v5221 = vmul.f32 %v5218, %v5220
    %v5222 = vadd.f32 %v5218, %v5221
    %vm5223 = vweird.f32 %v5216
    %vm5224 = vweird.f32 %v5218
    %vm5225 = vmor %vm5223, %vm5224
    %v5226 = vsel %vm5225, %v5218, %v5222
    %v5227 = vand.u32 2147483647, %v5216
    %vm5228 = vcmp.eq.f32.partialorder %v5227, 8.507059e+37
    %v5229 = vand.u32 %v5216, 2147483648
    %v5230 = vor.u32 1.1754944e-38, %v5229
    %v5231 = vsel %vm5228, %v5230, %v5226
    %v5232 = vmul.f32 1.0, %v5231
    %v5233 = vrcp.pop %v5217
    %v5234 = vmul.f32 %v5217, %v5233
    %v5235 = vsub.f32 1.0, %v5234
    %v5236 = vmul.f32 %v5233, %v5235
    %v5237 = vadd.f32 %v5233, %v5236
    %vm5238 = vweird.f32 %v5217
    %vm5239 = vweird.f32 %v5233
    %vm5240 = vmor %vm5238, %vm5239
    %v5241 = vsel %vm5240, %v5233, %v5237
    %v5242 = vand.u32 2147483647, %v5217
    %vm5243 = vcmp.eq.f32.partialorder %v5242, 8.507059e+37
    %v5244 = vand.u32 %v5217, 2147483648
    %v5245 = vor.u32 1.1754944e-38, %v5244
    %v5246 = vsel %vm5243, %v5245, %v5241
    %v5247 = vmul.f32 1.0, %v5246
    %v5248 = vmul.f32 %v2741, %v5232
    %v5249 = vmul.f32 %v2742, %v5247
    %5252 = vrot.lane.b32.xlu0 %v5248, 96
    %v5253 = vpop.permute.xlu0 %5252
    %5254 = vrot.lane.b32.xlu0 %v5249, 96
    %v5255 = vpop.permute.xlu0 %5254
    %v5258 = vmul.f32 %v5208, %v5253
    %v5259 = vmul.f32 %v5209, %v5255
    %v5260 = vld [vmem:[#allocation6 + $0x58] sm:$0x1]
    %v5261 = vperm.slane %v5260, 0
    %v5262 = vmul.f32 %v5258, %v5261
    %v5263 = vmul.f32 %v5259, %v5261
    %v5266 = vrot.slane %v5263, 7
    %vm5269 = vcmask 261127
    %v5270 = vsel %vm5269, %v5262, 0.0
    %5271 = vadd.xlane.f32.xlu0 %v5270
    %v5272 = vpop.xlane.xlu0 %5271
    %v5273 = vsel %vm1874, %v5266, 0.0
    %5274 = vadd.xlane.f32.xlu0 %v5273
    %v5275 = vpop.xlane.xlu0 %5274
    %v5276 = vld [vmem:[#allocation6 + $0x59] sm:$0x1]
    %v5277 = vperm.slane %v5276, 0
    %v5278 = vadd.f32 %v5272, %v5277
    %v5279 = vadd.f32 %v5275, %v5277
    %vm5280 = vcmask 7175
    %5281 = vst.msk [vmem:[%s2 - $0x7] sm:$0x80] %vm5280, %v5278
    %vm5282 = vcmask 0
    %5283 = vst.msk [vmem:[%s2 + $0x1] sm:$0x1] %vm5282, %v5279
    // Predicated region
    $region14: #{tpu_custom_call.1} parent=1 // pred_check
      _
    $region15: #{tpu_custom_call.1} parent=1 // pred_check_branch
      %5285 = sbr.rel (0) target = $region17
    $region16: #{tpu_custom_call.1} parent=1 // pred_region
      _
    $region17: #{tpu_custom_call.1} parent=1 // pred_fallthru
      _
    // Predicated region
    $region18: #{tpu_custom_call.1} parent=1 // pred_check
      _
    $region19: #{tpu_custom_call.1} parent=1 // pred_check_branch
      %5287 = sbr.rel (0) target = $region21
    $region20: #{tpu_custom_call.1} parent=1 // pred_region
      _
    $region21: #{tpu_custom_call.1} parent=1 // pred_fallthru
      _
    %5288 = vsyncpa [#allocation7], 1

</llo_original>
